<compile_context>
chip_gen: v5e
topology: v5e:2x2
jax: 0.10.0
libtpu: 0.0.40
codegen_flags: <defaults>
</compile_context>

<pallas_src>
import functools
import math

import jax
import jax.numpy as jnp
from jax.experimental import pallas as pl
from jax.experimental.pallas import tpu as pltpu


CFG = dict(vocab=64, hidden=128, heads=4, head_dim=32, inter=512, layers=2,
           max_pos=16, type_vocab=2, eps=1e-12)

_SQRT_2_OVER_PI = math.sqrt(2.0 / math.pi)


# ----------------------------------------------------------------------------
# Fused whole-model Pallas kernel (one grid step = one example)
# ----------------------------------------------------------------------------

def _bert_fwd_kernel(tok_ref, mask_ref, word_ref, vecs_ref,
                     qkvw_ref, qkvb_ref, ow_ref, iw_ref, ib_ref, fw_ref,
                     pw_ref, out_ref, *, S, H, nH, Dh, L, V, P, eps):
    f32, bf16 = jnp.float32, jnp.bfloat16

    # --- packed-vector row bookkeeping (static Python ints) ---
    EMB_G, EMB_B = P, P + 1
    def lrow(l, k):                       # k: 0=o_b 1=ln1_g 2=ln1_b 3=f_b 4=ln2_g 5=ln2_b
        return P + 2 + 6 * l + k
    TAIL = P + 2 + 6 * L
    POOL_B, CLS_W, CLS_B = TAIL, TAIL + 1, TAIL + 2

    def row(i):                           # (1, H) f32 row of the packed vector bundle
        return vecs_ref[i:i + 1, :]

    def ln(h, g, b):                      # LayerNorm in f32
        mu = jnp.mean(h, axis=-1, keepdims=True)
        var = jnp.mean(jnp.square(h - mu), axis=-1, keepdims=True)
        return (h - mu) * jax.lax.rsqrt(var + eps) * g + b

    def mm(x, w):                         # bf16 operands (w pre-cast), f32 accumulate
        return jnp.dot(x.astype(bf16), w, preferred_element_type=f32)

    # --- embeddings: exact one-hot gather (MXU) + pos/type add + LayerNorm ---
    tok = tok_ref[0]                                                  # (S, 1) int32
    onehot = (tok == jax.lax.broadcasted_iota(jnp.int32, (S, V), 1)).astype(f32)
    emb = jnp.dot(onehot, word_ref[...], preferred_element_type=f32)  # (S, H) exact
    emb = emb + vecs_ref[0:S, :]                        # + pos_emb[:S] + type_emb[0]
    x = ln(emb, row(EMB_G), row(EMB_B))                               # (S, H) f32

    # --- additive attention mask over keys, hoisted out of the layer loop ---
    mask_add = ((1.0 - mask_ref[0]) * -10000.0)[None, :, :]           # (1, 1, S)
    scale = 1.0 / math.sqrt(Dh)

    # --- encoder layers (statically unrolled) ---
    for l in range(L):
        # fused QKV projection: one (S, H) @ (H, 3H) bf16 matmul
        qkv = (mm(x, qkvw_ref[l]) + qkvb_ref[l]).astype(bf16)         # (S, 3H)

        def heads(m):                     # (S, H) -> (nH, S, Dh), static slices
            return jnp.concatenate(
                [m[None, :, h * Dh:(h + 1) * Dh] for h in range(nH)], axis=0)

        q = heads(qkv[:, 0:H])            # q/k/v splits are 128-lane aligned
        k = heads(qkv[:, H:2 * H])
        v = heads(qkv[:, 2 * H:3 * H])

        # batched attention over all heads: one score matmul, one softmax,
        # one context matmul
        s = jnp.einsum('hqd,hkd->hqk', q, k,
                       preferred_element_type=f32)                    # (nH, S, S)
        s = s * scale + mask_add
        s = s - jnp.max(s, axis=-1, keepdims=True)
        p = jnp.exp(s)
        p = p / jnp.sum(p, axis=-1, keepdims=True)
        ctx = jnp.einsum('hqk,hkd->hqd', p.astype(bf16), v,
                         preferred_element_type=f32)                  # (nH, S, Dh)
        ctx = jnp.concatenate([ctx[h] for h in range(nH)], axis=-1)   # (S, H)

        # single full-K=H output projection, then add + LN1
        attn = mm(ctx, ow_ref[l]) + row(lrow(l, 0))
        x = ln(attn + x, row(lrow(l, 1)), row(lrow(l, 2)))

        # FFN: gelu(x @ i_w + i_b) @ f_w + f_b, then add + LN2
        hmid = mm(x, iw_ref[l]) + ib_ref[l]                           # (S, I)
        # TODO(synk): HF BERT uses exact erf GELU; tanh approximation kept (<1e-3 diff).
        hmid = 0.5 * hmid * (1.0 + jnp.tanh(
            _SQRT_2_OVER_PI * (hmid + 0.044715 * hmid * hmid * hmid)))
        ffn = mm(hmid, fw_ref[l]) + row(lrow(l, 3))
        x = ln(ffn + x, row(lrow(l, 4)), row(lrow(l, 5)))

    # --- pooler ([CLS] -> Linear -> tanh), dropout = identity (eval),
    #     classifier Linear(H,1) as VPU multiply + lane reduce, sigmoid ---
    pooled = jnp.tanh(mm(x[0:1, :], pw_ref[...]) + row(POOL_B))       # (1, H)
    logit = (jnp.sum(pooled * row(CLS_W), axis=-1, keepdims=True)
             + row(CLS_B)[:, 0:1])                                    # (1, 1)
    proba = 1.0 / (1.0 + jnp.exp(-logit))
    # lane-dense store; wrapper slices [:, :1]
    out_ref[...] = jnp.broadcast_to(proba[None], (1, 1, H)).astype(out_ref.dtype)


# ----------------------------------------------------------------------------
# Parameter init (same semantics as the reference) + packing for the kernel
# ----------------------------------------------------------------------------

def init_params(key, cfg):
    H, I = cfg["hidden"], cfg["inter"]

    def normal(k, shape):
        return (0.02 * jax.random.normal(k, shape)).astype(jnp.float32)

    keys = iter(jax.random.split(key, 64))
    p = {
        "word_emb": normal(next(keys), (cfg["vocab"], H)),
        "pos_emb": normal(next(keys), (cfg["max_pos"], H)),
        "type_emb": normal(next(keys), (cfg["type_vocab"], H)),
        "emb_ln_g": jnp.ones((H,), jnp.float32),
        "emb_ln_b": jnp.zeros((H,), jnp.float32),
        "layers": [],
        "pool_w": normal(next(keys), (H, H)),
        "pool_b": jnp.zeros((H,), jnp.float32),
        "cls_w": normal(next(keys), (H, 1)),
        "cls_b": jnp.zeros((1,), jnp.float32),
    }
    for _ in range(cfg["layers"]):
        p["layers"].append({
            "q_w": normal(next(keys), (H, H)), "q_b": jnp.zeros((H,), jnp.float32),
            "k_w": normal(next(keys), (H, H)), "k_b": jnp.zeros((H,), jnp.float32),
            "v_w": normal(next(keys), (H, H)), "v_b": jnp.zeros((H,), jnp.float32),
            "o_w": normal(next(keys), (H, H)), "o_b": jnp.zeros((H,), jnp.float32),
            "ln1_g": jnp.ones((H,), jnp.float32), "ln1_b": jnp.zeros((H,), jnp.float32),
            "i_w": normal(next(keys), (H, I)), "i_b": jnp.zeros((I,), jnp.float32),
            "f_w": normal(next(keys), (I, H)), "f_b": jnp.zeros((H,), jnp.float32),
            "ln2_g": jnp.ones((H,), jnp.float32), "ln2_b": jnp.zeros((H,), jnp.float32),
        })
    return p


def pack_params(p, cfg):
    """bf16 matmul weights, fused QKV, and a single (R,128) f32 vector bundle."""
    H, L, P = cfg["hidden"], cfg["layers"], cfg["max_pos"]
    ls = p["layers"]

    def bf16(x):
        return x.astype(jnp.bfloat16)

    # Packed f32 (rows, H) vector bundle.  Row layout (must match kernel):
    #   [0:P)          pos_emb + type_emb[0]
    #   P, P+1         emb_ln_g, emb_ln_b
    #   per layer l    o_b, ln1_g, ln1_b, f_b, ln2_g, ln2_b
    #   tail           pool_b, cls_w row, cls_b (replicated)
    rows = [p["pos_emb"] + p["type_emb"][0][None, :],
            p["emb_ln_g"][None, :], p["emb_ln_b"][None, :]]
    for lp in ls:
        rows += [lp["o_b"][None, :], lp["ln1_g"][None, :], lp["ln1_b"][None, :],
                 lp["f_b"][None, :], lp["ln2_g"][None, :], lp["ln2_b"][None, :]]
    rows += [p["pool_b"][None, :], p["cls_w"].reshape(1, H),
             jnp.full((1, H), p["cls_b"][0], jnp.float32)]
    vecs = jnp.concatenate(rows, axis=0).astype(jnp.float32)

    return {
        "word_emb": p["word_emb"].astype(jnp.float32),      # f32 -> exact one-hot gather
        "vecs": vecs,
        "qkv_w": bf16(jnp.stack([jnp.concatenate([lp["q_w"], lp["k_w"], lp["v_w"]],
                                                 axis=1) for lp in ls])),   # (L,H,3H)
        "qkv_b": jnp.stack([jnp.concatenate([lp["q_b"], lp["k_b"], lp["v_b"]]
                                            )[None, :] for lp in ls]),      # (L,1,3H)
        "o_w": bf16(jnp.stack([lp["o_w"] for lp in ls])),                   # (L,H,H)
        "i_w": bf16(jnp.stack([lp["i_w"] for lp in ls])),                   # (L,H,I)
        "i_b": jnp.stack([lp["i_b"][None, :] for lp in ls]),                # (L,1,I)
        "f_w": bf16(jnp.stack([lp["f_w"] for lp in ls])),                   # (L,I,H)
        "pool_w": bf16(p["pool_w"]),                                        # (H,H)
    }


# ----------------------------------------------------------------------------
# Forward wrapper
# ----------------------------------------------------------------------------

def _bert_forward(pk, tokens, masks, cfg):
    B, S = tokens.shape
    H, nH, Dh, L = cfg["hidden"], cfg["heads"], cfg["head_dim"], cfg["layers"]
    V, P = cfg["vocab"], cfg["max_pos"]

    tok3 = tokens.astype(jnp.int32).reshape(B, S, 1)
    mask3 = masks.astype(jnp.float32).reshape(B, 1, S)

    kernel = functools.partial(_bert_fwd_kernel, S=S, H=H, nH=nH, Dh=Dh, L=L,
                               V=V, P=P, eps=cfg["eps"])

    def full(shape):                     # whole-array block, resident across grid steps
        return pl.BlockSpec(shape, lambda b, _n=len(shape): (0,) * _n)

    out = pl.pallas_call(
        kernel,
        grid=(B,),                       # batch axis: sharded across cores on v7x
        out_shape=jax.ShapeDtypeStruct((B, 1, H), jnp.float32),
        in_specs=[
            pl.BlockSpec((1, S, 1), lambda b: (b, 0, 0)),   # tokens
            pl.BlockSpec((1, 1, S), lambda b: (b, 0, 0)),   # masks
            full(pk["word_emb"].shape),
            full(pk["vecs"].shape),
            full(pk["qkv_w"].shape),
            full(pk["qkv_b"].shape),
            full(pk["o_w"].shape),
            full(pk["i_w"].shape),
            full(pk["i_b"].shape),
            full(pk["f_w"].shape),
            full(pk["pool_w"].shape),
        ],
        out_specs=pl.BlockSpec((1, 1, H), lambda b: (b, 0, 0)),
        compiler_params=pltpu.CompilerParams(
            dimension_semantics=("parallel",)),
    )(tok3, mask3, pk["word_emb"], pk["vecs"], pk["qkv_w"], pk["qkv_b"],
      pk["o_w"], pk["i_w"], pk["i_b"], pk["f_w"], pk["pool_w"])

    return out[:, 0, :1]                 # (B, 1) probabilities


@jax.jit
def bert_binary_classifier(packed_params, tokens, masks):
    """tokens: (B, S) int32; masks: (B, S) float32 -> proba (B, 1) float32."""
    return _bert_forward(packed_params, tokens, masks, CFG)


if __name__ == "__main__":
    key = jax.random.PRNGKey(0)
    k_param, k_tok = jax.random.split(key)

    B, S = 2, 8
    params = init_params(k_param, CFG)
    packed = pack_params(params, CFG)
    tokens = jax.random.randint(k_tok, (B, S), 0, CFG["vocab"], dtype=jnp.int32)
    masks = jnp.ones((B, S), jnp.float32)

    proba = bert_binary_classifier(packed, tokens, masks)
    proba = jax.block_until_ready(proba)
    assert proba.shape == (B, 1) and proba.dtype == jnp.float32
    assert bool(jnp.all((proba >= 0.0) & (proba <= 1.0)))
    print("KERNEL_OK")
</pallas_src>

<mosaic_0001>
module attributes {stable_mosaic.version = 11 : i64} {
  func.func @_bert_fwd_kernel(%arg0: i32, %arg1: memref<1x8x1xi32, #tpu.memory_space<vmem>>, %arg2: memref<1x1x8xf32, #tpu.memory_space<vmem>>, %arg3: memref<64x128xf32, #tpu.memory_space<vmem>>, %arg4: memref<33x128xf32, #tpu.memory_space<vmem>>, %arg5: memref<2x128x384xbf16, #tpu.memory_space<vmem>>, %arg6: memref<2x1x384xf32, #tpu.memory_space<vmem>>, %arg7: memref<2x128x128xbf16, #tpu.memory_space<vmem>>, %arg8: memref<2x128x512xbf16, #tpu.memory_space<vmem>>, %arg9: memref<2x1x512xf32, #tpu.memory_space<vmem>>, %arg10: memref<2x512x128xbf16, #tpu.memory_space<vmem>>, %arg11: memref<128x128xbf16, #tpu.memory_space<vmem>>, %arg12: memref<1x1x128xf32, #tpu.memory_space<vmem>>) attributes {dimension_semantics = [#tpu.dimension_semantics<parallel>], iteration_bounds = array<i64: 2>, scalar_prefetch = 0 : i64, scratch_operands = 0 : i64, tpu.core_type = #tpu.core_type<tc>, window_params = [{transform_indices = @transform_0, window_bounds = array<i64: 1, 8, 1>}, {transform_indices = @transform_1, window_bounds = array<i64: 1, 1, 8>}, {pipeline_mode = #tpu.pipeline_mode<synchronous>, transform_indices = @transform_2, window_bounds = array<i64: 64, 128>}, {pipeline_mode = #tpu.pipeline_mode<synchronous>, transform_indices = @transform_3, window_bounds = array<i64: 33, 128>}, {pipeline_mode = #tpu.pipeline_mode<synchronous>, transform_indices = @transform_4, window_bounds = array<i64: 2, 128, 384>}, {pipeline_mode = #tpu.pipeline_mode<synchronous>, transform_indices = @transform_5, window_bounds = array<i64: 2, 1, 384>}, {pipeline_mode = #tpu.pipeline_mode<synchronous>, transform_indices = @transform_6, window_bounds = array<i64: 2, 128, 128>}, {pipeline_mode = #tpu.pipeline_mode<synchronous>, transform_indices = @transform_7, window_bounds = array<i64: 2, 128, 512>}, {pipeline_mode = #tpu.pipeline_mode<synchronous>, transform_indices = @transform_8, window_bounds = array<i64: 2, 1, 512>}, {pipeline_mode = #tpu.pipeline_mode<synchronous>, transform_indices = @transform_9, window_bounds = array<i64: 2, 512, 128>}, {pipeline_mode = #tpu.pipeline_mode<synchronous>, transform_indices = @transform_10, window_bounds = array<i64: 128, 128>}, {transform_indices = @transform_11, window_bounds = array<i64: 1, 1, 128>}]} {
    %c0 = arith.constant 0 : index
    %c0_0 = arith.constant 0 : index
    %c0_1 = arith.constant 0 : index
    %0 = vector.load %arg1[%c0, %c0_0, %c0_1] : memref<1x8x1xi32, #tpu.memory_space<vmem>>, vector<1x8x1xi32>
    %1 = vector.shape_cast %0 : vector<1x8x1xi32> to vector<8x1xi32>
    %2 = tpu.iota {dimensions = array<i32: 1>} : vector<8x64xi32>
    %3 = vector.broadcast %1 : vector<8x1xi32> to vector<8x64xi32>
    %4 = arith.cmpi eq, %3, %2 : vector<8x64xi32>
    %5 = arith.extui %4 : vector<8x64xi1> to vector<8x64xi32>
    %6 = arith.sitofp %5 : vector<8x64xi32> to vector<8x64xf32>
    %c0_2 = arith.constant 0 : index
    %c0_3 = arith.constant 0 : index
    %7 = vector.load %arg3[%c0_2, %c0_3] : memref<64x128xf32, #tpu.memory_space<vmem>>, vector<64x128xf32>
    %cst = arith.constant dense<0.000000e+00> : vector<8x128xf32>
    %8 = tpu.matmul %6, %7, %cst {dimension_numbers = #tpu.dot_dimension_numbers<[1], [0], [0], [1], [0, 0, 1, 1], [], []>} : vector<8x64xf32>, vector<64x128xf32>, vector<8x128xf32> -> vector<8x128xf32>
    %c0_4 = arith.constant 0 : index
    %c0_5 = arith.constant 0 : index
    %9 = vector.load %arg4[%c0_4, %c0_5] : memref<33x128xf32, #tpu.memory_space<vmem>>, vector<8x128xf32>
    %10 = arith.addf %8, %9 : vector<8x128xf32>
    %c16 = arith.constant 16 : index
    %c0_6 = arith.constant 0 : index
    %11 = vector.load %arg4[%c16, %c0_6] : memref<33x128xf32, #tpu.memory_space<vmem>>, vector<1x128xf32>
    %c17 = arith.constant 17 : index
    %c0_7 = arith.constant 0 : index
    %12 = vector.load %arg4[%c17, %c0_7] : memref<33x128xf32, #tpu.memory_space<vmem>>, vector<1x128xf32>
    %cst_8 = arith.constant dense<0.000000e+00> : vector<8xf32>
    %13 = vector.multi_reduction <add>, %10, %cst_8 [1] : vector<8x128xf32> to vector<8xf32>
    %14 = vector.shape_cast %13 : vector<8xf32> to vector<8x1xf32>
    %cst_9 = arith.constant 1.280000e+02 : f32
    %15 = vector.broadcast %cst_9 : f32 to vector<8x1xf32>
    %16 = arith.divf %14, %15 : vector<8x1xf32>
    %17 = vector.broadcast %16 : vector<8x1xf32> to vector<8x128xf32>
    %18 = arith.subf %10, %17 : vector<8x128xf32>
    %19 = arith.mulf %18, %18 : vector<8x128xf32>
    %cst_10 = arith.constant dense<0.000000e+00> : vector<8xf32>
    %20 = vector.multi_reduction <add>, %19, %cst_10 [1] : vector<8x128xf32> to vector<8xf32>
    %21 = vector.shape_cast %20 : vector<8xf32> to vector<8x1xf32>
    %cst_11 = arith.constant 1.280000e+02 : f32
    %22 = vector.broadcast %cst_11 : f32 to vector<8x1xf32>
    %23 = arith.divf %21, %22 : vector<8x1xf32>
    %24 = vector.broadcast %16 : vector<8x1xf32> to vector<8x128xf32>
    %25 = arith.subf %10, %24 : vector<8x128xf32>
    %cst_12 = arith.constant 9.99999996E-13 : f32
    %26 = vector.broadcast %cst_12 : f32 to vector<8x1xf32>
    %27 = arith.addf %23, %26 : vector<8x1xf32>
    %28 = math.rsqrt %27 : vector<8x1xf32>
    %29 = vector.broadcast %28 : vector<8x1xf32> to vector<8x128xf32>
    %30 = arith.mulf %25, %29 : vector<8x128xf32>
    %31 = vector.broadcast %11 : vector<1x128xf32> to vector<8x128xf32>
    %32 = arith.mulf %30, %31 : vector<8x128xf32>
    %33 = vector.broadcast %12 : vector<1x128xf32> to vector<8x128xf32>
    %34 = arith.addf %32, %33 : vector<8x128xf32>
    %c0_13 = arith.constant 0 : index
    %c0_14 = arith.constant 0 : index
    %c0_15 = arith.constant 0 : index
    %35 = vector.load %arg2[%c0_13, %c0_14, %c0_15] : memref<1x1x8xf32, #tpu.memory_space<vmem>>, vector<1x1x8xf32>
    %36 = vector.shape_cast %35 : vector<1x1x8xf32> to vector<1x8xf32>
    %cst_16 = arith.constant 1.000000e+00 : f32
    %37 = vector.broadcast %cst_16 : f32 to vector<1x8xf32>
    %38 = arith.subf %37, %36 : vector<1x8xf32>
    %cst_17 = arith.constant -1.000000e+04 : f32
    %39 = vector.broadcast %cst_17 : f32 to vector<1x8xf32>
    %40 = arith.mulf %38, %39 : vector<1x8xf32>
    %41 = vector.shape_cast %40 : vector<1x8xf32> to vector<1x1x8xf32>
    %c0_18 = arith.constant 0 : index
    %c0_19 = arith.constant 0 : index
    %c0_20 = arith.constant 0 : index
    %42 = vector.load %arg5[%c0_18, %c0_19, %c0_20] : memref<2x128x384xbf16, #tpu.memory_space<vmem>>, vector<1x128x384xbf16>
    %43 = vector.shape_cast %42 : vector<1x128x384xbf16> to vector<128x384xbf16>
    %44 = arith.truncf %34 : vector<8x128xf32> to vector<8x128xbf16>
    %cst_21 = arith.constant dense<0.000000e+00> : vector<8x384xf32>
    %45 = tpu.matmul %44, %43, %cst_21 {dimension_numbers = #tpu.dot_dimension_numbers<[1], [0], [0], [1], [0, 0, 1, 1], [], []>} : vector<8x128xbf16>, vector<128x384xbf16>, vector<8x384xf32> -> vector<8x384xf32>
    %c0_22 = arith.constant 0 : index
    %c0_23 = arith.constant 0 : index
    %c0_24 = arith.constant 0 : index
    %46 = vector.load %arg6[%c0_22, %c0_23, %c0_24] : memref<2x1x384xf32, #tpu.memory_space<vmem>>, vector<1x1x384xf32>
    %47 = vector.shape_cast %46 : vector<1x1x384xf32> to vector<1x384xf32>
    %48 = vector.broadcast %47 : vector<1x384xf32> to vector<8x384xf32>
    %49 = arith.addf %45, %48 : vector<8x384xf32>
    %50 = arith.truncf %49 : vector<8x384xf32> to vector<8x384xbf16>
    %51 = vector.extract_strided_slice %50 {offsets = [0, 0], sizes = [8, 128], strides = [1, 1]} : vector<8x384xbf16> to vector<8x128xbf16>
    %52 = vector.extract_strided_slice %51 {offsets = [0, 0], sizes = [8, 32], strides = [1, 1]} : vector<8x128xbf16> to vector<8x32xbf16>
    %53 = vector.shape_cast %52 : vector<8x32xbf16> to vector<1x8x32xbf16>
    %54 = vector.extract_strided_slice %51 {offsets = [0, 32], sizes = [8, 32], strides = [1, 1]} : vector<8x128xbf16> to vector<8x32xbf16>
    %55 = vector.shape_cast %54 : vector<8x32xbf16> to vector<1x8x32xbf16>
    %56 = vector.extract_strided_slice %51 {offsets = [0, 64], sizes = [8, 32], strides = [1, 1]} : vector<8x128xbf16> to vector<8x32xbf16>
    %57 = vector.shape_cast %56 : vector<8x32xbf16> to vector<1x8x32xbf16>
    %58 = vector.extract_strided_slice %51 {offsets = [0, 96], sizes = [8, 32], strides = [1, 1]} : vector<8x128xbf16> to vector<8x32xbf16>
    %59 = vector.shape_cast %58 : vector<8x32xbf16> to vector<1x8x32xbf16>
    %60 = tpu.concatenate %53, %55, %57, %59 in 0 : vector<1x8x32xbf16>, vector<1x8x32xbf16>, vector<1x8x32xbf16>, vector<1x8x32xbf16> -> vector<4x8x32xbf16>
    %61 = vector.extract_strided_slice %50 {offsets = [0, 128], sizes = [8, 128], strides = [1, 1]} : vector<8x384xbf16> to vector<8x128xbf16>
    %62 = vector.extract_strided_slice %61 {offsets = [0, 0], sizes = [8, 32], strides = [1, 1]} : vector<8x128xbf16> to vector<8x32xbf16>
    %63 = vector.shape_cast %62 : vector<8x32xbf16> to vector<1x8x32xbf16>
    %64 = vector.extract_strided_slice %61 {offsets = [0, 32], sizes = [8, 32], strides = [1, 1]} : vector<8x128xbf16> to vector<8x32xbf16>
    %65 = vector.shape_cast %64 : vector<8x32xbf16> to vector<1x8x32xbf16>
    %66 = vector.extract_strided_slice %61 {offsets = [0, 64], sizes = [8, 32], strides = [1, 1]} : vector<8x128xbf16> to vector<8x32xbf16>
    %67 = vector.shape_cast %66 : vector<8x32xbf16> to vector<1x8x32xbf16>
    %68 = vector.extract_strided_slice %61 {offsets = [0, 96], sizes = [8, 32], strides = [1, 1]} : vector<8x128xbf16> to vector<8x32xbf16>
    %69 = vector.shape_cast %68 : vector<8x32xbf16> to vector<1x8x32xbf16>
    %70 = tpu.concatenate %63, %65, %67, %69 in 0 : vector<1x8x32xbf16>, vector<1x8x32xbf16>, vector<1x8x32xbf16>, vector<1x8x32xbf16> -> vector<4x8x32xbf16>
    %71 = vector.extract_strided_slice %50 {offsets = [0, 256], sizes = [8, 128], strides = [1, 1]} : vector<8x384xbf16> to vector<8x128xbf16>
    %72 = vector.extract_strided_slice %71 {offsets = [0, 0], sizes = [8, 32], strides = [1, 1]} : vector<8x128xbf16> to vector<8x32xbf16>
    %73 = vector.shape_cast %72 : vector<8x32xbf16> to vector<1x8x32xbf16>
    %74 = vector.extract_strided_slice %71 {offsets = [0, 32], sizes = [8, 32], strides = [1, 1]} : vector<8x128xbf16> to vector<8x32xbf16>
    %75 = vector.shape_cast %74 : vector<8x32xbf16> to vector<1x8x32xbf16>
    %76 = vector.extract_strided_slice %71 {offsets = [0, 64], sizes = [8, 32], strides = [1, 1]} : vector<8x128xbf16> to vector<8x32xbf16>
    %77 = vector.shape_cast %76 : vector<8x32xbf16> to vector<1x8x32xbf16>
    %78 = vector.extract_strided_slice %71 {offsets = [0, 96], sizes = [8, 32], strides = [1, 1]} : vector<8x128xbf16> to vector<8x32xbf16>
    %79 = vector.shape_cast %78 : vector<8x32xbf16> to vector<1x8x32xbf16>
    %80 = tpu.concatenate %73, %75, %77, %79 in 0 : vector<1x8x32xbf16>, vector<1x8x32xbf16>, vector<1x8x32xbf16>, vector<1x8x32xbf16> -> vector<4x8x32xbf16>
    "tpu.trace_start"() <{level = 10 : i32, message = "hqd,hkd->hqk"}> : () -> ()
    %cst_25 = arith.constant dense<0.000000e+00> : vector<4x8x8xf32>
    %81 = tpu.matmul %60, %70, %cst_25 {dimension_numbers = #tpu.dot_dimension_numbers<[2], [2], [1], [1], [0, 0, 0, 1, 1, 1], [0], [0]>} : vector<4x8x32xbf16>, vector<4x8x32xbf16>, vector<4x8x8xf32> -> vector<4x8x8xf32>
    "tpu.trace_stop"() : () -> ()
    %cst_26 = arith.constant 0.176776692 : f32
    %82 = vector.broadcast %cst_26 : f32 to vector<4x8x8xf32>
    %83 = arith.mulf %81, %82 : vector<4x8x8xf32>
    %84 = vector.broadcast %41 : vector<1x1x8xf32> to vector<4x8x8xf32>
    %85 = arith.addf %83, %84 : vector<4x8x8xf32>
    %cst_27 = arith.constant dense<0xFF800000> : vector<4x8xf32>
    %86 = vector.multi_reduction <maximumf>, %85, %cst_27 [2] : vector<4x8x8xf32> to vector<4x8xf32>
    %87 = vector.shape_cast %86 : vector<4x8xf32> to vector<4x8x1xf32>
    %88 = vector.broadcast %87 : vector<4x8x1xf32> to vector<4x8x8xf32>
    %89 = arith.subf %85, %88 : vector<4x8x8xf32>
    %90 = math.exp %89 : vector<4x8x8xf32>
    %cst_28 = arith.constant dense<0.000000e+00> : vector<4x8xf32>
    %91 = vector.multi_reduction <add>, %90, %cst_28 [2] : vector<4x8x8xf32> to vector<4x8xf32>
    %92 = vector.shape_cast %91 : vector<4x8xf32> to vector<4x8x1xf32>
    %93 = vector.broadcast %92 : vector<4x8x1xf32> to vector<4x8x8xf32>
    %94 = arith.divf %90, %93 : vector<4x8x8xf32>
    %95 = arith.truncf %94 : vector<4x8x8xf32> to vector<4x8x8xbf16>
    "tpu.trace_start"() <{level = 10 : i32, message = "hqk,hkd->hqd"}> : () -> ()
    %cst_29 = arith.constant dense<0.000000e+00> : vector<4x8x32xf32>
    %96 = tpu.matmul %95, %80, %cst_29 {dimension_numbers = #tpu.dot_dimension_numbers<[2], [1], [1], [2], [0, 0, 0, 1, 1, 2], [0], [0]>} : vector<4x8x8xbf16>, vector<4x8x32xbf16>, vector<4x8x32xf32> -> vector<4x8x32xf32>
    "tpu.trace_stop"() : () -> ()
    %97 = vector.extract_strided_slice %96 {offsets = [0, 0, 0], sizes = [1, 8, 32], strides = [1, 1, 1]} : vector<4x8x32xf32> to vector<1x8x32xf32>
    %98 = vector.shape_cast %97 : vector<1x8x32xf32> to vector<8x32xf32>
    %99 = vector.extract_strided_slice %96 {offsets = [1, 0, 0], sizes = [1, 8, 32], strides = [1, 1, 1]} : vector<4x8x32xf32> to vector<1x8x32xf32>
    %100 = vector.shape_cast %99 : vector<1x8x32xf32> to vector<8x32xf32>
    %101 = vector.extract_strided_slice %96 {offsets = [2, 0, 0], sizes = [1, 8, 32], strides = [1, 1, 1]} : vector<4x8x32xf32> to vector<1x8x32xf32>
    %102 = vector.shape_cast %101 : vector<1x8x32xf32> to vector<8x32xf32>
    %103 = vector.extract_strided_slice %96 {offsets = [3, 0, 0], sizes = [1, 8, 32], strides = [1, 1, 1]} : vector<4x8x32xf32> to vector<1x8x32xf32>
    %104 = vector.shape_cast %103 : vector<1x8x32xf32> to vector<8x32xf32>
    %105 = tpu.concatenate %98, %100, %102, %104 in 1 : vector<8x32xf32>, vector<8x32xf32>, vector<8x32xf32>, vector<8x32xf32> -> vector<8x128xf32>
    %c0_30 = arith.constant 0 : index
    %c0_31 = arith.constant 0 : index
    %c0_32 = arith.constant 0 : index
    %106 = vector.load %arg7[%c0_30, %c0_31, %c0_32] : memref<2x128x128xbf16, #tpu.memory_space<vmem>>, vector<1x128x128xbf16>
    %107 = vector.shape_cast %106 : vector<1x128x128xbf16> to vector<128x128xbf16>
    %108 = arith.truncf %105 : vector<8x128xf32> to vector<8x128xbf16>
    %cst_33 = arith.constant dense<0.000000e+00> : vector<8x128xf32>
    %109 = tpu.matmul %108, %107, %cst_33 {dimension_numbers = #tpu.dot_dimension_numbers<[1], [0], [0], [1], [0, 0, 1, 1], [], []>} : vector<8x128xbf16>, vector<128x128xbf16>, vector<8x128xf32> -> vector<8x128xf32>
    %c18 = arith.constant 18 : index
    %c0_34 = arith.constant 0 : index
    %110 = vector.load %arg4[%c18, %c0_34] : memref<33x128xf32, #tpu.memory_space<vmem>>, vector<1x128xf32>
    %111 = vector.broadcast %110 : vector<1x128xf32> to vector<8x128xf32>
    %112 = arith.addf %109, %111 : vector<8x128xf32>
    %113 = arith.addf %112, %34 : vector<8x128xf32>
    %c19 = arith.constant 19 : index
    %c0_35 = arith.constant 0 : index
    %114 = vector.load %arg4[%c19, %c0_35] : memref<33x128xf32, #tpu.memory_space<vmem>>, vector<1x128xf32>
    %c20 = arith.constant 20 : index
    %c0_36 = arith.constant 0 : index
    %115 = vector.load %arg4[%c20, %c0_36] : memref<33x128xf32, #tpu.memory_space<vmem>>, vector<1x128xf32>
    %cst_37 = arith.constant dense<0.000000e+00> : vector<8xf32>
    %116 = vector.multi_reduction <add>, %113, %cst_37 [1] : vector<8x128xf32> to vector<8xf32>
    %117 = vector.shape_cast %116 : vector<8xf32> to vector<8x1xf32>
    %cst_38 = arith.constant 1.280000e+02 : f32
    %118 = vector.broadcast %cst_38 : f32 to vector<8x1xf32>
    %119 = arith.divf %117, %118 : vector<8x1xf32>
    %120 = vector.broadcast %119 : vector<8x1xf32> to vector<8x128xf32>
    %121 = arith.subf %113, %120 : vector<8x128xf32>
    %122 = arith.mulf %121, %121 : vector<8x128xf32>
    %cst_39 = arith.constant dense<0.000000e+00> : vector<8xf32>
    %123 = vector.multi_reduction <add>, %122, %cst_39 [1] : vector<8x128xf32> to vector<8xf32>
    %124 = vector.shape_cast %123 : vector<8xf32> to vector<8x1xf32>
    %cst_40 = arith.constant 1.280000e+02 : f32
    %125 = vector.broadcast %cst_40 : f32 to vector<8x1xf32>
    %126 = arith.divf %124, %125 : vector<8x1xf32>
    %127 = vector.broadcast %119 : vector<8x1xf32> to vector<8x128xf32>
    %128 = arith.subf %113, %127 : vector<8x128xf32>
    %cst_41 = arith.constant 9.99999996E-13 : f32
    %129 = vector.broadcast %cst_41 : f32 to vector<8x1xf32>
    %130 = arith.addf %126, %129 : vector<8x1xf32>
    %131 = math.rsqrt %130 : vector<8x1xf32>
    %132 = vector.broadcast %131 : vector<8x1xf32> to vector<8x128xf32>
    %133 = arith.mulf %128, %132 : vector<8x128xf32>
    %134 = vector.broadcast %114 : vector<1x128xf32> to vector<8x128xf32>
    %135 = arith.mulf %133, %134 : vector<8x128xf32>
    %136 = vector.broadcast %115 : vector<1x128xf32> to vector<8x128xf32>
    %137 = arith.addf %135, %136 : vector<8x128xf32>
    %c0_42 = arith.constant 0 : index
    %c0_43 = arith.constant 0 : index
    %c0_44 = arith.constant 0 : index
    %138 = vector.load %arg8[%c0_42, %c0_43, %c0_44] : memref<2x128x512xbf16, #tpu.memory_space<vmem>>, vector<1x128x512xbf16>
    %139 = vector.shape_cast %138 : vector<1x128x512xbf16> to vector<128x512xbf16>
    %140 = arith.truncf %137 : vector<8x128xf32> to vector<8x128xbf16>
    %cst_45 = arith.constant dense<0.000000e+00> : vector<8x512xf32>
    %141 = tpu.matmul %140, %139, %cst_45 {dimension_numbers = #tpu.dot_dimension_numbers<[1], [0], [0], [1], [0, 0, 1, 1], [], []>} : vector<8x128xbf16>, vector<128x512xbf16>, vector<8x512xf32> -> vector<8x512xf32>
    %c0_46 = arith.constant 0 : index
    %c0_47 = arith.constant 0 : index
    %c0_48 = arith.constant 0 : index
    %142 = vector.load %arg9[%c0_46, %c0_47, %c0_48] : memref<2x1x512xf32, #tpu.memory_space<vmem>>, vector<1x1x512xf32>
    %143 = vector.shape_cast %142 : vector<1x1x512xf32> to vector<1x512xf32>
    %144 = vector.broadcast %143 : vector<1x512xf32> to vector<8x512xf32>
    %145 = arith.addf %141, %144 : vector<8x512xf32>
    %cst_49 = arith.constant 5.000000e-01 : f32
    %146 = vector.broadcast %cst_49 : f32 to vector<8x512xf32>
    %147 = arith.mulf %146, %145 : vector<8x512xf32>
    %cst_50 = arith.constant 4.471500e-02 : f32
    %148 = vector.broadcast %cst_50 : f32 to vector<8x512xf32>
    %149 = arith.mulf %148, %145 : vector<8x512xf32>
    %150 = arith.mulf %149, %145 : vector<8x512xf32>
    %151 = arith.mulf %150, %145 : vector<8x512xf32>
    %152 = arith.addf %145, %151 : vector<8x512xf32>
    %cst_51 = arith.constant 0.797884583 : f32
    %153 = vector.broadcast %cst_51 : f32 to vector<8x512xf32>
    %154 = arith.mulf %153, %152 : vector<8x512xf32>
    %155 = math.tanh %154 : vector<8x512xf32>
    %cst_52 = arith.constant 1.000000e+00 : f32
    %156 = vector.broadcast %cst_52 : f32 to vector<8x512xf32>
    %157 = arith.addf %156, %155 : vector<8x512xf32>
    %158 = arith.mulf %147, %157 : vector<8x512xf32>
    %c0_53 = arith.constant 0 : index
    %c0_54 = arith.constant 0 : index
    %c0_55 = arith.constant 0 : index
    %159 = vector.load %arg10[%c0_53, %c0_54, %c0_55] : memref<2x512x128xbf16, #tpu.memory_space<vmem>>, vector<1x512x128xbf16>
    %160 = vector.shape_cast %159 : vector<1x512x128xbf16> to vector<512x128xbf16>
    %161 = arith.truncf %158 : vector<8x512xf32> to vector<8x512xbf16>
    %cst_56 = arith.constant dense<0.000000e+00> : vector<8x128xf32>
    %162 = tpu.matmul %161, %160, %cst_56 {dimension_numbers = #tpu.dot_dimension_numbers<[1], [0], [0], [1], [0, 0, 1, 1], [], []>} : vector<8x512xbf16>, vector<512x128xbf16>, vector<8x128xf32> -> vector<8x128xf32>
    %c21 = arith.constant 21 : index
    %c0_57 = arith.constant 0 : index
    %163 = vector.load %arg4[%c21, %c0_57] : memref<33x128xf32, #tpu.memory_space<vmem>>, vector<1x128xf32>
    %164 = vector.broadcast %163 : vector<1x128xf32> to vector<8x128xf32>
    %165 = arith.addf %162, %164 : vector<8x128xf32>
    %166 = arith.addf %165, %137 : vector<8x128xf32>
    %c22 = arith.constant 22 : index
    %c0_58 = arith.constant 0 : index
    %167 = vector.load %arg4[%c22, %c0_58] : memref<33x128xf32, #tpu.memory_space<vmem>>, vector<1x128xf32>
    %c23 = arith.constant 23 : index
    %c0_59 = arith.constant 0 : index
    %168 = vector.load %arg4[%c23, %c0_59] : memref<33x128xf32, #tpu.memory_space<vmem>>, vector<1x128xf32>
    %cst_60 = arith.constant dense<0.000000e+00> : vector<8xf32>
    %169 = vector.multi_reduction <add>, %166, %cst_60 [1] : vector<8x128xf32> to vector<8xf32>
    %170 = vector.shape_cast %169 : vector<8xf32> to vector<8x1xf32>
    %cst_61 = arith.constant 1.280000e+02 : f32
    %171 = vector.broadcast %cst_61 : f32 to vector<8x1xf32>
    %172 = arith.divf %170, %171 : vector<8x1xf32>
    %173 = vector.broadcast %172 : vector<8x1xf32> to vector<8x128xf32>
    %174 = arith.subf %166, %173 : vector<8x128xf32>
    %175 = arith.mulf %174, %174 : vector<8x128xf32>
    %cst_62 = arith.constant dense<0.000000e+00> : vector<8xf32>
    %176 = vector.multi_reduction <add>, %175, %cst_62 [1] : vector<8x128xf32> to vector<8xf32>
    %177 = vector.shape_cast %176 : vector<8xf32> to vector<8x1xf32>
    %cst_63 = arith.constant 1.280000e+02 : f32
    %178 = vector.broadcast %cst_63 : f32 to vector<8x1xf32>
    %179 = arith.divf %177, %178 : vector<8x1xf32>
    %180 = vector.broadcast %172 : vector<8x1xf32> to vector<8x128xf32>
    %181 = arith.subf %166, %180 : vector<8x128xf32>
    %cst_64 = arith.constant 9.99999996E-13 : f32
    %182 = vector.broadcast %cst_64 : f32 to vector<8x1xf32>
    %183 = arith.addf %179, %182 : vector<8x1xf32>
    %184 = math.rsqrt %183 : vector<8x1xf32>
    %185 = vector.broadcast %184 : vector<8x1xf32> to vector<8x128xf32>
    %186 = arith.mulf %181, %185 : vector<8x128xf32>
    %187 = vector.broadcast %167 : vector<1x128xf32> to vector<8x128xf32>
    %188 = arith.mulf %186, %187 : vector<8x128xf32>
    %189 = vector.broadcast %168 : vector<1x128xf32> to vector<8x128xf32>
    %190 = arith.addf %188, %189 : vector<8x128xf32>
    %c1 = arith.constant 1 : index
    %c0_65 = arith.constant 0 : index
    %c0_66 = arith.constant 0 : index
    %191 = vector.load %arg5[%c1, %c0_65, %c0_66] : memref<2x128x384xbf16, #tpu.memory_space<vmem>>, vector<1x128x384xbf16>
    %192 = vector.shape_cast %191 : vector<1x128x384xbf16> to vector<128x384xbf16>
    %193 = arith.truncf %190 : vector<8x128xf32> to vector<8x128xbf16>
    %cst_67 = arith.constant dense<0.000000e+00> : vector<8x384xf32>
    %194 = tpu.matmul %193, %192, %cst_67 {dimension_numbers = #tpu.dot_dimension_numbers<[1], [0], [0], [1], [0, 0, 1, 1], [], []>} : vector<8x128xbf16>, vector<128x384xbf16>, vector<8x384xf32> -> vector<8x384xf32>
    %c1_68 = arith.constant 1 : index
    %c0_69 = arith.constant 0 : index
    %c0_70 = arith.constant 0 : index
    %195 = vector.load %arg6[%c1_68, %c0_69, %c0_70] : memref<2x1x384xf32, #tpu.memory_space<vmem>>, vector<1x1x384xf32>
    %196 = vector.shape_cast %195 : vector<1x1x384xf32> to vector<1x384xf32>
    %197 = vector.broadcast %196 : vector<1x384xf32> to vector<8x384xf32>
    %198 = arith.addf %194, %197 : vector<8x384xf32>
    %199 = arith.truncf %198 : vector<8x384xf32> to vector<8x384xbf16>
    %200 = vector.extract_strided_slice %199 {offsets = [0, 0], sizes = [8, 128], strides = [1, 1]} : vector<8x384xbf16> to vector<8x128xbf16>
    %201 = vector.extract_strided_slice %200 {offsets = [0, 0], sizes = [8, 32], strides = [1, 1]} : vector<8x128xbf16> to vector<8x32xbf16>
    %202 = vector.shape_cast %201 : vector<8x32xbf16> to vector<1x8x32xbf16>
    %203 = vector.extract_strided_slice %200 {offsets = [0, 32], sizes = [8, 32], strides = [1, 1]} : vector<8x128xbf16> to vector<8x32xbf16>
    %204 = vector.shape_cast %203 : vector<8x32xbf16> to vector<1x8x32xbf16>
    %205 = vector.extract_strided_slice %200 {offsets = [0, 64], sizes = [8, 32], strides = [1, 1]} : vector<8x128xbf16> to vector<8x32xbf16>
    %206 = vector.shape_cast %205 : vector<8x32xbf16> to vector<1x8x32xbf16>
    %207 = vector.extract_strided_slice %200 {offsets = [0, 96], sizes = [8, 32], strides = [1, 1]} : vector<8x128xbf16> to vector<8x32xbf16>
    %208 = vector.shape_cast %207 : vector<8x32xbf16> to vector<1x8x32xbf16>
    %209 = tpu.concatenate %202, %204, %206, %208 in 0 : vector<1x8x32xbf16>, vector<1x8x32xbf16>, vector<1x8x32xbf16>, vector<1x8x32xbf16> -> vector<4x8x32xbf16>
    %210 = vector.extract_strided_slice %199 {offsets = [0, 128], sizes = [8, 128], strides = [1, 1]} : vector<8x384xbf16> to vector<8x128xbf16>
    %211 = vector.extract_strided_slice %210 {offsets = [0, 0], sizes = [8, 32], strides = [1, 1]} : vector<8x128xbf16> to vector<8x32xbf16>
    %212 = vector.shape_cast %211 : vector<8x32xbf16> to vector<1x8x32xbf16>
    %213 = vector.extract_strided_slice %210 {offsets = [0, 32], sizes = [8, 32], strides = [1, 1]} : vector<8x128xbf16> to vector<8x32xbf16>
    %214 = vector.shape_cast %213 : vector<8x32xbf16> to vector<1x8x32xbf16>
    %215 = vector.extract_strided_slice %210 {offsets = [0, 64], sizes = [8, 32], strides = [1, 1]} : vector<8x128xbf16> to vector<8x32xbf16>
    %216 = vector.shape_cast %215 : vector<8x32xbf16> to vector<1x8x32xbf16>
    %217 = vector.extract_strided_slice %210 {offsets = [0, 96], sizes = [8, 32], strides = [1, 1]} : vector<8x128xbf16> to vector<8x32xbf16>
    %218 = vector.shape_cast %217 : vector<8x32xbf16> to vector<1x8x32xbf16>
    %219 = tpu.concatenate %212, %214, %216, %218 in 0 : vector<1x8x32xbf16>, vector<1x8x32xbf16>, vector<1x8x32xbf16>, vector<1x8x32xbf16> -> vector<4x8x32xbf16>
    %220 = vector.extract_strided_slice %199 {offsets = [0, 256], sizes = [8, 128], strides = [1, 1]} : vector<8x384xbf16> to vector<8x128xbf16>
    %221 = vector.extract_strided_slice %220 {offsets = [0, 0], sizes = [8, 32], strides = [1, 1]} : vector<8x128xbf16> to vector<8x32xbf16>
    %222 = vector.shape_cast %221 : vector<8x32xbf16> to vector<1x8x32xbf16>
    %223 = vector.extract_strided_slice %220 {offsets = [0, 32], sizes = [8, 32], strides = [1, 1]} : vector<8x128xbf16> to vector<8x32xbf16>
    %224 = vector.shape_cast %223 : vector<8x32xbf16> to vector<1x8x32xbf16>
    %225 = vector.extract_strided_slice %220 {offsets = [0, 64], sizes = [8, 32], strides = [1, 1]} : vector<8x128xbf16> to vector<8x32xbf16>
    %226 = vector.shape_cast %225 : vector<8x32xbf16> to vector<1x8x32xbf16>
    %227 = vector.extract_strided_slice %220 {offsets = [0, 96], sizes = [8, 32], strides = [1, 1]} : vector<8x128xbf16> to vector<8x32xbf16>
    %228 = vector.shape_cast %227 : vector<8x32xbf16> to vector<1x8x32xbf16>
    %229 = tpu.concatenate %222, %224, %226, %228 in 0 : vector<1x8x32xbf16>, vector<1x8x32xbf16>, vector<1x8x32xbf16>, vector<1x8x32xbf16> -> vector<4x8x32xbf16>
    "tpu.trace_start"() <{level = 10 : i32, message = "hqd,hkd->hqk"}> : () -> ()
    %cst_71 = arith.constant dense<0.000000e+00> : vector<4x8x8xf32>
    %230 = tpu.matmul %209, %219, %cst_71 {dimension_numbers = #tpu.dot_dimension_numbers<[2], [2], [1], [1], [0, 0, 0, 1, 1, 1], [0], [0]>} : vector<4x8x32xbf16>, vector<4x8x32xbf16>, vector<4x8x8xf32> -> vector<4x8x8xf32>
    "tpu.trace_stop"() : () -> ()
    %cst_72 = arith.constant 0.176776692 : f32
    %231 = vector.broadcast %cst_72 : f32 to vector<4x8x8xf32>
    %232 = arith.mulf %230, %231 : vector<4x8x8xf32>
    %233 = vector.broadcast %41 : vector<1x1x8xf32> to vector<4x8x8xf32>
    %234 = arith.addf %232, %233 : vector<4x8x8xf32>
    %cst_73 = arith.constant dense<0xFF800000> : vector<4x8xf32>
    %235 = vector.multi_reduction <maximumf>, %234, %cst_73 [2] : vector<4x8x8xf32> to vector<4x8xf32>
    %236 = vector.shape_cast %235 : vector<4x8xf32> to vector<4x8x1xf32>
    %237 = vector.broadcast %236 : vector<4x8x1xf32> to vector<4x8x8xf32>
    %238 = arith.subf %234, %237 : vector<4x8x8xf32>
    %239 = math.exp %238 : vector<4x8x8xf32>
    %cst_74 = arith.constant dense<0.000000e+00> : vector<4x8xf32>
    %240 = vector.multi_reduction <add>, %239, %cst_74 [2] : vector<4x8x8xf32> to vector<4x8xf32>
    %241 = vector.shape_cast %240 : vector<4x8xf32> to vector<4x8x1xf32>
    %242 = vector.broadcast %241 : vector<4x8x1xf32> to vector<4x8x8xf32>
    %243 = arith.divf %239, %242 : vector<4x8x8xf32>
    %244 = arith.truncf %243 : vector<4x8x8xf32> to vector<4x8x8xbf16>
    "tpu.trace_start"() <{level = 10 : i32, message = "hqk,hkd->hqd"}> : () -> ()
    %cst_75 = arith.constant dense<0.000000e+00> : vector<4x8x32xf32>
    %245 = tpu.matmul %244, %229, %cst_75 {dimension_numbers = #tpu.dot_dimension_numbers<[2], [1], [1], [2], [0, 0, 0, 1, 1, 2], [0], [0]>} : vector<4x8x8xbf16>, vector<4x8x32xbf16>, vector<4x8x32xf32> -> vector<4x8x32xf32>
    "tpu.trace_stop"() : () -> ()
    %246 = vector.extract_strided_slice %245 {offsets = [0, 0, 0], sizes = [1, 8, 32], strides = [1, 1, 1]} : vector<4x8x32xf32> to vector<1x8x32xf32>
    %247 = vector.shape_cast %246 : vector<1x8x32xf32> to vector<8x32xf32>
    %248 = vector.extract_strided_slice %245 {offsets = [1, 0, 0], sizes = [1, 8, 32], strides = [1, 1, 1]} : vector<4x8x32xf32> to vector<1x8x32xf32>
    %249 = vector.shape_cast %248 : vector<1x8x32xf32> to vector<8x32xf32>
    %250 = vector.extract_strided_slice %245 {offsets = [2, 0, 0], sizes = [1, 8, 32], strides = [1, 1, 1]} : vector<4x8x32xf32> to vector<1x8x32xf32>
    %251 = vector.shape_cast %250 : vector<1x8x32xf32> to vector<8x32xf32>
    %252 = vector.extract_strided_slice %245 {offsets = [3, 0, 0], sizes = [1, 8, 32], strides = [1, 1, 1]} : vector<4x8x32xf32> to vector<1x8x32xf32>
    %253 = vector.shape_cast %252 : vector<1x8x32xf32> to vector<8x32xf32>
    %254 = tpu.concatenate %247, %249, %251, %253 in 1 : vector<8x32xf32>, vector<8x32xf32>, vector<8x32xf32>, vector<8x32xf32> -> vector<8x128xf32>
    %c1_76 = arith.constant 1 : index
    %c0_77 = arith.constant 0 : index
    %c0_78 = arith.constant 0 : index
    %255 = vector.load %arg7[%c1_76, %c0_77, %c0_78] : memref<2x128x128xbf16, #tpu.memory_space<vmem>>, vector<1x128x128xbf16>
    %256 = vector.shape_cast %255 : vector<1x128x128xbf16> to vector<128x128xbf16>
    %257 = arith.truncf %254 : vector<8x128xf32> to vector<8x128xbf16>
    %cst_79 = arith.constant dense<0.000000e+00> : vector<8x128xf32>
    %258 = tpu.matmul %257, %256, %cst_79 {dimension_numbers = #tpu.dot_dimension_numbers<[1], [0], [0], [1], [0, 0, 1, 1], [], []>} : vector<8x128xbf16>, vector<128x128xbf16>, vector<8x128xf32> -> vector<8x128xf32>
    %c24 = arith.constant 24 : index
    %c0_80 = arith.constant 0 : index
    %259 = vector.load %arg4[%c24, %c0_80] : memref<33x128xf32, #tpu.memory_space<vmem>>, vector<1x128xf32>
    %260 = vector.broadcast %259 : vector<1x128xf32> to vector<8x128xf32>
    %261 = arith.addf %258, %260 : vector<8x128xf32>
    %262 = arith.addf %261, %190 : vector<8x128xf32>
    %c25 = arith.constant 25 : index
    %c0_81 = arith.constant 0 : index
    %263 = vector.load %arg4[%c25, %c0_81] : memref<33x128xf32, #tpu.memory_space<vmem>>, vector<1x128xf32>
    %c26 = arith.constant 26 : index
    %c0_82 = arith.constant 0 : index
    %264 = vector.load %arg4[%c26, %c0_82] : memref<33x128xf32, #tpu.memory_space<vmem>>, vector<1x128xf32>
    %cst_83 = arith.constant dense<0.000000e+00> : vector<8xf32>
    %265 = vector.multi_reduction <add>, %262, %cst_83 [1] : vector<8x128xf32> to vector<8xf32>
    %266 = vector.shape_cast %265 : vector<8xf32> to vector<8x1xf32>
    %cst_84 = arith.constant 1.280000e+02 : f32
    %267 = vector.broadcast %cst_84 : f32 to vector<8x1xf32>
    %268 = arith.divf %266, %267 : vector<8x1xf32>
    %269 = vector.broadcast %268 : vector<8x1xf32> to vector<8x128xf32>
    %270 = arith.subf %262, %269 : vector<8x128xf32>
    %271 = arith.mulf %270, %270 : vector<8x128xf32>
    %cst_85 = arith.constant dense<0.000000e+00> : vector<8xf32>
    %272 = vector.multi_reduction <add>, %271, %cst_85 [1] : vector<8x128xf32> to vector<8xf32>
    %273 = vector.shape_cast %272 : vector<8xf32> to vector<8x1xf32>
    %cst_86 = arith.constant 1.280000e+02 : f32
    %274 = vector.broadcast %cst_86 : f32 to vector<8x1xf32>
    %275 = arith.divf %273, %274 : vector<8x1xf32>
    %276 = vector.broadcast %268 : vector<8x1xf32> to vector<8x128xf32>
    %277 = arith.subf %262, %276 : vector<8x128xf32>
    %cst_87 = arith.constant 9.99999996E-13 : f32
    %278 = vector.broadcast %cst_87 : f32 to vector<8x1xf32>
    %279 = arith.addf %275, %278 : vector<8x1xf32>
    %280 = math.rsqrt %279 : vector<8x1xf32>
    %281 = vector.broadcast %280 : vector<8x1xf32> to vector<8x128xf32>
    %282 = arith.mulf %277, %281 : vector<8x128xf32>
    %283 = vector.broadcast %263 : vector<1x128xf32> to vector<8x128xf32>
    %284 = arith.mulf %282, %283 : vector<8x128xf32>
    %285 = vector.broadcast %264 : vector<1x128xf32> to vector<8x128xf32>
    %286 = arith.addf %284, %285 : vector<8x128xf32>
    %c1_88 = arith.constant 1 : index
    %c0_89 = arith.constant 0 : index
    %c0_90 = arith.constant 0 : index
    %287 = vector.load %arg8[%c1_88, %c0_89, %c0_90] : memref<2x128x512xbf16, #tpu.memory_space<vmem>>, vector<1x128x512xbf16>
    %288 = vector.shape_cast %287 : vector<1x128x512xbf16> to vector<128x512xbf16>
    %289 = arith.truncf %286 : vector<8x128xf32> to vector<8x128xbf16>
    %cst_91 = arith.constant dense<0.000000e+00> : vector<8x512xf32>
    %290 = tpu.matmul %289, %288, %cst_91 {dimension_numbers = #tpu.dot_dimension_numbers<[1], [0], [0], [1], [0, 0, 1, 1], [], []>} : vector<8x128xbf16>, vector<128x512xbf16>, vector<8x512xf32> -> vector<8x512xf32>
    %c1_92 = arith.constant 1 : index
    %c0_93 = arith.constant 0 : index
    %c0_94 = arith.constant 0 : index
    %291 = vector.load %arg9[%c1_92, %c0_93, %c0_94] : memref<2x1x512xf32, #tpu.memory_space<vmem>>, vector<1x1x512xf32>
    %292 = vector.shape_cast %291 : vector<1x1x512xf32> to vector<1x512xf32>
    %293 = vector.broadcast %292 : vector<1x512xf32> to vector<8x512xf32>
    %294 = arith.addf %290, %293 : vector<8x512xf32>
    %cst_95 = arith.constant 5.000000e-01 : f32
    %295 = vector.broadcast %cst_95 : f32 to vector<8x512xf32>
    %296 = arith.mulf %295, %294 : vector<8x512xf32>
    %cst_96 = arith.constant 4.471500e-02 : f32
    %297 = vector.broadcast %cst_96 : f32 to vector<8x512xf32>
    %298 = arith.mulf %297, %294 : vector<8x512xf32>
    %299 = arith.mulf %298, %294 : vector<8x512xf32>
    %300 = arith.mulf %299, %294 : vector<8x512xf32>
    %301 = arith.addf %294, %300 : vector<8x512xf32>
    %cst_97 = arith.constant 0.797884583 : f32
    %302 = vector.broadcast %cst_97 : f32 to vector<8x512xf32>
    %303 = arith.mulf %302, %301 : vector<8x512xf32>
    %304 = math.tanh %303 : vector<8x512xf32>
    %cst_98 = arith.constant 1.000000e+00 : f32
    %305 = vector.broadcast %cst_98 : f32 to vector<8x512xf32>
    %306 = arith.addf %305, %304 : vector<8x512xf32>
    %307 = arith.mulf %296, %306 : vector<8x512xf32>
    %c1_99 = arith.constant 1 : index
    %c0_100 = arith.constant 0 : index
    %c0_101 = arith.constant 0 : index
    %308 = vector.load %arg10[%c1_99, %c0_100, %c0_101] : memref<2x512x128xbf16, #tpu.memory_space<vmem>>, vector<1x512x128xbf16>
    %309 = vector.shape_cast %308 : vector<1x512x128xbf16> to vector<512x128xbf16>
    %310 = arith.truncf %307 : vector<8x512xf32> to vector<8x512xbf16>
    %cst_102 = arith.constant dense<0.000000e+00> : vector<8x128xf32>
    %311 = tpu.matmul %310, %309, %cst_102 {dimension_numbers = #tpu.dot_dimension_numbers<[1], [0], [0], [1], [0, 0, 1, 1], [], []>} : vector<8x512xbf16>, vector<512x128xbf16>, vector<8x128xf32> -> vector<8x128xf32>
    %c27 = arith.constant 27 : index
    %c0_103 = arith.constant 0 : index
    %312 = vector.load %arg4[%c27, %c0_103] : memref<33x128xf32, #tpu.memory_space<vmem>>, vector<1x128xf32>
    %313 = vector.broadcast %312 : vector<1x128xf32> to vector<8x128xf32>
    %314 = arith.addf %311, %313 : vector<8x128xf32>
    %315 = arith.addf %314, %286 : vector<8x128xf32>
    %c28 = arith.constant 28 : index
    %c0_104 = arith.constant 0 : index
    %316 = vector.load %arg4[%c28, %c0_104] : memref<33x128xf32, #tpu.memory_space<vmem>>, vector<1x128xf32>
    %c29 = arith.constant 29 : index
    %c0_105 = arith.constant 0 : index
    %317 = vector.load %arg4[%c29, %c0_105] : memref<33x128xf32, #tpu.memory_space<vmem>>, vector<1x128xf32>
    %cst_106 = arith.constant dense<0.000000e+00> : vector<8xf32>
    %318 = vector.multi_reduction <add>, %315, %cst_106 [1] : vector<8x128xf32> to vector<8xf32>
    %319 = vector.shape_cast %318 : vector<8xf32> to vector<8x1xf32>
    %cst_107 = arith.constant 1.280000e+02 : f32
    %320 = vector.broadcast %cst_107 : f32 to vector<8x1xf32>
    %321 = arith.divf %319, %320 : vector<8x1xf32>
    %322 = vector.broadcast %321 : vector<8x1xf32> to vector<8x128xf32>
    %323 = arith.subf %315, %322 : vector<8x128xf32>
    %324 = arith.mulf %323, %323 : vector<8x128xf32>
    %cst_108 = arith.constant dense<0.000000e+00> : vector<8xf32>
    %325 = vector.multi_reduction <add>, %324, %cst_108 [1] : vector<8x128xf32> to vector<8xf32>
    %326 = vector.shape_cast %325 : vector<8xf32> to vector<8x1xf32>
    %cst_109 = arith.constant 1.280000e+02 : f32
    %327 = vector.broadcast %cst_109 : f32 to vector<8x1xf32>
    %328 = arith.divf %326, %327 : vector<8x1xf32>
    %329 = vector.broadcast %321 : vector<8x1xf32> to vector<8x128xf32>
    %330 = arith.subf %315, %329 : vector<8x128xf32>
    %cst_110 = arith.constant 9.99999996E-13 : f32
    %331 = vector.broadcast %cst_110 : f32 to vector<8x1xf32>
    %332 = arith.addf %328, %331 : vector<8x1xf32>
    %333 = math.rsqrt %332 : vector<8x1xf32>
    %334 = vector.broadcast %333 : vector<8x1xf32> to vector<8x128xf32>
    %335 = arith.mulf %330, %334 : vector<8x128xf32>
    %336 = vector.broadcast %316 : vector<1x128xf32> to vector<8x128xf32>
    %337 = arith.mulf %335, %336 : vector<8x128xf32>
    %338 = vector.broadcast %317 : vector<1x128xf32> to vector<8x128xf32>
    %339 = arith.addf %337, %338 : vector<8x128xf32>
    %340 = vector.extract_strided_slice %339 {offsets = [0, 0], sizes = [1, 128], strides = [1, 1]} : vector<8x128xf32> to vector<1x128xf32>
    %c0_111 = arith.constant 0 : index
    %c0_112 = arith.constant 0 : index
    %341 = vector.load %arg11[%c0_111, %c0_112] : memref<128x128xbf16, #tpu.memory_space<vmem>>, vector<128x128xbf16>
    %342 = arith.truncf %340 : vector<1x128xf32> to vector<1x128xbf16>
    %cst_113 = arith.constant dense<0.000000e+00> : vector<1x128xf32>
    %343 = tpu.matmul %342, %341, %cst_113 {dimension_numbers = #tpu.dot_dimension_numbers<[1], [0], [0], [1], [0, 0, 1, 1], [], []>} : vector<1x128xbf16>, vector<128x128xbf16>, vector<1x128xf32> -> vector<1x128xf32>
    %c30 = arith.constant 30 : index
    %c0_114 = arith.constant 0 : index
    %344 = vector.load %arg4[%c30, %c0_114] : memref<33x128xf32, #tpu.memory_space<vmem>>, vector<1x128xf32>
    %345 = arith.addf %343, %344 : vector<1x128xf32>
    %346 = math.tanh %345 : vector<1x128xf32>
    %c31 = arith.constant 31 : index
    %c0_115 = arith.constant 0 : index
    %347 = vector.load %arg4[%c31, %c0_115] : memref<33x128xf32, #tpu.memory_space<vmem>>, vector<1x128xf32>
    %348 = arith.mulf %346, %347 : vector<1x128xf32>
    %cst_116 = arith.constant dense<0.000000e+00> : vector<1xf32>
    %349 = vector.multi_reduction <add>, %348, %cst_116 [1] : vector<1x128xf32> to vector<1xf32>
    %350 = vector.shape_cast %349 : vector<1xf32> to vector<1x1xf32>
    %c32 = arith.constant 32 : index
    %c0_117 = arith.constant 0 : index
    %351 = vector.load %arg4[%c32, %c0_117] : memref<33x128xf32, #tpu.memory_space<vmem>>, vector<1x128xf32>
    %352 = vector.extract_strided_slice %351 {offsets = [0, 0], sizes = [1, 1], strides = [1, 1]} : vector<1x128xf32> to vector<1x1xf32>
    %353 = arith.addf %350, %352 : vector<1x1xf32>
    %cst_118 = arith.constant 0.000000e+00 : f32
    %354 = vector.broadcast %cst_118 : f32 to vector<1x1xf32>
    %355 = arith.subf %354, %353 : vector<1x1xf32>
    %356 = math.exp %355 : vector<1x1xf32>
    %cst_119 = arith.constant 1.000000e+00 : f32
    %357 = vector.broadcast %cst_119 : f32 to vector<1x1xf32>
    %358 = arith.addf %357, %356 : vector<1x1xf32>
    %cst_120 = arith.constant 1.000000e+00 : f32
    %359 = vector.broadcast %cst_120 : f32 to vector<1x1xf32>
    %360 = arith.divf %359, %358 : vector<1x1xf32>
    %361 = vector.shape_cast %360 : vector<1x1xf32> to vector<1x1x1xf32>
    %362 = vector.shape_cast %361 : vector<1x1x1xf32> to vector<1x1x1xf32>
    %363 = vector.broadcast %362 : vector<1x1x1xf32> to vector<1x1x128xf32>
    %c0_121 = arith.constant 0 : index
    %c0_122 = arith.constant 0 : index
    %c0_123 = arith.constant 0 : index
    %364 = vector.load %arg12[%c0_121, %c0_122, %c0_123] : memref<1x1x128xf32, #tpu.memory_space<vmem>>, vector<1x1x128xf32>
    tpu.vector_store %arg12[%c0_121, %c0_122, %c0_123], %363 {strides = array<i32>} : memref<1x1x128xf32, #tpu.memory_space<vmem>>, vector<1x1x128xf32>,
    return
  }
  func.func @transform_0(%arg0: i32) -> (i32, i32, i32) {
    %c0_i32 = arith.constant 0 : i32
    %c0_i32_0 = arith.constant 0 : i32
    %c0_i32_1 = arith.constant 0 : i32
    return %arg0, %c0_i32, %c0_i32_0 : i32, i32, i32
  }
  func.func @transform_1(%arg0: i32) -> (i32, i32, i32) {
    %c0_i32 = arith.constant 0 : i32
    %c0_i32_0 = arith.constant 0 : i32
    %c0_i32_1 = arith.constant 0 : i32
    return %arg0, %c0_i32, %c0_i32_0 : i32, i32, i32
  }
  func.func @transform_2(%arg0: i32) -> (i32, i32) {
    %c0_i32 = arith.constant 0 : i32
    %c0_i32_0 = arith.constant 0 : i32
    %c0_i32_1 = arith.constant 0 : i32
    return %c0_i32, %c0_i32_0 : i32, i32
  }
  func.func @transform_3(%arg0: i32) -> (i32, i32) {
    %c0_i32 = arith.constant 0 : i32
    %c0_i32_0 = arith.constant 0 : i32
    %c0_i32_1 = arith.constant 0 : i32
    return %c0_i32, %c0_i32_0 : i32, i32
  }
  func.func @transform_4(%arg0: i32) -> (i32, i32, i32) {
    %c0_i32 = arith.constant 0 : i32
    %c0_i32_0 = arith.constant 0 : i32
    %c0_i32_1 = arith.constant 0 : i32
    %c0_i32_2 = arith.constant 0 : i32
    return %c0_i32, %c0_i32_0, %c0_i32_1 : i32, i32, i32
  }
  func.func @transform_5(%arg0: i32) -> (i32, i32, i32) {
    %c0_i32 = arith.constant 0 : i32
    %c0_i32_0 = arith.constant 0 : i32
    %c0_i32_1 = arith.constant 0 : i32
    %c0_i32_2 = arith.constant 0 : i32
    return %c0_i32, %c0_i32_0, %c0_i32_1 : i32, i32, i32
  }
  func.func @transform_6(%arg0: i32) -> (i32, i32, i32) {
    %c0_i32 = arith.constant 0 : i32
    %c0_i32_0 = arith.constant 0 : i32
    %c0_i32_1 = arith.constant 0 : i32
    %c0_i32_2 = arith.constant 0 : i32
    return %c0_i32, %c0_i32_0, %c0_i32_1 : i32, i32, i32
  }
  func.func @transform_7(%arg0: i32) -> (i32, i32, i32) {
    %c0_i32 = arith.constant 0 : i32
    %c0_i32_0 = arith.constant 0 : i32
    %c0_i32_1 = arith.constant 0 : i32
    %c0_i32_2 = arith.constant 0 : i32
    return %c0_i32, %c0_i32_0, %c0_i32_1 : i32, i32, i32
  }
  func.func @transform_8(%arg0: i32) -> (i32, i32, i32) {
    %c0_i32 = arith.constant 0 : i32
    %c0_i32_0 = arith.constant 0 : i32
    %c0_i32_1 = arith.constant 0 : i32
    %c0_i32_2 = arith.constant 0 : i32
    return %c0_i32, %c0_i32_0, %c0_i32_1 : i32, i32, i32
  }
  func.func @transform_9(%arg0: i32) -> (i32, i32, i32) {
    %c0_i32 = arith.constant 0 : i32
    %c0_i32_0 = arith.constant 0 : i32
    %c0_i32_1 = arith.constant 0 : i32
    %c0_i32_2 = arith.constant 0 : i32
    return %c0_i32, %c0_i32_0, %c0_i32_1 : i32, i32, i32
  }
  func.func @transform_10(%arg0: i32) -> (i32, i32) {
    %c0_i32 = arith.constant 0 : i32
    %c0_i32_0 = arith.constant 0 : i32
    %c0_i32_1 = arith.constant 0 : i32
    return %c0_i32, %c0_i32_0 : i32, i32
  }
  func.func @transform_11(%arg0: i32) -> (i32, i32, i32) {
    %c0_i32 = arith.constant 0 : i32
    %c0_i32_0 = arith.constant 0 : i32
    %c0_i32_1 = arith.constant 0 : i32
    return %arg0, %c0_i32, %c0_i32_0 : i32, i32, i32
  }
}

</mosaic_0001>

<llo_original>
// kernel: bert_binary_classifier.1
$region0: #{bert_binary_classifier.1}
  #allocation0 [shape = 'u32[]', space=smem, size = 0x4, offset = 0x4, fixed_abs, tag = 'smem constant byte address 0x4 - core index']
  #allocation1 [shape = 'u32[72,128]{1,0:T(1,128)}', space=vmem, size = 0x9000, scoped, tag = 'internal scratch']
  %s0 = inlined_call_operand.vmem [shape: s32[2,8,1], index: 0, kind: input, shape index: {}]
  %s1 = inlined_call_operand.vmem [shape: f32[2,1,8], index: 1, kind: input, shape index: {}]
  %s2 = inlined_call_operand.hbm [shape: f32[64,128], index: 2, kind: input, shape index: {}]
  %s3 = inlined_call_operand.hbm [shape: f32[33,128], index: 3, kind: input, shape index: {}]
  %s4 = inlined_call_operand.hbm [shape: bf16[2,128,384], index: 4, kind: input, shape index: {}]
  %s5 = inlined_call_operand.vmem [shape: f32[2,1,384], index: 5, kind: input, shape index: {}]
  %s6 = inlined_call_operand.hbm [shape: bf16[2,128,128], index: 6, kind: input, shape index: {}]
  %s7 = inlined_call_operand.hbm [shape: bf16[2,128,512], index: 7, kind: input, shape index: {}]
  %s8 = inlined_call_operand.vmem [shape: f32[2,1,512], index: 8, kind: input, shape index: {}]
  %s9 = inlined_call_operand.hbm [shape: bf16[2,512,128], index: 9, kind: input, shape index: {}]
  %s10 = inlined_call_operand.hbm [shape: bf16[128,128], index: 10, kind: input, shape index: {}]
  %s11 = inlined_call_operand.vmem [shape: f32[2,1,128], index: 11, kind: output, shape index: {}]
  %s12 = sld [smem:[#allocation0]]
  $region105: #{bert_binary_classifier.1} parent=0
    _
  %s14 = ssub.s32 1, %s12
  %s15 = scalar_select 0, %s14, %s12
  $region1: #{bert_binary_classifier.1} parent=0
    #allocation2 [shape = 'u8[32768]{0}', space=vmem, size = 0x8000, scoped, tag = 'input window, operand 2, single buffered']
    #allocation3 [shape = 's32[2]{0}', space=sflag, size = 0x8, scoped, tag = 'scoped memory for bert_binary_classifier.1']
    #allocation4 [shape = 'u8[20480]{0}', space=vmem, size = 0x5000, scoped, tag = 'input window, operand 3, single buffered']
    #allocation5 [shape = 's32[1]{0}', space=sflag, size = 0x4, scoped, tag = 'scoped memory for bert_binary_classifier.1']
    #allocation6 [shape = 'u8[196608]{0}', space=vmem, size = 0x30000, scoped, tag = 'input window, operand 4, single buffered']
    #allocation7 [shape = 'u8[65536]{0}', space=vmem, size = 0x10000, scoped, tag = 'input window, operand 6, single buffered']
    #allocation8 [shape = 's32[1]{0}', space=sflag, size = 0x4, scoped, tag = 'scoped memory for bert_binary_classifier.1']
    #allocation9 [shape = 'u8[262144]{0}', space=vmem, size = 0x40000, scoped, tag = 'input window, operand 7, single buffered']
    #allocation10 [shape = 'u8[262144]{0}', space=vmem, size = 0x40000, scoped, tag = 'input window, operand 9, single buffered']
    #allocation11 [shape = 's32[1]{0}', space=sflag, size = 0x4, scoped, tag = 'scoped memory for bert_binary_classifier.1']
    #allocation12 [shape = 'u8[32768]{0}', space=vmem, size = 0x8000, scoped, tag = 'input window, operand 10, single buffered']
    %16 = vsyncpa [#allocation3], 0
    %17 = vsyncpa [#allocation5], 0
    %18 = vsyncpa [#allocation8], 0
    %19 = vsyncpa [#allocation11], 0
    loop: start=0, step=1, limit=4
    $region2: #{bert_binary_classifier.1} parent=1 // loop_pre_header
      _
    $region3: #{bert_binary_classifier.1} parent=1 // loop_header
      %s21 = sphi 0, %s25
      %p22 = scmp.ge.s32.totalorder %s21, 4
      %s31 = sphi 0, %s33
      %s34 = sphi 0, %s31
      %s35 = sphi 0, %s34
      %s51 = sphi 0, %s35
      %s57 = sphi 0, %s59
      %s60 = sphi 0, %s57
      %s61 = sphi 0, %s60
      %s77 = sphi 0, %s61
      %s81 = sphi 0, %s81
      %s83 = sphi 0, %s81
      %s84 = sphi 0, %s83
      %s98 = sphi 0, %s84
      %s102 = sphi 0, %s102
      %s104 = sphi 0, %s102
      %s105 = sphi 0, %s104
      %s119 = sphi 0, %s105
      %s123 = sphi 0, %s123
      %s125 = sphi 0, %s123
      %s126 = sphi 0, %s125
      %s140 = sphi 0, %s126
      %s144 = sphi 0, %s144
      %s146 = sphi 0, %s144
      %s147 = sphi 0, %s146
      %s161 = sphi 0, %s147
      %s165 = sphi 0, %s165
      %s167 = sphi 0, %s165
      %s168 = sphi 0, %s167
      %s182 = sphi 0, %s168
      %s186 = sphi 0, %s186
      %s188 = sphi 0, %s186
      %s189 = sphi 0, %s188
      %s203 = sphi 0, %s189
      %s207 = sphi 0, %s207
      %s209 = sphi 0, %s207
      %s210 = sphi 0, %s209
      %s224 = sphi 0, %s210
      %s228 = sphi 0, %s228
      %s230 = sphi 0, %s228
      %s231 = sphi 0, %s230
      %s245 = sphi 0, %s231
      %s249 = sphi 0, %s249
      %s251 = sphi 0, %s249
      %s252 = sphi 0, %s251
      %s266 = sphi 0, %s252
      %s272 = sphi 0, %s274
      %s275 = sphi 0, %s272
      %s276 = sphi 0, %s275
      %s292 = sphi 0, %s276
    $region4: #{bert_binary_classifier.1} parent=1 // loop_header_branch
      %24 = sbr.rel (%p22) target = $region8
    $region5: #{bert_binary_classifier.1} parent=1 // loop_body
      %s26 = ssub.s32 %s21, 1
      %s27 = ssub.s32 %s21, 2
      %s28 = sadd.s32 %s21, 1
      %s29 = ssub.s32 %s21, %s28
      %p30 = scmp.eq.s32.totalorder %s29, 0
      %s32 = sadd.s32 %s31, 1
      %s33 = scalar_select %p30, %s31, %s32
      %p36 = pneg %p30
      %p37 = scmp.eq.s32.totalorder %s21, 1
      %p38 = por %p36, %p37
      %p39 = scmp.ne.s32.totalorder %s31, %s34
      %p40 = scmp.eq.s32.totalorder %s21, 0
      %p41 = por %p39, %p40
      %p42 = scmp.ne.s32.totalorder %s31, %s34
      %p43 = scmp.eq.s32.totalorder %s26, 1
      %p44 = por %p42, %p43
      %p45 = scmp.ne.s32.totalorder %s34, %s35
      %p46 = scmp.eq.s32.totalorder %s26, 0
      %p47 = por %p45, %p46
      %p48 = scmp.ne.s32.totalorder %s34, %s35
      %p49 = scmp.eq.s32.totalorder %s27, 1
      %p50 = por %p48, %p49
      %p52 = scmp.ne.s32.totalorder %s35, %s51
      %p53 = scmp.eq.s32.totalorder %s27, 0
      %p54 = por %p52, %p53
      %s55 = ssub.s32 %s21, %s28
      %p56 = scmp.eq.s32.totalorder %s55, 0
      %s58 = sadd.s32 %s57, 1
      %s59 = scalar_select %p56, %s57, %s58
      %p62 = pneg %p56
      %p63 = scmp.eq.s32.totalorder %s21, 1
      %p64 = por %p62, %p63
      %p65 = scmp.ne.s32.totalorder %s57, %s60
      %p66 = scmp.eq.s32.totalorder %s21, 0
      %p67 = por %p65, %p66
      %p68 = scmp.ne.s32.totalorder %s57, %s60
      %p69 = scmp.eq.s32.totalorder %s26, 1
      %p70 = por %p68, %p69
      %p71 = scmp.ne.s32.totalorder %s60, %s61
      %p72 = scmp.eq.s32.totalorder %s26, 0
      %p73 = por %p71, %p72
      %p74 = scmp.ne.s32.totalorder %s60, %s61
      %p75 = scmp.eq.s32.totalorder %s27, 1
      %p76 = por %p74, %p75
      %p78 = scmp.ne.s32.totalorder %s61, %s77
      %p79 = scmp.eq.s32.totalorder %s27, 0
      %p80 = por %p78, %p79
      %s82 = sadd.s32 %s81, 1
      %p85 = scmp.eq.s32.totalorder %s21, 1
      %p86 = scmp.ne.s32.totalorder %s81, %s83
      %p87 = scmp.eq.s32.totalorder %s21, 0
      %p88 = por %p86, %p87
      %p89 = scmp.ne.s32.totalorder %s81, %s83
      %p90 = scmp.eq.s32.totalorder %s26, 1
      %p91 = por %p89, %p90
      %p92 = scmp.ne.s32.totalorder %s83, %s84
      %p93 = scmp.eq.s32.totalorder %s26, 0
      %p94 = por %p92, %p93
      %p95 = scmp.ne.s32.totalorder %s83, %s84
      %p96 = scmp.eq.s32.totalorder %s27, 1
      %p97 = por %p95, %p96
      %p99 = scmp.ne.s32.totalorder %s84, %s98
      %p100 = scmp.eq.s32.totalorder %s27, 0
      %p101 = por %p99, %p100
      %s103 = sadd.s32 %s102, 1
      %p106 = scmp.eq.s32.totalorder %s21, 1
      %p107 = scmp.ne.s32.totalorder %s102, %s104
      %p108 = scmp.eq.s32.totalorder %s21, 0
      %p109 = por %p107, %p108
      %p110 = scmp.ne.s32.totalorder %s102, %s104
      %p111 = scmp.eq.s32.totalorder %s26, 1
      %p112 = por %p110, %p111
      %p113 = scmp.ne.s32.totalorder %s104, %s105
      %p114 = scmp.eq.s32.totalorder %s26, 0
      %p115 = por %p113, %p114
      %p116 = scmp.ne.s32.totalorder %s104, %s105
      %p117 = scmp.eq.s32.totalorder %s27, 1
      %p118 = por %p116, %p117
      %p120 = scmp.ne.s32.totalorder %s105, %s119
      %p121 = scmp.eq.s32.totalorder %s27, 0
      %p122 = por %p120, %p121
      %s124 = sadd.s32 %s123, 1
      %p127 = scmp.eq.s32.totalorder %s21, 1
      %p128 = scmp.ne.s32.totalorder %s123, %s125
      %p129 = scmp.eq.s32.totalorder %s21, 0
      %p130 = por %p128, %p129
      %p131 = scmp.ne.s32.totalorder %s123, %s125
      %p132 = scmp.eq.s32.totalorder %s26, 1
      %p133 = por %p131, %p132
      %p134 = scmp.ne.s32.totalorder %s125, %s126
      %p135 = scmp.eq.s32.totalorder %s26, 0
      %p136 = por %p134, %p135
      %p137 = scmp.ne.s32.totalorder %s125, %s126
      %p138 = scmp.eq.s32.totalorder %s27, 1
      %p139 = por %p137, %p138
      %p141 = scmp.ne.s32.totalorder %s126, %s140
      %p142 = scmp.eq.s32.totalorder %s27, 0
      %p143 = por %p141, %p142
      %s145 = sadd.s32 %s144, 1
      %p148 = scmp.eq.s32.totalorder %s21, 1
      %p149 = scmp.ne.s32.totalorder %s144, %s146
      %p150 = scmp.eq.s32.totalorder %s21, 0
      %p151 = por %p149, %p150
      %p152 = scmp.ne.s32.totalorder %s144, %s146
      %p153 = scmp.eq.s32.totalorder %s26, 1
      %p154 = por %p152, %p153
      %p155 = scmp.ne.s32.totalorder %s146, %s147
      %p156 = scmp.eq.s32.totalorder %s26, 0
      %p157 = por %p155, %p156
      %p158 = scmp.ne.s32.totalorder %s146, %s147
      %p159 = scmp.eq.s32.totalorder %s27, 1
      %p160 = por %p158, %p159
      %p162 = scmp.ne.s32.totalorder %s147, %s161
      %p163 = scmp.eq.s32.totalorder %s27, 0
      %p164 = por %p162, %p163
      %s166 = sadd.s32 %s165, 1
      %p169 = scmp.eq.s32.totalorder %s21, 1
      %p170 = scmp.ne.s32.totalorder %s165, %s167
      %p171 = scmp.eq.s32.totalorder %s21, 0
      %p172 = por %p170, %p171
      %p173 = scmp.ne.s32.totalorder %s165, %s167
      %p174 = scmp.eq.s32.totalorder %s26, 1
      %p175 = por %p173, %p174
      %p176 = scmp.ne.s32.totalorder %s167, %s168
      %p177 = scmp.eq.s32.totalorder %s26, 0
      %p178 = por %p176, %p177
      %p179 = scmp.ne.s32.totalorder %s167, %s168
      %p180 = scmp.eq.s32.totalorder %s27, 1
      %p181 = por %p179, %p180
      %p183 = scmp.ne.s32.totalorder %s168, %s182
      %p184 = scmp.eq.s32.totalorder %s27, 0
      %p185 = por %p183, %p184
      %s187 = sadd.s32 %s186, 1
      %p190 = scmp.eq.s32.totalorder %s21, 1
      %p191 = scmp.ne.s32.totalorder %s186, %s188
      %p192 = scmp.eq.s32.totalorder %s21, 0
      %p193 = por %p191, %p192
      %p194 = scmp.ne.s32.totalorder %s186, %s188
      %p195 = scmp.eq.s32.totalorder %s26, 1
      %p196 = por %p194, %p195
      %p197 = scmp.ne.s32.totalorder %s188, %s189
      %p198 = scmp.eq.s32.totalorder %s26, 0
      %p199 = por %p197, %p198
      %p200 = scmp.ne.s32.totalorder %s188, %s189
      %p201 = scmp.eq.s32.totalorder %s27, 1
      %p202 = por %p200, %p201
      %p204 = scmp.ne.s32.totalorder %s189, %s203
      %p205 = scmp.eq.s32.totalorder %s27, 0
      %p206 = por %p204, %p205
      %s208 = sadd.s32 %s207, 1
      %p211 = scmp.eq.s32.totalorder %s21, 1
      %p212 = scmp.ne.s32.totalorder %s207, %s209
      %p213 = scmp.eq.s32.totalorder %s21, 0
      %p214 = por %p212, %p213
      %p215 = scmp.ne.s32.totalorder %s207, %s209
      %p216 = scmp.eq.s32.totalorder %s26, 1
      %p217 = por %p215, %p216
      %p218 = scmp.ne.s32.totalorder %s209, %s210
      %p219 = scmp.eq.s32.totalorder %s26, 0
      %p220 = por %p218, %p219
      %p221 = scmp.ne.s32.totalorder %s209, %s210
      %p222 = scmp.eq.s32.totalorder %s27, 1
      %p223 = por %p221, %p222
      %p225 = scmp.ne.s32.totalorder %s210, %s224
      %p226 = scmp.eq.s32.totalorder %s27, 0
      %p227 = por %p225, %p226
      %s229 = sadd.s32 %s228, 1
      %p232 = scmp.eq.s32.totalorder %s21, 1
      %p233 = scmp.ne.s32.totalorder %s228, %s230
      %p234 = scmp.eq.s32.totalorder %s21, 0
      %p235 = por %p233, %p234
      %p236 = scmp.ne.s32.totalorder %s228, %s230
      %p237 = scmp.eq.s32.totalorder %s26, 1
      %p238 = por %p236, %p237
      %p239 = scmp.ne.s32.totalorder %s230, %s231
      %p240 = scmp.eq.s32.totalorder %s26, 0
      %p241 = por %p239, %p240
      %p242 = scmp.ne.s32.totalorder %s230, %s231
      %p243 = scmp.eq.s32.totalorder %s27, 1
      %p244 = por %p242, %p243
      %p246 = scmp.ne.s32.totalorder %s231, %s245
      %p247 = scmp.eq.s32.totalorder %s27, 0
      %p248 = por %p246, %p247
      %s250 = sadd.s32 %s249, 1
      %p253 = scmp.eq.s32.totalorder %s21, 1
      %p254 = scmp.ne.s32.totalorder %s249, %s251
      %p255 = scmp.eq.s32.totalorder %s21, 0
      %p256 = por %p254, %p255
      %p257 = scmp.ne.s32.totalorder %s249, %s251
      %p258 = scmp.eq.s32.totalorder %s26, 1
      %p259 = por %p257, %p258
      %p260 = scmp.ne.s32.totalorder %s251, %s252
      %p261 = scmp.eq.s32.totalorder %s26, 0
      %p262 = por %p260, %p261
      %p263 = scmp.ne.s32.totalorder %s251, %s252
      %p264 = scmp.eq.s32.totalorder %s27, 1
      %p265 = por %p263, %p264
      %p267 = scmp.ne.s32.totalorder %s252, %s266
      %p268 = scmp.eq.s32.totalorder %s27, 0
      %p269 = por %p267, %p268
      %s270 = ssub.s32 %s21, %s28
      %p271 = scmp.eq.s32.totalorder %s270, 0
      %s273 = sadd.s32 %s272, 1
      %s274 = scalar_select %p271, %s272, %s273
      %p277 = pneg %p271
      %p278 = scmp.eq.s32.totalorder %s21, 1
      %p279 = por %p277, %p278
      %p280 = scmp.ne.s32.totalorder %s272, %s275
      %p281 = scmp.eq.s32.totalorder %s21, 0
      %p282 = por %p280, %p281
      %p283 = scmp.ne.s32.totalorder %s272, %s275
      %p284 = scmp.eq.s32.totalorder %s26, 1
      %p285 = por %p283, %p284
      %p286 = scmp.ne.s32.totalorder %s275, %s276
      %p287 = scmp.eq.s32.totalorder %s26, 0
      %p288 = por %p286, %p287
      %p289 = scmp.ne.s32.totalorder %s275, %s276
      %p290 = scmp.eq.s32.totalorder %s27, 1
      %p291 = por %p289, %p290
      %p293 = scmp.ne.s32.totalorder %s276, %s292
      %p294 = scmp.eq.s32.totalorder %s27, 0
      %p295 = por %p293, %p294
      %p296 = scmp.le.s32.totalorder 1, %s21
      %p297 = scmp.lt.s32.totalorder %s21, 3
      %p298 = pnand %p296, %p297
      %p299 = pneg %p298
      // Predicated region
      $region9: #{bert_binary_classifier.1} parent=5 // pred_check
        _
      $region10: #{bert_binary_classifier.1} parent=5 // pred_check_branch
        %301 = sbr.rel (%p298) target = $region12
      $region11: #{bert_binary_classifier.1} parent=5 // pred_region
        %s302 = ssub.s32 %s21, 1
        // Predicated region
        $region13: #{bert_binary_classifier.1} parent=11 // pred_check
          %p303 = pneg %p94
        $region14: #{bert_binary_classifier.1} parent=11 // pred_check_branch
          %305 = sbr.rel (%p303) target = $region16
        $region15: #{bert_binary_classifier.1} parent=11 // pred_region
          %307 = vsyncadd [#allocation3], 0
          %s308 = sshll.u32 %s2, 4
          %s309 = int_to_ptr.hbm [resolvable:$true] %s308
          %s310 = sshll.u32 [#allocation2], 4
          %s311 = int_to_ptr.vmem [resolvable:$true] %s310
          %316 = dma.hbm_to_vmem [thread:$0]  %s309, 1024, %s311, [#allocation3], 128, 128, 8
        $region16: #{bert_binary_classifier.1} parent=11 // pred_fallthru
          _
        // Predicated region
        $region17: #{bert_binary_classifier.1} parent=11 // pred_check
          %p317 = pneg %p115
        $region18: #{bert_binary_classifier.1} parent=11 // pred_check_branch
          %319 = sbr.rel (%p317) target = $region20
        $region19: #{bert_binary_classifier.1} parent=11 // pred_region
          %321 = vsyncadd [#allocation5], 0
          %s322 = sshll.u32 %s3, 4
          %s323 = int_to_ptr.hbm [resolvable:$true] %s322
          %s324 = sshll.u32 [#allocation4], 4
          %s325 = int_to_ptr.vmem [resolvable:$true] %s324
          %330 = dma.hbm_to_vmem [thread:$0]  %s323, 640, %s325, [#allocation5], 128, 128, 8
        $region20: #{bert_binary_classifier.1} parent=11 // pred_fallthru
          _
        // Predicated region
        $region21: #{bert_binary_classifier.1} parent=11 // pred_check
          %p331 = pneg %p136
        $region22: #{bert_binary_classifier.1} parent=11 // pred_check_branch
          %333 = sbr.rel (%p331) target = $region24
        $region23: #{bert_binary_classifier.1} parent=11 // pred_region
          %335 = vsyncadd [#allocation5], 0
          %s336 = sshll.u32 %s4, 4
          %s337 = int_to_ptr.hbm [resolvable:$true] %s336
          %s338 = sshll.u32 [#allocation6], 4
          %s339 = int_to_ptr.vmem [resolvable:$true] %s338
          %344 = dma.hbm_to_vmem [thread:$0]  %s337, 6144, %s339, [#allocation5], 192, 192, 12
        $region24: #{bert_binary_classifier.1} parent=11 // pred_fallthru
          _
        // Predicated region
        $region25: #{bert_binary_classifier.1} parent=11 // pred_check
          %p345 = pneg %p157
        $region26: #{bert_binary_classifier.1} parent=11 // pred_check_branch
          %347 = sbr.rel (%p345) target = $region28
        $region27: #{bert_binary_classifier.1} parent=11 // pred_region
          _
        $region28: #{bert_binary_classifier.1} parent=11 // pred_fallthru
          _
        // Predicated region
        $region29: #{bert_binary_classifier.1} parent=11 // pred_check
          %p348 = pneg %p178
        $region30: #{bert_binary_classifier.1} parent=11 // pred_check_branch
          %350 = sbr.rel (%p348) target = $region32
        $region31: #{bert_binary_classifier.1} parent=11 // pred_region
          %352 = vsyncadd [#allocation8], 0
          %s353 = sshll.u32 %s6, 4
          %s354 = int_to_ptr.hbm [resolvable:$true] %s353
          %s355 = sshll.u32 [#allocation7], 4
          %s356 = int_to_ptr.vmem [resolvable:$true] %s355
          %361 = dma.hbm_to_vmem [thread:$0]  %s354, 2048, %s356, [#allocation8], 64, 64, 4
        $region32: #{bert_binary_classifier.1} parent=11 // pred_fallthru
          _
        // Predicated region
        $region33: #{bert_binary_classifier.1} parent=11 // pred_check
          %p362 = pneg %p199
        $region34: #{bert_binary_classifier.1} parent=11 // pred_check_branch
          %364 = sbr.rel (%p362) target = $region36
        $region35: #{bert_binary_classifier.1} parent=11 // pred_region
          %366 = vsyncadd [#allocation8], 0
          %s367 = sshll.u32 %s7, 4
          %s368 = int_to_ptr.hbm [resolvable:$true] %s367
          %s369 = sshll.u32 [#allocation9], 4
          %s370 = int_to_ptr.vmem [resolvable:$true] %s369
          %375 = dma.hbm_to_vmem [thread:$0]  %s368, 8192, %s370, [#allocation8], 256, 256, 16
        $region36: #{bert_binary_classifier.1} parent=11 // pred_fallthru
          _
        // Predicated region
        $region37: #{bert_binary_classifier.1} parent=11 // pred_check
          %p376 = pneg %p220
        $region38: #{bert_binary_classifier.1} parent=11 // pred_check_branch
          %378 = sbr.rel (%p376) target = $region40
        $region39: #{bert_binary_classifier.1} parent=11 // pred_region
          _
        $region40: #{bert_binary_classifier.1} parent=11 // pred_fallthru
          _
        // Predicated region
        $region41: #{bert_binary_classifier.1} parent=11 // pred_check
          %p379 = pneg %p241
        $region42: #{bert_binary_classifier.1} parent=11 // pred_check_branch
          %381 = sbr.rel (%p379) target = $region44
        $region43: #{bert_binary_classifier.1} parent=11 // pred_region
          %383 = vsyncadd [#allocation11], 0
          %s384 = sshll.u32 %s9, 4
          %s385 = int_to_ptr.hbm [resolvable:$true] %s384
          %s386 = sshll.u32 [#allocation10], 4
          %s387 = int_to_ptr.vmem [resolvable:$true] %s386
          %392 = dma.hbm_to_vmem [thread:$0]  %s385, 8192, %s387, [#allocation11], 64, 64, 4
        $region44: #{bert_binary_classifier.1} parent=11 // pred_fallthru
          _
        // Predicated region
        $region45: #{bert_binary_classifier.1} parent=11 // pred_check
          %p393 = pneg %p262
        $region46: #{bert_binary_classifier.1} parent=11 // pred_check_branch
          %395 = sbr.rel (%p393) target = $region48
        $region47: #{bert_binary_classifier.1} parent=11 // pred_region
          %397 = vsyncadd [#allocation11], 0
          %s398 = sshll.u32 %s10, 4
          %s399 = int_to_ptr.hbm [resolvable:$true] %s398
          %s400 = sshll.u32 [#allocation12], 4
          %s401 = int_to_ptr.vmem [resolvable:$true] %s400
          %406 = dma.hbm_to_vmem [thread:$0]  %s399, 1024, %s401, [#allocation11], 64, 64, 4
        $region48: #{bert_binary_classifier.1} parent=11 // pred_fallthru
          _
      $region12: #{bert_binary_classifier.1} parent=5 // pred_fallthru
        _
      %p407 = scmp.lt.s32.totalorder %s21, 2
      // Predicated region
      $region49: #{bert_binary_classifier.1} parent=5 // pred_check
        %p408 = pneg %p407
      $region50: #{bert_binary_classifier.1} parent=5 // pred_check_branch
        %410 = sbr.rel (%p408) target = $region52
      $region51: #{bert_binary_classifier.1} parent=5 // pred_region
        // Predicated region
        $region53: #{bert_binary_classifier.1} parent=51 // pred_check
          %p411 = pneg %p41
        $region54: #{bert_binary_classifier.1} parent=51 // pred_check_branch
          %413 = sbr.rel (%p411) target = $region56
        $region55: #{bert_binary_classifier.1} parent=51 // pred_region
          %p414 = scmp.lt.s32.totalorder %s21, 1
          %s415 = scalar_select %p414, %s21, 1
          %s416 = smul.addr %s415, 8
          %s417 = scalar_lea.vmem %s0, %s416
        $region56: #{bert_binary_classifier.1} parent=51 // pred_fallthru
          _
        // Predicated region
        $region57: #{bert_binary_classifier.1} parent=51 // pred_check
          %p418 = pneg %p67
        $region58: #{bert_binary_classifier.1} parent=51 // pred_check_branch
          %420 = sbr.rel (%p418) target = $region60
        $region59: #{bert_binary_classifier.1} parent=51 // pred_region
          %p421 = scmp.lt.s32.totalorder %s21, 1
          %s422 = scalar_select %p421, %s21, 1
          %s423 = scalar_lea.vmem %s1, %s422
        $region60: #{bert_binary_classifier.1} parent=51 // pred_fallthru
          _
      $region52: #{bert_binary_classifier.1} parent=5 // pred_fallthru
        _
      %p424 = scmp.le.s32.totalorder 1, %s21
      %p425 = scmp.lt.s32.totalorder %s21, 3
      %p426 = pnand %p424, %p425
      %p427 = pneg %p426
      // Predicated region
      $region61: #{bert_binary_classifier.1} parent=5 // pred_check
        _
      $region62: #{bert_binary_classifier.1} parent=5 // pred_check_branch
        %429 = sbr.rel (%p426) target = $region64
      $region63: #{bert_binary_classifier.1} parent=5 // pred_region
        %s430 = ssub.s32 %s21, 1
        // Predicated region
        $region65: #{bert_binary_classifier.1} parent=63 // pred_check
          %p431 = pneg %p94
        $region66: #{bert_binary_classifier.1} parent=63 // pred_check_branch
          %433 = sbr.rel (%p431) target = $region68
        $region67: #{bert_binary_classifier.1} parent=63 // pred_region
          %435 = dma.done [#allocation3], 1024
        $region68: #{bert_binary_classifier.1} parent=63 // pred_fallthru
          _
        // Predicated region
        $region69: #{bert_binary_classifier.1} parent=63 // pred_check
          %p436 = pneg %p115
        $region70: #{bert_binary_classifier.1} parent=63 // pred_check_branch
          %438 = sbr.rel (%p436) target = $region72
        $region71: #{bert_binary_classifier.1} parent=63 // pred_region
          %440 = dma.done [#allocation5], 640
        $region72: #{bert_binary_classifier.1} parent=63 // pred_fallthru
          _
        // Predicated region
        $region73: #{bert_binary_classifier.1} parent=63 // pred_check
          %p441 = pneg %p136
        $region74: #{bert_binary_classifier.1} parent=63 // pred_check_branch
          %443 = sbr.rel (%p441) target = $region76
        $region75: #{bert_binary_classifier.1} parent=63 // pred_region
          %445 = dma.done [#allocation5], 6144
        $region76: #{bert_binary_classifier.1} parent=63 // pred_fallthru
          _
        // Predicated region
        $region77: #{bert_binary_classifier.1} parent=63 // pred_check
          %p446 = pneg %p178
        $region78: #{bert_binary_classifier.1} parent=63 // pred_check_branch
          %448 = sbr.rel (%p446) target = $region80
        $region79: #{bert_binary_classifier.1} parent=63 // pred_region
          %450 = dma.done [#allocation8], 2048
        $region80: #{bert_binary_classifier.1} parent=63 // pred_fallthru
          _
        // Predicated region
        $region81: #{bert_binary_classifier.1} parent=63 // pred_check
          %p451 = pneg %p199
        $region82: #{bert_binary_classifier.1} parent=63 // pred_check_branch
          %453 = sbr.rel (%p451) target = $region84
        $region83: #{bert_binary_classifier.1} parent=63 // pred_region
          %455 = dma.done [#allocation8], 8192
        $region84: #{bert_binary_classifier.1} parent=63 // pred_fallthru
          _
        // Predicated region
        $region85: #{bert_binary_classifier.1} parent=63 // pred_check
          %p456 = pneg %p241
        $region86: #{bert_binary_classifier.1} parent=63 // pred_check_branch
          %458 = sbr.rel (%p456) target = $region88
        $region87: #{bert_binary_classifier.1} parent=63 // pred_region
          %460 = dma.done [#allocation11], 8192
        $region88: #{bert_binary_classifier.1} parent=63 // pred_fallthru
          _
        // Predicated region
        $region89: #{bert_binary_classifier.1} parent=63 // pred_check
          %p461 = pneg %p262
        $region90: #{bert_binary_classifier.1} parent=63 // pred_check_branch
          %463 = sbr.rel (%p461) target = $region92
        $region91: #{bert_binary_classifier.1} parent=63 // pred_region
          %465 = dma.done [#allocation11], 1024
        $region92: #{bert_binary_classifier.1} parent=63 // pred_fallthru
          _
        %p466 = scmp.lt.s32.totalorder %s26, 1
        %s467 = scalar_select %p466, %s26, 1
        %s468 = smul.addr %s467, 8
        %s469 = scalar_lea.vmem %s0, %s468
        %p470 = pneg %p47
        %p471 = pneg %p44
        %p472 = scmp.lt.s32.totalorder %s26, 1
        %s473 = scalar_select %p472, %s26, 1
        %s474 = scalar_lea.vmem %s1, %s473
        %p475 = pneg %p73
        %p476 = pneg %p70
        %p477 = pneg %p94
        %p478 = pneg %p91
        %p479 = pneg %p115
        %p480 = pneg %p112
        %p481 = pneg %p136
        %p482 = pneg %p133
        %p483 = pneg %p157
        %p484 = pneg %p154
        %p485 = pneg %p178
        %p486 = pneg %p175
        %p487 = pneg %p199
        %p488 = pneg %p196
        %p489 = pneg %p220
        %p490 = pneg %p217
        %p491 = pneg %p241
        %p492 = pneg %p238
        %p493 = pneg %p262
        %p494 = pneg %p259
        %p495 = pneg %p288
        %p496 = pneg %p285
        %p497 = scmp.lt.s32.totalorder %s26, 1
        %s498 = scalar_select %p497, %s26, 1
        %s499 = scalar_lea.vmem %s11, %s498
        %p500 = scmp.lt.s32.totalorder %s26, 1
        %s501 = scalar_select %p500, %s26, 1
        %s502 = smul.addr %s501, 8
        %s503 = scalar_lea.vmem %s0, %s502
        %p504 = scmp.lt.s32.totalorder %s26, 1
        %s505 = scalar_select %p504, %s26, 1
        %s506 = scalar_lea.vmem %s1, %s505
        %p507 = scmp.lt.s32.totalorder %s26, 1
        %s508 = scalar_select %p507, %s26, 1
        %s509 = scalar_lea.vmem %s11, %s508
        %v511 = vld [vmem:[%s503] sm:$0xff]
        %v512 = vlaneseq
        %v513 = vand.u32 %v512, 127
        %514 = vset.pattern.permute.xlu0 0
        %515 = vperm.xlu0 %514, %v511
        %v516 = vpop.permute.xlu0 %515
        %vm517 = vcmp.eq.s32.totalorder %v516, %v513
        %v518 = vsel %vm517, 1, 0
        %v519 = vcvt.s32.f32 %v518
        %v520 = vld [vmem:[#allocation2] sm:$0xff]
        %v521 = vld [vmem:[#allocation2 + $0x8] sm:$0xff]
        %v522 = vld [vmem:[#allocation2 + $0x10] sm:$0xff]
        %v523 = vld [vmem:[#allocation2 + $0x18] sm:$0xff]
        %v524 = vld [vmem:[#allocation2 + $0x20] sm:$0xff]
        %v525 = vld [vmem:[#allocation2 + $0x28] sm:$0xff]
        %v526 = vld [vmem:[#allocation2 + $0x30] sm:$0xff]
        %v527 = vld [vmem:[#allocation2 + $0x38] sm:$0xff]
        %v528 = vld [vmem:[#allocation4] sm:$0xff]
        %vm529 = vcmask 523264
        %v531 = vsel %vm529, %v519, 0
        %533 = vmatpush.msra.mxu0 0.0
        %534 = vmatpush.msra.mxu0 0.0
        %535 = vmatpush.msra.mxu0 0.0
        %536 = vmatpush.msra.mxu0 0.0
        %537 = vmatpush.msra.mxu0 0.0
        %538 = vmatpush.msra.mxu0 0.0
        %539 = vmatpush.msra.mxu0 0.0
        %540 = vmatpush.msra.mxu0 0.0
        %541 = vmatpush.msra.mxu0 %v527
        %542 = vmatpush.msra.mxu0 %v526
        %543 = vmatpush.msra.mxu0 %v525
        %544 = vmatpush.msra.mxu0 %v524
        %545 = vmatpush.msra.mxu0 %v523
        %546 = vmatpush.msra.mxu0 %v522
        %547 = vmatpush.msra.mxu0 %v521
        %548 = vmatpush.msra.mxu0 %v520
        %549 = vmatmul.f32.gmra.mxu0 %v531
        %v550 = vpop.f32.mrf.mxu0
        %v551 = vadd.f32 %v528, %v550
        %552 = vdwg.mxu0
        %v553 = vld [vmem:[#allocation4 + $0x10] sm:$0x1]
        %v554 = vld [vmem:[#allocation4 + $0x11] sm:$0x1]
        %555 = vadd.xlane.f32.xlu0 %v551
        %v556 = vpop.xlane.xlu0 %555
        %v557 = vrcp.pop 128.0
        %v558 = vmul.f32 128.0, %v557
        %v559 = vsub.f32 1.0, %v558
        %v560 = vmul.f32 %v557, %v559
        %v561 = vadd.f32 %v557, %v560
        %vm562 = vweird.f32 %v557
        %v563 = vsel %vm562, %v557, %v561
        %v564 = vmul.f32 %v556, %v563
        %v565 = vsub.f32 %v551, %v564
        %v566 = vmul.f32 %v565, %v565
        %567 = vadd.xlane.f32.xlu0 %v566
        %v568 = vpop.xlane.xlu0 %567
        %v569 = vmul.f32 %v568, %v563
        %v570 = vadd.f32 %v569, 1e-12
        %v571 = vrsqrt.pop %v570
        %v572 = vmul.f32 %v571, %v570
        %v573 = vmul.f32 %v572, %v571
        %v574 = vmul.f32 0.5, %v573
        %v575 = vsub.f32 1.5, %v574
        %v576 = vmul.f32 %v571, %v575
        %vm577 = vweird.f32 %v570
        %vm578 = vweird.f32 %v571
        %vm579 = vmor %vm577, %vm578
        %v580 = vsel %vm579, %v571, %v576
        %v581 = vmul.f32 %v565, %v580
        %v582 = vperm.slane %v553, 0
        %v583 = vmul.f32 %v581, %v582
        %v584 = vperm.slane %v554, 0
        %v585 = vadd.f32 %v583, %v584
        %v586 = vld [vmem:[%s506] sm:$0x1]
        %v587 = vsub.f32 1.0, %v586
        %v588 = vmul.f32 %v587, -10000.0
        %v589 = vld [vmem:[#allocation6] sm:$0xff]
        %v590 = vld [vmem:[#allocation6 + $0x8] sm:$0xf]
        %v591 = vld [vmem:[#allocation6 + $0xc] sm:$0xff]
        %v592 = vld [vmem:[#allocation6 + $0x14] sm:$0xf]
        %v593 = vld [vmem:[#allocation6 + $0x18] sm:$0xff]
        %v594 = vld [vmem:[#allocation6 + $0x20] sm:$0xf]
        %v595 = vld [vmem:[#allocation6 + $0x24] sm:$0xff]
        %v596 = vld [vmem:[#allocation6 + $0x2c] sm:$0xf]
        %v597 = vld [vmem:[#allocation6 + $0x30] sm:$0xff]
        %v598 = vld [vmem:[#allocation6 + $0x38] sm:$0xf]
        %v599 = vld [vmem:[#allocation6 + $0x3c] sm:$0xff]
        %v600 = vld [vmem:[#allocation6 + $0x44] sm:$0xf]
        %v601 = vld [vmem:[#allocation6 + $0x48] sm:$0xff]
        %v602 = vld [vmem:[#allocation6 + $0x50] sm:$0xf]
        %v603 = vld [vmem:[#allocation6 + $0x54] sm:$0xff]
        %v604 = vld [vmem:[#allocation6 + $0x5c] sm:$0xf]
        %v605 = vld [vmem:[#allocation6 + $0x60] sm:$0xff]
        %v606 = vld [vmem:[#allocation6 + $0x68] sm:$0xf]
        %v607 = vld [vmem:[#allocation6 + $0x6c] sm:$0xff]
        %v608 = vld [vmem:[#allocation6 + $0x74] sm:$0xf]
        %v609 = vld [vmem:[#allocation6 + $0x78] sm:$0xff]
        %v610 = vld [vmem:[#allocation6 + $0x80] sm:$0xf]
        %v611 = vld [vmem:[#allocation6 + $0x84] sm:$0xff]
        %v612 = vld [vmem:[#allocation6 + $0x8c] sm:$0xf]
        %v613 = vld [vmem:[#allocation6 + $0x90] sm:$0xff]
        %v614 = vld [vmem:[#allocation6 + $0x98] sm:$0xf]
        %v615 = vld [vmem:[#allocation6 + $0x9c] sm:$0xff]
        %v616 = vld [vmem:[#allocation6 + $0xa4] sm:$0xf]
        %v617 = vld [vmem:[#allocation6 + $0xa8] sm:$0xff]
        %v618 = vld [vmem:[#allocation6 + $0xb0] sm:$0xf]
        %v619 = vld [vmem:[#allocation6 + $0xb4] sm:$0xff]
        %v620 = vld [vmem:[#allocation6 + $0xbc] sm:$0xf]
        %v621 = vpack.c.bf16 %v585, %v585
        %v622 = vld [vmem:[%s5] sm:$0x7]
        %v624 = vperm.slane %v622, 0
        %v625 = vperm.slane %v622, 1
        %v626 = vperm.slane %v622, 2
        %v662 = vunpack.c.l.b16 %v589
        %v663 = vunpack.c.h.b16 %v589
        %v664 = vunpack.c.l.b16 %v590
        %v665 = vunpack.c.l.b16 %v591
        %v666 = vunpack.c.h.b16 %v591
        %v667 = vunpack.c.l.b16 %v592
        %v668 = vunpack.c.l.b16 %v593
        %v669 = vunpack.c.h.b16 %v593
        %v670 = vunpack.c.l.b16 %v594
        %v671 = vunpack.c.l.b16 %v595
        %v672 = vunpack.c.h.b16 %v595
        %v673 = vunpack.c.l.b16 %v596
        %v674 = vunpack.c.l.b16 %v597
        %v675 = vunpack.c.h.b16 %v597
        %v676 = vunpack.c.l.b16 %v598
        %v677 = vunpack.c.l.b16 %v599
        %v678 = vunpack.c.h.b16 %v599
        %v679 = vunpack.c.l.b16 %v600
        %v680 = vunpack.c.l.b16 %v601
        %v681 = vunpack.c.h.b16 %v601
        %v682 = vunpack.c.l.b16 %v602
        %v683 = vunpack.c.l.b16 %v603
        %v684 = vunpack.c.h.b16 %v603
        %v685 = vunpack.c.l.b16 %v604
        %v686 = vunpack.c.l.b16 %v605
        %v687 = vunpack.c.h.b16 %v605
        %v688 = vunpack.c.l.b16 %v606
        %v689 = vunpack.c.l.b16 %v607
        %v690 = vunpack.c.h.b16 %v607
        %v691 = vunpack.c.l.b16 %v608
        %v692 = vunpack.c.l.b16 %v609
        %v693 = vunpack.c.h.b16 %v609
        %v694 = vunpack.c.l.b16 %v610
        %v695 = vunpack.c.l.b16 %v611
        %v696 = vunpack.c.h.b16 %v611
        %v697 = vunpack.c.l.b16 %v612
        %v698 = vunpack.c.l.b16 %v613
        %v699 = vunpack.c.h.b16 %v613
        %v700 = vunpack.c.l.b16 %v614
        %v701 = vunpack.c.l.b16 %v615
        %v702 = vunpack.c.h.b16 %v615
        %v703 = vunpack.c.l.b16 %v616
        %v704 = vunpack.c.l.b16 %v617
        %v705 = vunpack.c.h.b16 %v617
        %v706 = vunpack.c.l.b16 %v618
        %v707 = vunpack.c.l.b16 %v619
        %v708 = vunpack.c.h.b16 %v619
        %v709 = vunpack.c.l.b16 %v620
        %v710 = vpack.c.b16 %v665, %v662
        %v711 = vpack.c.b16 %v666, %v663
        %v712 = vpack.c.b16 %v667, %v664
        %v713 = vpack.c.b16 %v671, %v668
        %v714 = vpack.c.b16 %v672, %v669
        %v715 = vpack.c.b16 %v673, %v670
        %v716 = vpack.c.b16 %v677, %v674
        %v717 = vpack.c.b16 %v678, %v675
        %v718 = vpack.c.b16 %v679, %v676
        %v719 = vpack.c.b16 %v683, %v680
        %v720 = vpack.c.b16 %v684, %v681
        %v721 = vpack.c.b16 %v685, %v682
        %v722 = vpack.c.b16 %v689, %v686
        %v723 = vpack.c.b16 %v690, %v687
        %v724 = vpack.c.b16 %v691, %v688
        %v725 = vpack.c.b16 %v695, %v692
        %v726 = vpack.c.b16 %v696, %v693
        %v727 = vpack.c.b16 %v697, %v694
        %v728 = vpack.c.b16 %v701, %v698
        %v729 = vpack.c.b16 %v702, %v699
        %v730 = vpack.c.b16 %v703, %v700
        %v731 = vpack.c.b16 %v707, %v704
        %v732 = vpack.c.b16 %v708, %v705
        %v733 = vpack.c.b16 %v709, %v706
        %758 = vmatpush.bf16.msra.mxu0 %v731
        %759 = vmatpush.bf16.msra.mxu0 %v728
        %760 = vmatpush.bf16.msra.mxu0 %v725
        %761 = vmatpush.bf16.msra.mxu0 %v722
        %762 = vmatpush.bf16.msra.mxu0 %v719
        %763 = vmatpush.bf16.msra.mxu0 %v716
        %764 = vmatpush.bf16.msra.mxu0 %v713
        %765 = vmatpush.bf16.msra.mxu0 %v710
        %766 = vmatmul.bf16.gmra.mxu0 %v621
        %v767 = vpop.f32.mrf.mxu0
        %v768 = vadd.f32 %v624, %v767
        %v769 = vpop.f32.mrf.mxu0
        %770 = vdwg.mxu0
        %771 = vmatpush.bf16.msra.mxu0 %v732
        %772 = vmatpush.bf16.msra.mxu0 %v729
        %773 = vmatpush.bf16.msra.mxu0 %v726
        %774 = vmatpush.bf16.msra.mxu0 %v723
        %775 = vmatpush.bf16.msra.mxu0 %v720
        %776 = vmatpush.bf16.msra.mxu0 %v717
        %777 = vmatpush.bf16.msra.mxu0 %v714
        %778 = vmatpush.bf16.msra.mxu0 %v711
        %779 = vmatmul.bf16.gmra.mxu0 %v621
        %v780 = vpop.f32.mrf.mxu0
        %v781 = vadd.f32 %v625, %v780
        %v782 = vpop.f32.mrf.mxu0
        %783 = vdwg.mxu0
        %784 = vmatpush.bf16.msra.mxu0 %v733
        %785 = vmatpush.bf16.msra.mxu0 %v730
        %786 = vmatpush.bf16.msra.mxu0 %v727
        %787 = vmatpush.bf16.msra.mxu0 %v724
        %788 = vmatpush.bf16.msra.mxu0 %v721
        %789 = vmatpush.bf16.msra.mxu0 %v718
        %790 = vmatpush.bf16.msra.mxu0 %v715
        %791 = vmatpush.bf16.msra.mxu0 %v712
        %792 = vmatmul.bf16.gmra.mxu0 %v621
        %v793 = vpop.f32.mrf.mxu0
        %v794 = vadd.f32 %v626, %v793
        %v795 = vpop.f32.mrf.mxu0
        %796 = vdwg.mxu0
        %v797 = vpack.c.bf16 %v781, %v768
        %v798 = vpack.c.bf16 %v794, %v794
        %800 = vrot.lane.b32.xlu0 %v797, 96
        %v801 = vpop.permute.xlu0 %800
        %802 = vrot.lane.b32.xlu0 %v797, 64
        %v803 = vpop.permute.xlu0 %802
        %804 = vrot.lane.b32.xlu0 %v797, 32
        %v805 = vpop.permute.xlu0 %804
        %v806 = vrot.slane %v797, 4
        %v807 = vrot.slane %v801, 4
        %v808 = vrot.slane %v803, 4
        %v809 = vrot.slane %v805, 4
        %811 = vrot.lane.b32.xlu0 %v798, 96
        %v812 = vpop.permute.xlu0 %811
        %813 = vrot.lane.b32.xlu0 %v798, 64
        %v814 = vpop.permute.xlu0 %813
        %815 = vrot.lane.b32.xlu0 %v798, 32
        %v816 = vpop.permute.xlu0 %815
        %vm817 = vcmask 261120
        %v819 = vsel %vm817, %v797, 0
        %v822 = vsel %vm817, %v806, 0
        %824 = vmatpush.bf16.xpose.msra.mxu0 0
        %825 = vmatpush.bf16.xpose.msra.mxu0 0
        %826 = vmatpush.bf16.xpose.msra.mxu0 0
        %827 = vmatpush.bf16.xpose.msra.mxu0 0
        %828 = vmatpush.bf16.xpose.msra.mxu0 0
        %829 = vmatpush.bf16.xpose.msra.mxu0 0
        %830 = vmatpush.bf16.xpose.msra.mxu0 0
        %831 = vmatpush.bf16.xpose.msra.mxu0 %v822
        %832 = vmatmul.bf16.gmra.mxu0 %v819
        %v833 = vpop.f32.mrf.mxu0
        %v834 = vadd.f32 0.0, %v833
        %v835 = vpop.f32.mrf.mxu0
        %836 = vdwg.mxu0
        %v838 = vsel %vm817, %v801, 0
        %v841 = vsel %vm817, %v807, 0
        %843 = vmatpush.bf16.xpose.msra.mxu0 0
        %844 = vmatpush.bf16.xpose.msra.mxu0 0
        %845 = vmatpush.bf16.xpose.msra.mxu0 0
        %846 = vmatpush.bf16.xpose.msra.mxu0 0
        %847 = vmatpush.bf16.xpose.msra.mxu0 0
        %848 = vmatpush.bf16.xpose.msra.mxu0 0
        %849 = vmatpush.bf16.xpose.msra.mxu0 0
        %850 = vmatpush.bf16.xpose.msra.mxu0 %v841
        %851 = vmatmul.bf16.gmra.mxu0 %v838
        %v852 = vpop.f32.mrf.mxu0
        %v853 = vadd.f32 0.0, %v852
        %v854 = vpop.f32.mrf.mxu0
        %855 = vdwg.mxu0
        %v857 = vsel %vm817, %v803, 0
        %v860 = vsel %vm817, %v808, 0
        %862 = vmatpush.bf16.xpose.msra.mxu0 0
        %863 = vmatpush.bf16.xpose.msra.mxu0 0
        %864 = vmatpush.bf16.xpose.msra.mxu0 0
        %865 = vmatpush.bf16.xpose.msra.mxu0 0
        %866 = vmatpush.bf16.xpose.msra.mxu0 0
        %867 = vmatpush.bf16.xpose.msra.mxu0 0
        %868 = vmatpush.bf16.xpose.msra.mxu0 0
        %869 = vmatpush.bf16.xpose.msra.mxu0 %v860
        %870 = vmatmul.bf16.gmra.mxu0 %v857
        %v871 = vpop.f32.mrf.mxu0
        %v872 = vadd.f32 0.0, %v871
        %v873 = vpop.f32.mrf.mxu0
        %874 = vdwg.mxu0
        %v876 = vsel %vm817, %v805, 0
        %v879 = vsel %vm817, %v809, 0
        %881 = vmatpush.bf16.xpose.msra.mxu0 0
        %882 = vmatpush.bf16.xpose.msra.mxu0 0
        %883 = vmatpush.bf16.xpose.msra.mxu0 0
        %884 = vmatpush.bf16.xpose.msra.mxu0 0
        %885 = vmatpush.bf16.xpose.msra.mxu0 0
        %886 = vmatpush.bf16.xpose.msra.mxu0 0
        %887 = vmatpush.bf16.xpose.msra.mxu0 0
        %888 = vmatpush.bf16.xpose.msra.mxu0 %v879
        %889 = vmatmul.bf16.gmra.mxu0 %v876
        %v890 = vpop.f32.mrf.mxu0
        %v891 = vadd.f32 0.0, %v890
        %v892 = vpop.f32.mrf.mxu0
        %893 = vdwg.mxu0
        %v894 = vmul.f32 %v834, 0.17677669
        %v895 = vmul.f32 %v853, 0.17677669
        %v896 = vmul.f32 %v872, 0.17677669
        %v897 = vmul.f32 %v891, 0.17677669
        %v899 = vperm.slane %v588, 0
        %v901 = vadd.f32 %v894, %v899
        %v902 = vadd.f32 %v895, %v899
        %v903 = vadd.f32 %v896, %v899
        %v904 = vadd.f32 %v897, %v899
        %vm905 = vcmask 64512
        %v906 = vsel %vm905, %v901, -inf
        %907 = vmax.xlane.f32.xlu0 %v906
        %v908 = vpop.xlane.xlu0 %907
        %v909 = vsel %vm905, %v902, -inf
        %910 = vmax.xlane.f32.xlu0 %v909
        %v911 = vpop.xlane.xlu0 %910
        %v912 = vsel %vm905, %v903, -inf
        %913 = vmax.xlane.f32.xlu0 %v912
        %v914 = vpop.xlane.xlu0 %913
        %v915 = vsel %vm905, %v904, -inf
        %916 = vmax.xlane.f32.xlu0 %v915
        %v917 = vpop.xlane.xlu0 %916
        %v918 = vsub.f32 %v901, %v908
        %v919 = vsub.f32 %v902, %v911
        %v920 = vsub.f32 %v903, %v914
        %v921 = vsub.f32 %v904, %v917
        %v922 = vmul.f32 %v918, 1.442695
        %v923 = vpow.pop %v922
        %v924 = vmul.f32 %v919, 1.442695
        %v925 = vpow.pop %v924
        %v926 = vmul.f32 %v920, 1.442695
        %v927 = vpow.pop %v926
        %v928 = vmul.f32 %v921, 1.442695
        %v929 = vpow.pop %v928
        %v930 = vsel %vm905, %v923, 0.0
        %931 = vadd.xlane.f32.xlu0 %v930
        %v932 = vpop.xlane.xlu0 %931
        %v933 = vsel %vm905, %v925, 0.0
        %934 = vadd.xlane.f32.xlu0 %v933
        %v935 = vpop.xlane.xlu0 %934
        %v936 = vsel %vm905, %v927, 0.0
        %937 = vadd.xlane.f32.xlu0 %v936
        %v938 = vpop.xlane.xlu0 %937
        %v939 = vsel %vm905, %v929, 0.0
        %940 = vadd.xlane.f32.xlu0 %v939
        %v941 = vpop.xlane.xlu0 %940
        %v942 = vrcp.pop %v932
        %v943 = vmul.f32 %v932, %v942
        %v944 = vsub.f32 1.0, %v943
        %v945 = vmul.f32 %v942, %v944
        %v946 = vadd.f32 %v942, %v945
        %vm947 = vweird.f32 %v932
        %vm948 = vweird.f32 %v942
        %vm949 = vmor %vm947, %vm948
        %v950 = vsel %vm949, %v942, %v946
        %v951 = vand.u32 2147483647, %v932
        %vm952 = vcmp.eq.f32.partialorder %v951, 8.507059e+37
        %v953 = vand.u32 %v932, 2147483648
        %v954 = vor.u32 1.1754944e-38, %v953
        %v955 = vsel %vm952, %v954, %v950
        %v956 = vmul.f32 %v923, %v955
        %v957 = vrcp.pop %v935
        %v958 = vmul.f32 %v935, %v957
        %v959 = vsub.f32 1.0, %v958
        %v960 = vmul.f32 %v957, %v959
        %v961 = vadd.f32 %v957, %v960
        %vm962 = vweird.f32 %v935
        %vm963 = vweird.f32 %v957
        %vm964 = vmor %vm962, %vm963
        %v965 = vsel %vm964, %v957, %v961
        %v966 = vand.u32 2147483647, %v935
        %vm967 = vcmp.eq.f32.partialorder %v966, 8.507059e+37
        %v968 = vand.u32 %v935, 2147483648
        %v969 = vor.u32 1.1754944e-38, %v968
        %v970 = vsel %vm967, %v969, %v965
        %v971 = vmul.f32 %v925, %v970
        %v972 = vrcp.pop %v938
        %v973 = vmul.f32 %v938, %v972
        %v974 = vsub.f32 1.0, %v973
        %v975 = vmul.f32 %v972, %v974
        %v976 = vadd.f32 %v972, %v975
        %vm977 = vweird.f32 %v938
        %vm978 = vweird.f32 %v972
        %vm979 = vmor %vm977, %vm978
        %v980 = vsel %vm979, %v972, %v976
        %v981 = vand.u32 2147483647, %v938
        %vm982 = vcmp.eq.f32.partialorder %v981, 8.507059e+37
        %v983 = vand.u32 %v938, 2147483648
        %v984 = vor.u32 1.1754944e-38, %v983
        %v985 = vsel %vm982, %v984, %v980
        %v986 = vmul.f32 %v927, %v985
        %v987 = vrcp.pop %v941
        %v988 = vmul.f32 %v941, %v987
        %v989 = vsub.f32 1.0, %v988
        %v990 = vmul.f32 %v987, %v989
        %v991 = vadd.f32 %v987, %v990
        %vm992 = vweird.f32 %v941
        %vm993 = vweird.f32 %v987
        %vm994 = vmor %vm992, %vm993
        %v995 = vsel %vm994, %v987, %v991
        %v996 = vand.u32 2147483647, %v941
        %vm997 = vcmp.eq.f32.partialorder %v996, 8.507059e+37
        %v998 = vand.u32 %v941, 2147483648
        %v999 = vor.u32 1.1754944e-38, %v998
        %v1000 = vsel %vm997, %v999, %v995
        %v1001 = vmul.f32 %v929, %v1000
        %v1002 = vpack.c.bf16 %v956, %v956
        %v1003 = vpack.c.bf16 %v971, %v971
        %v1004 = vpack.c.bf16 %v986, %v986
        %v1005 = vpack.c.bf16 %v1001, %v1001
        %v1007 = vsel %vm905, %v1002, 0
        %vm1009 = vcmask 1043456
        %v1011 = vsel %vm1009, %v798, 0
        %1013 = vmatpush.bf16.msra.mxu0 0
        %1014 = vmatpush.bf16.msra.mxu0 0
        %1015 = vmatpush.bf16.msra.mxu0 0
        %1016 = vmatpush.bf16.msra.mxu0 0
        %1017 = vmatpush.bf16.msra.mxu0 0
        %1018 = vmatpush.bf16.msra.mxu0 0
        %1019 = vmatpush.bf16.msra.mxu0 0
        %1020 = vmatpush.bf16.msra.mxu0 %v1011
        %1021 = vmatmul.bf16.gmra.mxu0 %v1007
        %v1022 = vpop.f32.mrf.mxu0
        %v1023 = vadd.f32 0.0, %v1022
        %v1024 = vpop.f32.mrf.mxu0
        %1025 = vdwg.mxu0
        %v1027 = vsel %vm905, %v1003, 0
        %v1030 = vsel %vm1009, %v812, 0
        %1032 = vmatpush.bf16.msra.mxu0 0
        %1033 = vmatpush.bf16.msra.mxu0 0
        %1034 = vmatpush.bf16.msra.mxu0 0
        %1035 = vmatpush.bf16.msra.mxu0 0
        %1036 = vmatpush.bf16.msra.mxu0 0
        %1037 = vmatpush.bf16.msra.mxu0 0
        %1038 = vmatpush.bf16.msra.mxu0 0
        %1039 = vmatpush.bf16.msra.mxu0 %v1030
        %1040 = vmatmul.bf16.gmra.mxu0 %v1027
        %v1041 = vpop.f32.mrf.mxu0
        %v1042 = vadd.f32 0.0, %v1041
        %v1043 = vpop.f32.mrf.mxu0
        %1044 = vdwg.mxu0
        %v1046 = vsel %vm905, %v1004, 0
        %v1049 = vsel %vm1009, %v814, 0
        %1051 = vmatpush.bf16.msra.mxu0 0
        %1052 = vmatpush.bf16.msra.mxu0 0
        %1053 = vmatpush.bf16.msra.mxu0 0
        %1054 = vmatpush.bf16.msra.mxu0 0
        %1055 = vmatpush.bf16.msra.mxu0 0
        %1056 = vmatpush.bf16.msra.mxu0 0
        %1057 = vmatpush.bf16.msra.mxu0 0
        %1058 = vmatpush.bf16.msra.mxu0 %v1049
        %1059 = vmatmul.bf16.gmra.mxu0 %v1046
        %v1060 = vpop.f32.mrf.mxu0
        %v1061 = vadd.f32 0.0, %v1060
        %v1062 = vpop.f32.mrf.mxu0
        %1063 = vdwg.mxu0
        %v1065 = vsel %vm905, %v1005, 0
        %v1068 = vsel %vm1009, %v816, 0
        %1070 = vmatpush.bf16.msra.mxu0 0
        %1071 = vmatpush.bf16.msra.mxu0 0
        %1072 = vmatpush.bf16.msra.mxu0 0
        %1073 = vmatpush.bf16.msra.mxu0 0
        %1074 = vmatpush.bf16.msra.mxu0 0
        %1075 = vmatpush.bf16.msra.mxu0 0
        %1076 = vmatpush.bf16.msra.mxu0 0
        %1077 = vmatpush.bf16.msra.mxu0 %v1068
        %1078 = vmatmul.bf16.gmra.mxu0 %v1065
        %v1079 = vpop.f32.mrf.mxu0
        %v1080 = vadd.f32 0.0, %v1079
        %v1081 = vpop.f32.mrf.mxu0
        %1082 = vdwg.mxu0
        %1084 = vrot.lane.b32.xlu0 %v1042, 32
        %v1085 = vpop.permute.xlu0 %1084
        %1088 = vrot.lane.b32.xlu0 %v1061, 64
        %v1089 = vpop.permute.xlu0 %1088
        %1092 = vrot.lane.b32.xlu0 %v1080, 96
        %v1093 = vpop.permute.xlu0 %1092
        %v1095 = vsel %vm817, %v1023, %v1085
        %v1096 = vsel %vm529, %v1095, %v1089
        %vm1097 = vcmask 785408
        %v1098 = vsel %vm1097, %v1096, %v1093
        %v1099 = vld [vmem:[#allocation7] sm:$0xf]
        %v1100 = vld [vmem:[#allocation7 + $0x4] sm:$0xf]
        %v1101 = vld [vmem:[#allocation7 + $0x8] sm:$0xf]
        %v1102 = vld [vmem:[#allocation7 + $0xc] sm:$0xf]
        %v1103 = vld [vmem:[#allocation7 + $0x10] sm:$0xf]
        %v1104 = vld [vmem:[#allocation7 + $0x14] sm:$0xf]
        %v1105 = vld [vmem:[#allocation7 + $0x18] sm:$0xf]
        %v1106 = vld [vmem:[#allocation7 + $0x1c] sm:$0xf]
        %v1107 = vld [vmem:[#allocation7 + $0x20] sm:$0xf]
        %v1108 = vld [vmem:[#allocation7 + $0x24] sm:$0xf]
        %v1109 = vld [vmem:[#allocation7 + $0x28] sm:$0xf]
        %v1110 = vld [vmem:[#allocation7 + $0x2c] sm:$0xf]
        %v1111 = vld [vmem:[#allocation7 + $0x30] sm:$0xf]
        %v1112 = vld [vmem:[#allocation7 + $0x34] sm:$0xf]
        %v1113 = vld [vmem:[#allocation7 + $0x38] sm:$0xf]
        %v1114 = vld [vmem:[#allocation7 + $0x3c] sm:$0xf]
        %v1115 = vpack.c.bf16 %v1098, %v1098
        %v1116 = vld [vmem:[#allocation4 + $0x12] sm:$0x1]
        %v1117 = vperm.slane %v1116, 0
        %v1134 = vunpack.c.l.b16 %v1099
        %v1135 = vunpack.c.l.b16 %v1100
        %v1136 = vunpack.c.l.b16 %v1101
        %v1137 = vunpack.c.l.b16 %v1102
        %v1138 = vunpack.c.l.b16 %v1103
        %v1139 = vunpack.c.l.b16 %v1104
        %v1140 = vunpack.c.l.b16 %v1105
        %v1141 = vunpack.c.l.b16 %v1106
        %v1142 = vunpack.c.l.b16 %v1107
        %v1143 = vunpack.c.l.b16 %v1108
        %v1144 = vunpack.c.l.b16 %v1109
        %v1145 = vunpack.c.l.b16 %v1110
        %v1146 = vunpack.c.l.b16 %v1111
        %v1147 = vunpack.c.l.b16 %v1112
        %v1148 = vunpack.c.l.b16 %v1113
        %v1149 = vunpack.c.l.b16 %v1114
        %v1150 = vpack.c.b16 %v1135, %v1134
        %v1151 = vpack.c.b16 %v1137, %v1136
        %v1152 = vpack.c.b16 %v1139, %v1138
        %v1153 = vpack.c.b16 %v1141, %v1140
        %v1154 = vpack.c.b16 %v1143, %v1142
        %v1155 = vpack.c.b16 %v1145, %v1144
        %v1156 = vpack.c.b16 %v1147, %v1146
        %v1157 = vpack.c.b16 %v1149, %v1148
        %1166 = vmatpush.bf16.msra.mxu0 %v1157
        %1167 = vmatpush.bf16.msra.mxu0 %v1156
        %1168 = vmatpush.bf16.msra.mxu0 %v1155
        %1169 = vmatpush.bf16.msra.mxu0 %v1154
        %1170 = vmatpush.bf16.msra.mxu0 %v1153
        %1171 = vmatpush.bf16.msra.mxu0 %v1152
        %1172 = vmatpush.bf16.msra.mxu0 %v1151
        %1173 = vmatpush.bf16.msra.mxu0 %v1150
        %1174 = vmatmul.bf16.gmra.mxu0 %v1115
        %v1175 = vpop.f32.mrf.mxu0
        %v1176 = vadd.f32 %v1117, %v1175
        %v1177 = vpop.f32.mrf.mxu0
        %1178 = vdwg.mxu0
        %v1179 = vadd.f32 %v1176, %v585
        %v1180 = vld [vmem:[#allocation4 + $0x13] sm:$0x1]
        %v1181 = vld [vmem:[#allocation4 + $0x14] sm:$0x1]
        %1182 = vadd.xlane.f32.xlu0 %v1179
        %v1183 = vpop.xlane.xlu0 %1182
        %v1184 = vmul.f32 %v1183, %v563
        %v1185 = vsub.f32 %v1179, %v1184
        %v1186 = vmul.f32 %v1185, %v1185
        %1187 = vadd.xlane.f32.xlu0 %v1186
        %v1188 = vpop.xlane.xlu0 %1187
        %v1189 = vmul.f32 %v1188, %v563
        %v1190 = vadd.f32 %v1189, 1e-12
        %v1191 = vrsqrt.pop %v1190
        %v1192 = vmul.f32 %v1191, %v1190
        %v1193 = vmul.f32 %v1192, %v1191
        %v1194 = vmul.f32 0.5, %v1193
        %v1195 = vsub.f32 1.5, %v1194
        %v1196 = vmul.f32 %v1191, %v1195
        %vm1197 = vweird.f32 %v1190
        %vm1198 = vweird.f32 %v1191
        %vm1199 = vmor %vm1197, %vm1198
        %v1200 = vsel %vm1199, %v1191, %v1196
        %v1201 = vmul.f32 %v1185, %v1200
        %v1202 = vperm.slane %v1180, 0
        %v1203 = vmul.f32 %v1201, %v1202
        %v1204 = vperm.slane %v1181, 0
        %v1205 = vadd.f32 %v1203, %v1204
        %v1206 = vld [vmem:[#allocation9] sm:$0xff]
        %v1207 = vld [vmem:[#allocation9 + $0x8] sm:$0xff]
        %v1208 = vld [vmem:[#allocation9 + $0x10] sm:$0xff]
        %v1209 = vld [vmem:[#allocation9 + $0x18] sm:$0xff]
        %v1210 = vld [vmem:[#allocation9 + $0x20] sm:$0xff]
        %v1211 = vld [vmem:[#allocation9 + $0x28] sm:$0xff]
        %v1212 = vld [vmem:[#allocation9 + $0x30] sm:$0xff]
        %v1213 = vld [vmem:[#allocation9 + $0x38] sm:$0xff]
        %v1214 = vld [vmem:[#allocation9 + $0x40] sm:$0xff]
        %v1215 = vld [vmem:[#allocation9 + $0x48] sm:$0xff]
        %v1216 = vld [vmem:[#allocation9 + $0x50] sm:$0xff]
        %v1217 = vld [vmem:[#allocation9 + $0x58] sm:$0xff]
        %v1218 = vld [vmem:[#allocation9 + $0x60] sm:$0xff]
        %v1219 = vld [vmem:[#allocation9 + $0x68] sm:$0xff]
        %v1220 = vld [vmem:[#allocation9 + $0x70] sm:$0xff]
        %v1221 = vld [vmem:[#allocation9 + $0x78] sm:$0xff]
        %v1222 = vld [vmem:[#allocation9 + $0x80] sm:$0xff]
        %v1223 = vld [vmem:[#allocation9 + $0x88] sm:$0xff]
        %v1224 = vld [vmem:[#allocation9 + $0x90] sm:$0xff]
        %v1225 = vld [vmem:[#allocation9 + $0x98] sm:$0xff]
        %v1226 = vld [vmem:[#allocation9 + $0xa0] sm:$0xff]
        %v1227 = vld [vmem:[#allocation9 + $0xa8] sm:$0xff]
        %v1228 = vld [vmem:[#allocation9 + $0xb0] sm:$0xff]
        %v1229 = vld [vmem:[#allocation9 + $0xb8] sm:$0xff]
        %v1230 = vld [vmem:[#allocation9 + $0xc0] sm:$0xff]
        %v1231 = vld [vmem:[#allocation9 + $0xc8] sm:$0xff]
        %v1232 = vld [vmem:[#allocation9 + $0xd0] sm:$0xff]
        %v1233 = vld [vmem:[#allocation9 + $0xd8] sm:$0xff]
        %v1234 = vld [vmem:[#allocation9 + $0xe0] sm:$0xff]
        %v1235 = vld [vmem:[#allocation9 + $0xe8] sm:$0xff]
        %v1236 = vld [vmem:[#allocation9 + $0xf0] sm:$0xff]
        %v1237 = vld [vmem:[#allocation9 + $0xf8] sm:$0xff]
        %v1238 = vpack.c.bf16 %v1205, %v1205
        %v1239 = vld [vmem:[%s8] sm:$0xf]
        %v1241 = vperm.slane %v1239, 0
        %v1242 = vperm.slane %v1239, 1
        %v1243 = vperm.slane %v1239, 2
        %v1244 = vperm.slane %v1239, 3
        %v1281 = vunpack.c.l.b16 %v1206
        %v1282 = vunpack.c.h.b16 %v1206
        %v1283 = vunpack.c.l.b16 %v1207
        %v1284 = vunpack.c.h.b16 %v1207
        %v1285 = vunpack.c.l.b16 %v1208
        %v1286 = vunpack.c.h.b16 %v1208
        %v1287 = vunpack.c.l.b16 %v1209
        %v1288 = vunpack.c.h.b16 %v1209
        %v1289 = vunpack.c.l.b16 %v1210
        %v1290 = vunpack.c.h.b16 %v1210
        %v1291 = vunpack.c.l.b16 %v1211
        %v1292 = vunpack.c.h.b16 %v1211
        %v1293 = vunpack.c.l.b16 %v1212
        %v1294 = vunpack.c.h.b16 %v1212
        %v1295 = vunpack.c.l.b16 %v1213
        %v1296 = vunpack.c.h.b16 %v1213
        %v1297 = vunpack.c.l.b16 %v1214
        %v1298 = vunpack.c.h.b16 %v1214
        %v1299 = vunpack.c.l.b16 %v1215
        %v1300 = vunpack.c.h.b16 %v1215
        %v1301 = vunpack.c.l.b16 %v1216
        %v1302 = vunpack.c.h.b16 %v1216
        %v1303 = vunpack.c.l.b16 %v1217
        %v1304 = vunpack.c.h.b16 %v1217
        %v1305 = vunpack.c.l.b16 %v1218
        %v1306 = vunpack.c.h.b16 %v1218
        %v1307 = vunpack.c.l.b16 %v1219
        %v1308 = vunpack.c.h.b16 %v1219
        %v1309 = vunpack.c.l.b16 %v1220
        %v1310 = vunpack.c.h.b16 %v1220
        %v1311 = vunpack.c.l.b16 %v1221
        %v1312 = vunpack.c.h.b16 %v1221
        %v1313 = vunpack.c.l.b16 %v1222
        %v1314 = vunpack.c.h.b16 %v1222
        %v1315 = vunpack.c.l.b16 %v1223
        %v1316 = vunpack.c.h.b16 %v1223
        %v1317 = vunpack.c.l.b16 %v1224
        %v1318 = vunpack.c.h.b16 %v1224
        %v1319 = vunpack.c.l.b16 %v1225
        %v1320 = vunpack.c.h.b16 %v1225
        %v1321 = vunpack.c.l.b16 %v1226
        %v1322 = vunpack.c.h.b16 %v1226
        %v1323 = vunpack.c.l.b16 %v1227
        %v1324 = vunpack.c.h.b16 %v1227
        %v1325 = vunpack.c.l.b16 %v1228
        %v1326 = vunpack.c.h.b16 %v1228
        %v1327 = vunpack.c.l.b16 %v1229
        %v1328 = vunpack.c.h.b16 %v1229
        %v1329 = vunpack.c.l.b16 %v1230
        %v1330 = vunpack.c.h.b16 %v1230
        %v1331 = vunpack.c.l.b16 %v1231
        %v1332 = vunpack.c.h.b16 %v1231
        %v1333 = vunpack.c.l.b16 %v1232
        %v1334 = vunpack.c.h.b16 %v1232
        %v1335 = vunpack.c.l.b16 %v1233
        %v1336 = vunpack.c.h.b16 %v1233
        %v1337 = vunpack.c.l.b16 %v1234
        %v1338 = vunpack.c.h.b16 %v1234
        %v1339 = vunpack.c.l.b16 %v1235
        %v1340 = vunpack.c.h.b16 %v1235
        %v1341 = vunpack.c.l.b16 %v1236
        %v1342 = vunpack.c.h.b16 %v1236
        %v1343 = vunpack.c.l.b16 %v1237
        %v1344 = vunpack.c.h.b16 %v1237
        %v1345 = vpack.c.b16 %v1285, %v1281
        %v1346 = vpack.c.b16 %v1286, %v1282
        %v1347 = vpack.c.b16 %v1287, %v1283
        %v1348 = vpack.c.b16 %v1288, %v1284
        %v1349 = vpack.c.b16 %v1293, %v1289
        %v1350 = vpack.c.b16 %v1294, %v1290
        %v1351 = vpack.c.b16 %v1295, %v1291
        %v1352 = vpack.c.b16 %v1296, %v1292
        %v1353 = vpack.c.b16 %v1301, %v1297
        %v1354 = vpack.c.b16 %v1302, %v1298
        %v1355 = vpack.c.b16 %v1303, %v1299
        %v1356 = vpack.c.b16 %v1304, %v1300
        %v1357 = vpack.c.b16 %v1309, %v1305
        %v1358 = vpack.c.b16 %v1310, %v1306
        %v1359 = vpack.c.b16 %v1311, %v1307
        %v1360 = vpack.c.b16 %v1312, %v1308
        %v1361 = vpack.c.b16 %v1317, %v1313
        %v1362 = vpack.c.b16 %v1318, %v1314
        %v1363 = vpack.c.b16 %v1319, %v1315
        %v1364 = vpack.c.b16 %v1320, %v1316
        %v1365 = vpack.c.b16 %v1325, %v1321
        %v1366 = vpack.c.b16 %v1326, %v1322
        %v1367 = vpack.c.b16 %v1327, %v1323
        %v1368 = vpack.c.b16 %v1328, %v1324
        %v1369 = vpack.c.b16 %v1333, %v1329
        %v1370 = vpack.c.b16 %v1334, %v1330
        %v1371 = vpack.c.b16 %v1335, %v1331
        %v1372 = vpack.c.b16 %v1336, %v1332
        %v1373 = vpack.c.b16 %v1341, %v1337
        %v1374 = vpack.c.b16 %v1342, %v1338
        %v1375 = vpack.c.b16 %v1343, %v1339
        %v1376 = vpack.c.b16 %v1344, %v1340
        %1409 = vmatpush.bf16.msra.mxu0 %v1373
        %1410 = vmatpush.bf16.msra.mxu0 %v1369
        %1411 = vmatpush.bf16.msra.mxu0 %v1365
        %1412 = vmatpush.bf16.msra.mxu0 %v1361
        %1413 = vmatpush.bf16.msra.mxu0 %v1357
        %1414 = vmatpush.bf16.msra.mxu0 %v1353
        %1415 = vmatpush.bf16.msra.mxu0 %v1349
        %1416 = vmatpush.bf16.msra.mxu0 %v1345
        %1417 = vmatmul.bf16.gmra.mxu0 %v1238
        %v1418 = vpop.f32.mrf.mxu0
        %v1419 = vadd.f32 %v1241, %v1418
        %v1420 = vpop.f32.mrf.mxu0
        %1421 = vdwg.mxu0
        %1422 = vmatpush.bf16.msra.mxu0 %v1374
        %1423 = vmatpush.bf16.msra.mxu0 %v1370
        %1424 = vmatpush.bf16.msra.mxu0 %v1366
        %1425 = vmatpush.bf16.msra.mxu0 %v1362
        %1426 = vmatpush.bf16.msra.mxu0 %v1358
        %1427 = vmatpush.bf16.msra.mxu0 %v1354
        %1428 = vmatpush.bf16.msra.mxu0 %v1350
        %1429 = vmatpush.bf16.msra.mxu0 %v1346
        %1430 = vmatmul.bf16.gmra.mxu0 %v1238
        %v1431 = vpop.f32.mrf.mxu0
        %v1432 = vadd.f32 %v1242, %v1431
        %v1433 = vpop.f32.mrf.mxu0
        %1434 = vdwg.mxu0
        %1435 = vmatpush.bf16.msra.mxu0 %v1375
        %1436 = vmatpush.bf16.msra.mxu0 %v1371
        %1437 = vmatpush.bf16.msra.mxu0 %v1367
        %1438 = vmatpush.bf16.msra.mxu0 %v1363
        %1439 = vmatpush.bf16.msra.mxu0 %v1359
        %1440 = vmatpush.bf16.msra.mxu0 %v1355
        %1441 = vmatpush.bf16.msra.mxu0 %v1351
        %1442 = vmatpush.bf16.msra.mxu0 %v1347
        %1443 = vmatmul.bf16.gmra.mxu0 %v1238
        %v1444 = vpop.f32.mrf.mxu0
        %v1445 = vadd.f32 %v1243, %v1444
        %v1446 = vpop.f32.mrf.mxu0
        %1447 = vdwg.mxu0
        %1448 = vmatpush.bf16.msra.mxu0 %v1376
        %1449 = vmatpush.bf16.msra.mxu0 %v1372
        %1450 = vmatpush.bf16.msra.mxu0 %v1368
        %1451 = vmatpush.bf16.msra.mxu0 %v1364
        %1452 = vmatpush.bf16.msra.mxu0 %v1360
        %1453 = vmatpush.bf16.msra.mxu0 %v1356
        %1454 = vmatpush.bf16.msra.mxu0 %v1352
        %1455 = vmatpush.bf16.msra.mxu0 %v1348
        %1456 = vmatmul.bf16.gmra.mxu0 %v1238
        %v1457 = vpop.f32.mrf.mxu0
        %v1458 = vadd.f32 %v1244, %v1457
        %v1459 = vpop.f32.mrf.mxu0
        %1460 = vdwg.mxu0
        %v1461 = vmul.f32 %v1419, 0.5
        %v1462 = vmul.f32 %v1432, 0.5
        %v1463 = vmul.f32 %v1445, 0.5
        %v1464 = vmul.f32 %v1458, 0.5
        %v1465 = vmul.f32 %v1419, 0.044715
        %v1466 = vmul.f32 %v1432, 0.044715
        %v1467 = vmul.f32 %v1445, 0.044715
        %v1468 = vmul.f32 %v1458, 0.044715
        %v1469 = vmul.f32 %v1465, %v1419
        %v1470 = vmul.f32 %v1466, %v1432
        %v1471 = vmul.f32 %v1467, %v1445
        %v1472 = vmul.f32 %v1468, %v1458
        %v1473 = vmul.f32 %v1469, %v1419
        %v1474 = vmul.f32 %v1470, %v1432
        %v1475 = vmul.f32 %v1471, %v1445
        %v1476 = vmul.f32 %v1472, %v1458
        %v1477 = vadd.f32 %v1419, %v1473
        %v1478 = vadd.f32 %v1432, %v1474
        %v1479 = vadd.f32 %v1445, %v1475
        %v1480 = vadd.f32 %v1458, %v1476
        %v1481 = vmul.f32 %v1477, 0.7978846
        %v1482 = vmul.f32 %v1478, 0.7978846
        %v1483 = vmul.f32 %v1479, 0.7978846
        %v1484 = vmul.f32 %v1480, 0.7978846
        %v1485 = vtanh.pop %v1481
        %v1486 = vtanh.pop %v1482
        %v1487 = vtanh.pop %v1483
        %v1488 = vtanh.pop %v1484
        %v1489 = vadd.f32 %v1485, 1.0
        %v1490 = vadd.f32 %v1486, 1.0
        %v1491 = vadd.f32 %v1487, 1.0
        %v1492 = vadd.f32 %v1488, 1.0
        %v1493 = vmul.f32 %v1461, %v1489
        %v1494 = vmul.f32 %v1462, %v1490
        %v1495 = vmul.f32 %v1463, %v1491
        %v1496 = vmul.f32 %v1464, %v1492
        %v1497 = vld [vmem:[#allocation10] sm:$0xf]
        %v1498 = vld [vmem:[#allocation10 + $0x4] sm:$0xf]
        %v1499 = vld [vmem:[#allocation10 + $0x8] sm:$0xf]
        %v1500 = vld [vmem:[#allocation10 + $0xc] sm:$0xf]
        %v1501 = vld [vmem:[#allocation10 + $0x10] sm:$0xf]
        %v1502 = vld [vmem:[#allocation10 + $0x14] sm:$0xf]
        %v1503 = vld [vmem:[#allocation10 + $0x18] sm:$0xf]
        %v1504 = vld [vmem:[#allocation10 + $0x1c] sm:$0xf]
        %v1505 = vld [vmem:[#allocation10 + $0x20] sm:$0xf]
        %v1506 = vld [vmem:[#allocation10 + $0x24] sm:$0xf]
        %v1507 = vld [vmem:[#allocation10 + $0x28] sm:$0xf]
        %v1508 = vld [vmem:[#allocation10 + $0x2c] sm:$0xf]
        %v1509 = vld [vmem:[#allocation10 + $0x30] sm:$0xf]
        %v1510 = vld [vmem:[#allocation10 + $0x34] sm:$0xf]
        %v1511 = vld [vmem:[#allocation10 + $0x38] sm:$0xf]
        %v1512 = vld [vmem:[#allocation10 + $0x3c] sm:$0xf]
        %v1513 = vld [vmem:[#allocation10 + $0x40] sm:$0xf]
        %v1514 = vld [vmem:[#allocation10 + $0x44] sm:$0xf]
        %v1515 = vld [vmem:[#allocation10 + $0x48] sm:$0xf]
        %v1516 = vld [vmem:[#allocation10 + $0x4c] sm:$0xf]
        %v1517 = vld [vmem:[#allocation10 + $0x50] sm:$0xf]
        %v1518 = vld [vmem:[#allocation10 + $0x54] sm:$0xf]
        %v1519 = vld [vmem:[#allocation10 + $0x58] sm:$0xf]
        %v1520 = vld [vmem:[#allocation10 + $0x5c] sm:$0xf]
        %v1521 = vld [vmem:[#allocation10 + $0x60] sm:$0xf]
        %v1522 = vld [vmem:[#allocation10 + $0x64] sm:$0xf]
        %v1523 = vld [vmem:[#allocation10 + $0x68] sm:$0xf]
        %v1524 = vld [vmem:[#allocation10 + $0x6c] sm:$0xf]
        %v1525 = vld [vmem:[#allocation10 + $0x70] sm:$0xf]
        %v1526 = vld [vmem:[#allocation10 + $0x74] sm:$0xf]
        %v1527 = vld [vmem:[#allocation10 + $0x78] sm:$0xf]
        %v1528 = vld [vmem:[#allocation10 + $0x7c] sm:$0xf]
        %v1529 = vld [vmem:[#allocation10 + $0x80] sm:$0xf]
        %v1530 = vld [vmem:[#allocation10 + $0x84] sm:$0xf]
        %v1531 = vld [vmem:[#allocation10 + $0x88] sm:$0xf]
        %v1532 = vld [vmem:[#allocation10 + $0x8c] sm:$0xf]
        %v1533 = vld [vmem:[#allocation10 + $0x90] sm:$0xf]
        %v1534 = vld [vmem:[#allocation10 + $0x94] sm:$0xf]
        %v1535 = vld [vmem:[#allocation10 + $0x98] sm:$0xf]
        %v1536 = vld [vmem:[#allocation10 + $0x9c] sm:$0xf]
        %v1537 = vld [vmem:[#allocation10 + $0xa0] sm:$0xf]
        %v1538 = vld [vmem:[#allocation10 + $0xa4] sm:$0xf]
        %v1539 = vld [vmem:[#allocation10 + $0xa8] sm:$0xf]
        %v1540 = vld [vmem:[#allocation10 + $0xac] sm:$0xf]
        %v1541 = vld [vmem:[#allocation10 + $0xb0] sm:$0xf]
        %v1542 = vld [vmem:[#allocation10 + $0xb4] sm:$0xf]
        %v1543 = vld [vmem:[#allocation10 + $0xb8] sm:$0xf]
        %v1544 = vld [vmem:[#allocation10 + $0xbc] sm:$0xf]
        %v1545 = vld [vmem:[#allocation10 + $0xc0] sm:$0xf]
        %v1546 = vld [vmem:[#allocation10 + $0xc4] sm:$0xf]
        %v1547 = vld [vmem:[#allocation10 + $0xc8] sm:$0xf]
        %v1548 = vld [vmem:[#allocation10 + $0xcc] sm:$0xf]
        %v1549 = vld [vmem:[#allocation10 + $0xd0] sm:$0xf]
        %v1550 = vld [vmem:[#allocation10 + $0xd4] sm:$0xf]
        %v1551 = vld [vmem:[#allocation10 + $0xd8] sm:$0xf]
        %v1552 = vld [vmem:[#allocation10 + $0xdc] sm:$0xf]
        %v1553 = vld [vmem:[#allocation10 + $0xe0] sm:$0xf]
        %v1554 = vld [vmem:[#allocation10 + $0xe4] sm:$0xf]
        %v1555 = vld [vmem:[#allocation10 + $0xe8] sm:$0xf]
        %v1556 = vld [vmem:[#allocation10 + $0xec] sm:$0xf]
        %v1557 = vld [vmem:[#allocation10 + $0xf0] sm:$0xf]
        %v1558 = vld [vmem:[#allocation10 + $0xf4] sm:$0xf]
        %v1559 = vld [vmem:[#allocation10 + $0xf8] sm:$0xf]
        %v1560 = vld [vmem:[#allocation10 + $0xfc] sm:$0xf]
        %v1561 = vpack.c.bf16 %v1493, %v1493
        %v1562 = vpack.c.bf16 %v1494, %v1494
        %v1563 = vpack.c.bf16 %v1495, %v1495
        %v1564 = vpack.c.bf16 %v1496, %v1496
        %v1565 = vld [vmem:[#allocation4 + $0x15] sm:$0x1]
        %v1566 = vperm.slane %v1565, 0
        %v1631 = vunpack.c.l.b16 %v1497
        %v1632 = vunpack.c.l.b16 %v1498
        %v1633 = vunpack.c.l.b16 %v1499
        %v1634 = vunpack.c.l.b16 %v1500
        %v1635 = vunpack.c.l.b16 %v1501
        %v1636 = vunpack.c.l.b16 %v1502
        %v1637 = vunpack.c.l.b16 %v1503
        %v1638 = vunpack.c.l.b16 %v1504
        %v1639 = vunpack.c.l.b16 %v1505
        %v1640 = vunpack.c.l.b16 %v1506
        %v1641 = vunpack.c.l.b16 %v1507
        %v1642 = vunpack.c.l.b16 %v1508
        %v1643 = vunpack.c.l.b16 %v1509
        %v1644 = vunpack.c.l.b16 %v1510
        %v1645 = vunpack.c.l.b16 %v1511
        %v1646 = vunpack.c.l.b16 %v1512
        %v1647 = vunpack.c.l.b16 %v1513
        %v1648 = vunpack.c.l.b16 %v1514
        %v1649 = vunpack.c.l.b16 %v1515
        %v1650 = vunpack.c.l.b16 %v1516
        %v1651 = vunpack.c.l.b16 %v1517
        %v1652 = vunpack.c.l.b16 %v1518
        %v1653 = vunpack.c.l.b16 %v1519
        %v1654 = vunpack.c.l.b16 %v1520
        %v1655 = vunpack.c.l.b16 %v1521
        %v1656 = vunpack.c.l.b16 %v1522
        %v1657 = vunpack.c.l.b16 %v1523
        %v1658 = vunpack.c.l.b16 %v1524
        %v1659 = vunpack.c.l.b16 %v1525
        %v1660 = vunpack.c.l.b16 %v1526
        %v1661 = vunpack.c.l.b16 %v1527
        %v1662 = vunpack.c.l.b16 %v1528
        %v1663 = vunpack.c.l.b16 %v1529
        %v1664 = vunpack.c.l.b16 %v1530
        %v1665 = vunpack.c.l.b16 %v1531
        %v1666 = vunpack.c.l.b16 %v1532
        %v1667 = vunpack.c.l.b16 %v1533
        %v1668 = vunpack.c.l.b16 %v1534
        %v1669 = vunpack.c.l.b16 %v1535
        %v1670 = vunpack.c.l.b16 %v1536
        %v1671 = vunpack.c.l.b16 %v1537
        %v1672 = vunpack.c.l.b16 %v1538
        %v1673 = vunpack.c.l.b16 %v1539
        %v1674 = vunpack.c.l.b16 %v1540
        %v1675 = vunpack.c.l.b16 %v1541
        %v1676 = vunpack.c.l.b16 %v1542
        %v1677 = vunpack.c.l.b16 %v1543
        %v1678 = vunpack.c.l.b16 %v1544
        %v1679 = vunpack.c.l.b16 %v1545
        %v1680 = vunpack.c.l.b16 %v1546
        %v1681 = vunpack.c.l.b16 %v1547
        %v1682 = vunpack.c.l.b16 %v1548
        %v1683 = vunpack.c.l.b16 %v1549
        %v1684 = vunpack.c.l.b16 %v1550
        %v1685 = vunpack.c.l.b16 %v1551
        %v1686 = vunpack.c.l.b16 %v1552
        %v1687 = vunpack.c.l.b16 %v1553
        %v1688 = vunpack.c.l.b16 %v1554
        %v1689 = vunpack.c.l.b16 %v1555
        %v1690 = vunpack.c.l.b16 %v1556
        %v1691 = vunpack.c.l.b16 %v1557
        %v1692 = vunpack.c.l.b16 %v1558
        %v1693 = vunpack.c.l.b16 %v1559
        %v1694 = vunpack.c.l.b16 %v1560
        %v1695 = vpack.c.b16 %v1632, %v1631
        %v1696 = vpack.c.b16 %v1634, %v1633
        %v1697 = vpack.c.b16 %v1636, %v1635
        %v1698 = vpack.c.b16 %v1638, %v1637
        %v1699 = vpack.c.b16 %v1640, %v1639
        %v1700 = vpack.c.b16 %v1642, %v1641
        %v1701 = vpack.c.b16 %v1644, %v1643
        %v1702 = vpack.c.b16 %v1646, %v1645
        %v1703 = vpack.c.b16 %v1648, %v1647
        %v1704 = vpack.c.b16 %v1650, %v1649
        %v1705 = vpack.c.b16 %v1652, %v1651
        %v1706 = vpack.c.b16 %v1654, %v1653
        %v1707 = vpack.c.b16 %v1656, %v1655
        %v1708 = vpack.c.b16 %v1658, %v1657
        %v1709 = vpack.c.b16 %v1660, %v1659
        %v1710 = vpack.c.b16 %v1662, %v1661
        %v1711 = vpack.c.b16 %v1664, %v1663
        %v1712 = vpack.c.b16 %v1666, %v1665
        %v1713 = vpack.c.b16 %v1668, %v1667
        %v1714 = vpack.c.b16 %v1670, %v1669
        %v1715 = vpack.c.b16 %v1672, %v1671
        %v1716 = vpack.c.b16 %v1674, %v1673
        %v1717 = vpack.c.b16 %v1676, %v1675
        %v1718 = vpack.c.b16 %v1678, %v1677
        %v1719 = vpack.c.b16 %v1680, %v1679
        %v1720 = vpack.c.b16 %v1682, %v1681
        %v1721 = vpack.c.b16 %v1684, %v1683
        %v1722 = vpack.c.b16 %v1686, %v1685
        %v1723 = vpack.c.b16 %v1688, %v1687
        %v1724 = vpack.c.b16 %v1690, %v1689
        %v1725 = vpack.c.b16 %v1692, %v1691
        %v1726 = vpack.c.b16 %v1694, %v1693
        %1759 = vmatpush.bf16.msra.mxu0 %v1702
        %1760 = vmatpush.bf16.msra.mxu0 %v1701
        %1761 = vmatpush.bf16.msra.mxu0 %v1700
        %1762 = vmatpush.bf16.msra.mxu0 %v1699
        %1763 = vmatpush.bf16.msra.mxu0 %v1698
        %1764 = vmatpush.bf16.msra.mxu0 %v1697
        %1765 = vmatpush.bf16.msra.mxu0 %v1696
        %1766 = vmatpush.bf16.msra.mxu0 %v1695
        %1767 = vmatmul.bf16.gmra.mxu0 %v1561
        %v1768 = vpop.f32.mrf.mxu0
        %v1769 = vadd.f32 %v1566, %v1768
        %v1770 = vpop.f32.mrf.mxu0
        %1771 = vdwg.mxu0
        %1772 = vmatpush.bf16.msra.mxu0 %v1710
        %1773 = vmatpush.bf16.msra.mxu0 %v1709
        %1774 = vmatpush.bf16.msra.mxu0 %v1708
        %1775 = vmatpush.bf16.msra.mxu0 %v1707
        %1776 = vmatpush.bf16.msra.mxu0 %v1706
        %1777 = vmatpush.bf16.msra.mxu0 %v1705
        %1778 = vmatpush.bf16.msra.mxu0 %v1704
        %1779 = vmatpush.bf16.msra.mxu0 %v1703
        %1780 = vmatmul.bf16.gmra.mxu0 %v1562
        %v1781 = vpop.f32.mrf.mxu0
        %v1782 = vadd.f32 %v1769, %v1781
        %v1783 = vpop.f32.mrf.mxu0
        %1784 = vdwg.mxu0
        %1785 = vmatpush.bf16.msra.mxu0 %v1718
        %1786 = vmatpush.bf16.msra.mxu0 %v1717
        %1787 = vmatpush.bf16.msra.mxu0 %v1716
        %1788 = vmatpush.bf16.msra.mxu0 %v1715
        %1789 = vmatpush.bf16.msra.mxu0 %v1714
        %1790 = vmatpush.bf16.msra.mxu0 %v1713
        %1791 = vmatpush.bf16.msra.mxu0 %v1712
        %1792 = vmatpush.bf16.msra.mxu0 %v1711
        %1793 = vmatmul.bf16.gmra.mxu0 %v1563
        %v1794 = vpop.f32.mrf.mxu0
        %v1795 = vadd.f32 %v1782, %v1794
        %v1796 = vpop.f32.mrf.mxu0
        %1797 = vdwg.mxu0
        %1798 = vmatpush.bf16.msra.mxu0 %v1726
        %1799 = vmatpush.bf16.msra.mxu0 %v1725
        %1800 = vmatpush.bf16.msra.mxu0 %v1724
        %1801 = vmatpush.bf16.msra.mxu0 %v1723
        %1802 = vmatpush.bf16.msra.mxu0 %v1722
        %1803 = vmatpush.bf16.msra.mxu0 %v1721
        %1804 = vmatpush.bf16.msra.mxu0 %v1720
        %1805 = vmatpush.bf16.msra.mxu0 %v1719
        %1806 = vmatmul.bf16.gmra.mxu0 %v1564
        %v1807 = vpop.f32.mrf.mxu0
        %v1808 = vadd.f32 %v1795, %v1807
        %v1809 = vpop.f32.mrf.mxu0
        %1810 = vdwg.mxu0
        %v1811 = vadd.f32 %v1808, %v1205
        %v1812 = vld [vmem:[#allocation4 + $0x16] sm:$0x1]
        %v1813 = vld [vmem:[#allocation4 + $0x17] sm:$0x1]
        %1814 = vadd.xlane.f32.xlu0 %v1811
        %v1815 = vpop.xlane.xlu0 %1814
        %v1816 = vmul.f32 %v1815, %v563
        %v1817 = vsub.f32 %v1811, %v1816
        %v1818 = vmul.f32 %v1817, %v1817
        %1819 = vadd.xlane.f32.xlu0 %v1818
        %v1820 = vpop.xlane.xlu0 %1819
        %v1821 = vmul.f32 %v1820, %v563
        %v1822 = vadd.f32 %v1821, 1e-12
        %v1823 = vrsqrt.pop %v1822
        %v1824 = vmul.f32 %v1823, %v1822
        %v1825 = vmul.f32 %v1824, %v1823
        %v1826 = vmul.f32 0.5, %v1825
        %v1827 = vsub.f32 1.5, %v1826
        %v1828 = vmul.f32 %v1823, %v1827
        %vm1829 = vweird.f32 %v1822
        %vm1830 = vweird.f32 %v1823
        %vm1831 = vmor %vm1829, %vm1830
        %v1832 = vsel %vm1831, %v1823, %v1828
        %v1833 = vmul.f32 %v1817, %v1832
        %v1834 = vperm.slane %v1812, 0
        %v1835 = vmul.f32 %v1833, %v1834
        %v1836 = vperm.slane %v1813, 0
        %v1837 = vadd.f32 %v1835, %v1836
        %s1838 = scalar_lea.vmem [#allocation6], 192
        %v1839 = vld [vmem:[%s1838] sm:$0xff]
        %v1840 = vld [vmem:[%s1838 + $0x8] sm:$0xf]
        %v1841 = vld [vmem:[%s1838 + $0xc] sm:$0xff]
        %v1842 = vld [vmem:[%s1838 + $0x14] sm:$0xf]
        %v1843 = vld [vmem:[%s1838 + $0x18] sm:$0xff]
        %v1844 = vld [vmem:[%s1838 + $0x20] sm:$0xf]
        %v1845 = vld [vmem:[%s1838 + $0x24] sm:$0xff]
        %v1846 = vld [vmem:[%s1838 + $0x2c] sm:$0xf]
        %v1847 = vld [vmem:[%s1838 + $0x30] sm:$0xff]
        %v1848 = vld [vmem:[%s1838 + $0x38] sm:$0xf]
        %v1849 = vld [vmem:[%s1838 + $0x3c] sm:$0xff]
        %v1850 = vld [vmem:[%s1838 + $0x44] sm:$0xf]
        %v1851 = vld [vmem:[%s1838 + $0x48] sm:$0xff]
        %v1852 = vld [vmem:[%s1838 + $0x50] sm:$0xf]
        %v1853 = vld [vmem:[%s1838 + $0x54] sm:$0xff]
        %v1854 = vld [vmem:[%s1838 + $0x5c] sm:$0xf]
        %v1855 = vld [vmem:[%s1838 + $0x60] sm:$0xff]
        %v1856 = vld [vmem:[%s1838 + $0x68] sm:$0xf]
        %v1857 = vld [vmem:[%s1838 + $0x6c] sm:$0xff]
        %v1858 = vld [vmem:[%s1838 + $0x74] sm:$0xf]
        %v1859 = vld [vmem:[%s1838 + $0x78] sm:$0xff]
        %v1860 = vld [vmem:[%s1838 + $0x80] sm:$0xf]
        %v1861 = vld [vmem:[%s1838 + $0x84] sm:$0xff]
        %v1862 = vld [vmem:[%s1838 + $0x8c] sm:$0xf]
        %v1863 = vld [vmem:[%s1838 + $0x90] sm:$0xff]
        %v1864 = vld [vmem:[%s1838 + $0x98] sm:$0xf]
        %v1865 = vld [vmem:[%s1838 + $0x9c] sm:$0xff]
        %v1866 = vld [vmem:[%s1838 + $0xa4] sm:$0xf]
        %v1867 = vld [vmem:[%s1838 + $0xa8] sm:$0xff]
        %v1868 = vld [vmem:[%s1838 + $0xb0] sm:$0xf]
        %v1869 = vld [vmem:[%s1838 + $0xb4] sm:$0xff]
        %v1870 = vld [vmem:[%s1838 + $0xbc] sm:$0xf]
        %v1871 = vpack.c.bf16 %v1837, %v1837
        %s1872 = scalar_lea.vmem %s5, 3
        %v1873 = vld [vmem:[%s1872] sm:$0x7]
        %v1875 = vperm.slane %v1873, 0
        %v1876 = vperm.slane %v1873, 1
        %v1877 = vperm.slane %v1873, 2
        %v1913 = vunpack.c.l.b16 %v1839
        %v1914 = vunpack.c.h.b16 %v1839
        %v1915 = vunpack.c.l.b16 %v1840
        %v1916 = vunpack.c.l.b16 %v1841
        %v1917 = vunpack.c.h.b16 %v1841
        %v1918 = vunpack.c.l.b16 %v1842
        %v1919 = vunpack.c.l.b16 %v1843
        %v1920 = vunpack.c.h.b16 %v1843
        %v1921 = vunpack.c.l.b16 %v1844
        %v1922 = vunpack.c.l.b16 %v1845
        %v1923 = vunpack.c.h.b16 %v1845
        %v1924 = vunpack.c.l.b16 %v1846
        %v1925 = vunpack.c.l.b16 %v1847
        %v1926 = vunpack.c.h.b16 %v1847
        %v1927 = vunpack.c.l.b16 %v1848
        %v1928 = vunpack.c.l.b16 %v1849
        %v1929 = vunpack.c.h.b16 %v1849
        %v1930 = vunpack.c.l.b16 %v1850
        %v1931 = vunpack.c.l.b16 %v1851
        %v1932 = vunpack.c.h.b16 %v1851
        %v1933 = vunpack.c.l.b16 %v1852
        %v1934 = vunpack.c.l.b16 %v1853
        %v1935 = vunpack.c.h.b16 %v1853
        %v1936 = vunpack.c.l.b16 %v1854
        %v1937 = vunpack.c.l.b16 %v1855
        %v1938 = vunpack.c.h.b16 %v1855
        %v1939 = vunpack.c.l.b16 %v1856
        %v1940 = vunpack.c.l.b16 %v1857
        %v1941 = vunpack.c.h.b16 %v1857
        %v1942 = vunpack.c.l.b16 %v1858
        %v1943 = vunpack.c.l.b16 %v1859
        %v1944 = vunpack.c.h.b16 %v1859
        %v1945 = vunpack.c.l.b16 %v1860
        %v1946 = vunpack.c.l.b16 %v1861
        %v1947 = vunpack.c.h.b16 %v1861
        %v1948 = vunpack.c.l.b16 %v1862
        %v1949 = vunpack.c.l.b16 %v1863
        %v1950 = vunpack.c.h.b16 %v1863
        %v1951 = vunpack.c.l.b16 %v1864
        %v1952 = vunpack.c.l.b16 %v1865
        %v1953 = vunpack.c.h.b16 %v1865
        %v1954 = vunpack.c.l.b16 %v1866
        %v1955 = vunpack.c.l.b16 %v1867
        %v1956 = vunpack.c.h.b16 %v1867
        %v1957 = vunpack.c.l.b16 %v1868
        %v1958 = vunpack.c.l.b16 %v1869
        %v1959 = vunpack.c.h.b16 %v1869
        %v1960 = vunpack.c.l.b16 %v1870
        %v1961 = vpack.c.b16 %v1916, %v1913
        %v1962 = vpack.c.b16 %v1917, %v1914
        %v1963 = vpack.c.b16 %v1918, %v1915
        %v1964 = vpack.c.b16 %v1922, %v1919
        %v1965 = vpack.c.b16 %v1923, %v1920
        %v1966 = vpack.c.b16 %v1924, %v1921
        %v1967 = vpack.c.b16 %v1928, %v1925
        %v1968 = vpack.c.b16 %v1929, %v1926
        %v1969 = vpack.c.b16 %v1930, %v1927
        %v1970 = vpack.c.b16 %v1934, %v1931
        %v1971 = vpack.c.b16 %v1935, %v1932
        %v1972 = vpack.c.b16 %v1936, %v1933
        %v1973 = vpack.c.b16 %v1940, %v1937
        %v1974 = vpack.c.b16 %v1941, %v1938
        %v1975 = vpack.c.b16 %v1942, %v1939
        %v1976 = vpack.c.b16 %v1946, %v1943
        %v1977 = vpack.c.b16 %v1947, %v1944
        %v1978 = vpack.c.b16 %v1948, %v1945
        %v1979 = vpack.c.b16 %v1952, %v1949
        %v1980 = vpack.c.b16 %v1953, %v1950
        %v1981 = vpack.c.b16 %v1954, %v1951
        %v1982 = vpack.c.b16 %v1958, %v1955
        %v1983 = vpack.c.b16 %v1959, %v1956
        %v1984 = vpack.c.b16 %v1960, %v1957
        %2009 = vmatpush.bf16.msra.mxu0 %v1982
        %2010 = vmatpush.bf16.msra.mxu0 %v1979
        %2011 = vmatpush.bf16.msra.mxu0 %v1976
        %2012 = vmatpush.bf16.msra.mxu0 %v1973
        %2013 = vmatpush.bf16.msra.mxu0 %v1970
        %2014 = vmatpush.bf16.msra.mxu0 %v1967
        %2015 = vmatpush.bf16.msra.mxu0 %v1964
        %2016 = vmatpush.bf16.msra.mxu0 %v1961
        %2017 = vmatmul.bf16.gmra.mxu0 %v1871
        %v2018 = vpop.f32.mrf.mxu0
        %v2019 = vadd.f32 %v1875, %v2018
        %v2020 = vpop.f32.mrf.mxu0
        %2021 = vdwg.mxu0
        %2022 = vmatpush.bf16.msra.mxu0 %v1983
        %2023 = vmatpush.bf16.msra.mxu0 %v1980
        %2024 = vmatpush.bf16.msra.mxu0 %v1977
        %2025 = vmatpush.bf16.msra.mxu0 %v1974
        %2026 = vmatpush.bf16.msra.mxu0 %v1971
        %2027 = vmatpush.bf16.msra.mxu0 %v1968
        %2028 = vmatpush.bf16.msra.mxu0 %v1965
        %2029 = vmatpush.bf16.msra.mxu0 %v1962
        %2030 = vmatmul.bf16.gmra.mxu0 %v1871
        %v2031 = vpop.f32.mrf.mxu0
        %v2032 = vadd.f32 %v1876, %v2031
        %v2033 = vpop.f32.mrf.mxu0
        %2034 = vdwg.mxu0
        %2035 = vmatpush.bf16.msra.mxu0 %v1984
        %2036 = vmatpush.bf16.msra.mxu0 %v1981
        %2037 = vmatpush.bf16.msra.mxu0 %v1978
        %2038 = vmatpush.bf16.msra.mxu0 %v1975
        %2039 = vmatpush.bf16.msra.mxu0 %v1972
        %2040 = vmatpush.bf16.msra.mxu0 %v1969
        %2041 = vmatpush.bf16.msra.mxu0 %v1966
        %2042 = vmatpush.bf16.msra.mxu0 %v1963
        %2043 = vmatmul.bf16.gmra.mxu0 %v1871
        %v2044 = vpop.f32.mrf.mxu0
        %v2045 = vadd.f32 %v1877, %v2044
        %v2046 = vpop.f32.mrf.mxu0
        %2047 = vdwg.mxu0
        %v2048 = vpack.c.bf16 %v2032, %v2019
        %v2049 = vpack.c.bf16 %v2045, %v2045
        %2051 = vrot.lane.b32.xlu0 %v2048, 96
        %v2052 = vpop.permute.xlu0 %2051
        %2053 = vrot.lane.b32.xlu0 %v2048, 64
        %v2054 = vpop.permute.xlu0 %2053
        %2055 = vrot.lane.b32.xlu0 %v2048, 32
        %v2056 = vpop.permute.xlu0 %2055
        %v2057 = vrot.slane %v2048, 4
        %v2058 = vrot.slane %v2052, 4
        %v2059 = vrot.slane %v2054, 4
        %v2060 = vrot.slane %v2056, 4
        %2062 = vrot.lane.b32.xlu0 %v2049, 96
        %v2063 = vpop.permute.xlu0 %2062
        %2064 = vrot.lane.b32.xlu0 %v2049, 64
        %v2065 = vpop.permute.xlu0 %2064
        %2066 = vrot.lane.b32.xlu0 %v2049, 32
        %v2067 = vpop.permute.xlu0 %2066
        %v2069 = vsel %vm817, %v2048, 0
        %v2072 = vsel %vm817, %v2057, 0
        %2074 = vmatpush.bf16.xpose.msra.mxu0 0
        %2075 = vmatpush.bf16.xpose.msra.mxu0 0
        %2076 = vmatpush.bf16.xpose.msra.mxu0 0
        %2077 = vmatpush.bf16.xpose.msra.mxu0 0
        %2078 = vmatpush.bf16.xpose.msra.mxu0 0
        %2079 = vmatpush.bf16.xpose.msra.mxu0 0
        %2080 = vmatpush.bf16.xpose.msra.mxu0 0
        %2081 = vmatpush.bf16.xpose.msra.mxu0 %v2072
        %2082 = vmatmul.bf16.gmra.mxu0 %v2069
        %v2083 = vpop.f32.mrf.mxu0
        %v2084 = vadd.f32 0.0, %v2083
        %v2085 = vpop.f32.mrf.mxu0
        %2086 = vdwg.mxu0
        %v2088 = vsel %vm817, %v2052, 0
        %v2091 = vsel %vm817, %v2058, 0
        %2093 = vmatpush.bf16.xpose.msra.mxu0 0
        %2094 = vmatpush.bf16.xpose.msra.mxu0 0
        %2095 = vmatpush.bf16.xpose.msra.mxu0 0
        %2096 = vmatpush.bf16.xpose.msra.mxu0 0
        %2097 = vmatpush.bf16.xpose.msra.mxu0 0
        %2098 = vmatpush.bf16.xpose.msra.mxu0 0
        %2099 = vmatpush.bf16.xpose.msra.mxu0 0
        %2100 = vmatpush.bf16.xpose.msra.mxu0 %v2091
        %2101 = vmatmul.bf16.gmra.mxu0 %v2088
        %v2102 = vpop.f32.mrf.mxu0
        %v2103 = vadd.f32 0.0, %v2102
        %v2104 = vpop.f32.mrf.mxu0
        %2105 = vdwg.mxu0
        %v2107 = vsel %vm817, %v2054, 0
        %v2110 = vsel %vm817, %v2059, 0
        %2112 = vmatpush.bf16.xpose.msra.mxu0 0
        %2113 = vmatpush.bf16.xpose.msra.mxu0 0
        %2114 = vmatpush.bf16.xpose.msra.mxu0 0
        %2115 = vmatpush.bf16.xpose.msra.mxu0 0
        %2116 = vmatpush.bf16.xpose.msra.mxu0 0
        %2117 = vmatpush.bf16.xpose.msra.mxu0 0
        %2118 = vmatpush.bf16.xpose.msra.mxu0 0
        %2119 = vmatpush.bf16.xpose.msra.mxu0 %v2110
        %2120 = vmatmul.bf16.gmra.mxu0 %v2107
        %v2121 = vpop.f32.mrf.mxu0
        %v2122 = vadd.f32 0.0, %v2121
        %v2123 = vpop.f32.mrf.mxu0
        %2124 = vdwg.mxu0
        %v2126 = vsel %vm817, %v2056, 0
        %v2129 = vsel %vm817, %v2060, 0
        %2131 = vmatpush.bf16.xpose.msra.mxu0 0
        %2132 = vmatpush.bf16.xpose.msra.mxu0 0
        %2133 = vmatpush.bf16.xpose.msra.mxu0 0
        %2134 = vmatpush.bf16.xpose.msra.mxu0 0
        %2135 = vmatpush.bf16.xpose.msra.mxu0 0
        %2136 = vmatpush.bf16.xpose.msra.mxu0 0
        %2137 = vmatpush.bf16.xpose.msra.mxu0 0
        %2138 = vmatpush.bf16.xpose.msra.mxu0 %v2129
        %2139 = vmatmul.bf16.gmra.mxu0 %v2126
        %v2140 = vpop.f32.mrf.mxu0
        %v2141 = vadd.f32 0.0, %v2140
        %v2142 = vpop.f32.mrf.mxu0
        %2143 = vdwg.mxu0
        %v2144 = vmul.f32 %v2084, 0.17677669
        %v2145 = vmul.f32 %v2103, 0.17677669
        %v2146 = vmul.f32 %v2122, 0.17677669
        %v2147 = vmul.f32 %v2141, 0.17677669
        %v2148 = vadd.f32 %v2144, %v899
        %v2149 = vadd.f32 %v2145, %v899
        %v2150 = vadd.f32 %v2146, %v899
        %v2151 = vadd.f32 %v2147, %v899
        %v2152 = vsel %vm905, %v2148, -inf
        %2153 = vmax.xlane.f32.xlu0 %v2152
        %v2154 = vpop.xlane.xlu0 %2153
        %v2155 = vsel %vm905, %v2149, -inf
        %2156 = vmax.xlane.f32.xlu0 %v2155
        %v2157 = vpop.xlane.xlu0 %2156
        %v2158 = vsel %vm905, %v2150, -inf
        %2159 = vmax.xlane.f32.xlu0 %v2158
        %v2160 = vpop.xlane.xlu0 %2159
        %v2161 = vsel %vm905, %v2151, -inf
        %2162 = vmax.xlane.f32.xlu0 %v2161
        %v2163 = vpop.xlane.xlu0 %2162
        %v2164 = vsub.f32 %v2148, %v2154
        %v2165 = vsub.f32 %v2149, %v2157
        %v2166 = vsub.f32 %v2150, %v2160
        %v2167 = vsub.f32 %v2151, %v2163
        %v2168 = vmul.f32 %v2164, 1.442695
        %v2169 = vpow.pop %v2168
        %v2170 = vmul.f32 %v2165, 1.442695
        %v2171 = vpow.pop %v2170
        %v2172 = vmul.f32 %v2166, 1.442695
        %v2173 = vpow.pop %v2172
        %v2174 = vmul.f32 %v2167, 1.442695
        %v2175 = vpow.pop %v2174
        %v2176 = vsel %vm905, %v2169, 0.0
        %2177 = vadd.xlane.f32.xlu0 %v2176
        %v2178 = vpop.xlane.xlu0 %2177
        %v2179 = vsel %vm905, %v2171, 0.0
        %2180 = vadd.xlane.f32.xlu0 %v2179
        %v2181 = vpop.xlane.xlu0 %2180
        %v2182 = vsel %vm905, %v2173, 0.0
        %2183 = vadd.xlane.f32.xlu0 %v2182
        %v2184 = vpop.xlane.xlu0 %2183
        %v2185 = vsel %vm905, %v2175, 0.0
        %2186 = vadd.xlane.f32.xlu0 %v2185
        %v2187 = vpop.xlane.xlu0 %2186
        %v2188 = vrcp.pop %v2178
        %v2189 = vmul.f32 %v2178, %v2188
        %v2190 = vsub.f32 1.0, %v2189
        %v2191 = vmul.f32 %v2188, %v2190
        %v2192 = vadd.f32 %v2188, %v2191
        %vm2193 = vweird.f32 %v2178
        %vm2194 = vweird.f32 %v2188
        %vm2195 = vmor %vm2193, %vm2194
        %v2196 = vsel %vm2195, %v2188, %v2192
        %v2197 = vand.u32 2147483647, %v2178
        %vm2198 = vcmp.eq.f32.partialorder %v2197, 8.507059e+37
        %v2199 = vand.u32 %v2178, 2147483648
        %v2200 = vor.u32 1.1754944e-38, %v2199
        %v2201 = vsel %vm2198, %v2200, %v2196
        %v2202 = vmul.f32 %v2169, %v2201
        %v2203 = vrcp.pop %v2181
        %v2204 = vmul.f32 %v2181, %v2203
        %v2205 = vsub.f32 1.0, %v2204
        %v2206 = vmul.f32 %v2203, %v2205
        %v2207 = vadd.f32 %v2203, %v2206
        %vm2208 = vweird.f32 %v2181
        %vm2209 = vweird.f32 %v2203
        %vm2210 = vmor %vm2208, %vm2209
        %v2211 = vsel %vm2210, %v2203, %v2207
        %v2212 = vand.u32 2147483647, %v2181
        %vm2213 = vcmp.eq.f32.partialorder %v2212, 8.507059e+37
        %v2214 = vand.u32 %v2181, 2147483648
        %v2215 = vor.u32 1.1754944e-38, %v2214
        %v2216 = vsel %vm2213, %v2215, %v2211
        %v2217 = vmul.f32 %v2171, %v2216
        %v2218 = vrcp.pop %v2184
        %v2219 = vmul.f32 %v2184, %v2218
        %v2220 = vsub.f32 1.0, %v2219
        %v2221 = vmul.f32 %v2218, %v2220
        %v2222 = vadd.f32 %v2218, %v2221
        %vm2223 = vweird.f32 %v2184
        %vm2224 = vweird.f32 %v2218
        %vm2225 = vmor %vm2223, %vm2224
        %v2226 = vsel %vm2225, %v2218, %v2222
        %v2227 = vand.u32 2147483647, %v2184
        %vm2228 = vcmp.eq.f32.partialorder %v2227, 8.507059e+37
        %v2229 = vand.u32 %v2184, 2147483648
        %v2230 = vor.u32 1.1754944e-38, %v2229
        %v2231 = vsel %vm2228, %v2230, %v2226
        %v2232 = vmul.f32 %v2173, %v2231
        %v2233 = vrcp.pop %v2187
        %v2234 = vmul.f32 %v2187, %v2233
        %v2235 = vsub.f32 1.0, %v2234
        %v2236 = vmul.f32 %v2233, %v2235
        %v2237 = vadd.f32 %v2233, %v2236
        %vm2238 = vweird.f32 %v2187
        %vm2239 = vweird.f32 %v2233
        %vm2240 = vmor %vm2238, %vm2239
        %v2241 = vsel %vm2240, %v2233, %v2237
        %v2242 = vand.u32 2147483647, %v2187
        %vm2243 = vcmp.eq.f32.partialorder %v2242, 8.507059e+37
        %v2244 = vand.u32 %v2187, 2147483648
        %v2245 = vor.u32 1.1754944e-38, %v2244
        %v2246 = vsel %vm2243, %v2245, %v2241
        %v2247 = vmul.f32 %v2175, %v2246
        %v2248 = vpack.c.bf16 %v2202, %v2202
        %v2249 = vpack.c.bf16 %v2217, %v2217
        %v2250 = vpack.c.bf16 %v2232, %v2232
        %v2251 = vpack.c.bf16 %v2247, %v2247
        %v2253 = vsel %vm905, %v2248, 0
        %v2256 = vsel %vm1009, %v2049, 0
        %2258 = vmatpush.bf16.msra.mxu0 0
        %2259 = vmatpush.bf16.msra.mxu0 0
        %2260 = vmatpush.bf16.msra.mxu0 0
        %2261 = vmatpush.bf16.msra.mxu0 0
        %2262 = vmatpush.bf16.msra.mxu0 0
        %2263 = vmatpush.bf16.msra.mxu0 0
        %2264 = vmatpush.bf16.msra.mxu0 0
        %2265 = vmatpush.bf16.msra.mxu0 %v2256
        %2266 = vmatmul.bf16.gmra.mxu0 %v2253
        %v2267 = vpop.f32.mrf.mxu0
        %v2268 = vadd.f32 0.0, %v2267
        %v2269 = vpop.f32.mrf.mxu0
        %2270 = vdwg.mxu0
        %v2272 = vsel %vm905, %v2249, 0
        %v2275 = vsel %vm1009, %v2063, 0
        %2277 = vmatpush.bf16.msra.mxu0 0
        %2278 = vmatpush.bf16.msra.mxu0 0
        %2279 = vmatpush.bf16.msra.mxu0 0
        %2280 = vmatpush.bf16.msra.mxu0 0
        %2281 = vmatpush.bf16.msra.mxu0 0
        %2282 = vmatpush.bf16.msra.mxu0 0
        %2283 = vmatpush.bf16.msra.mxu0 0
        %2284 = vmatpush.bf16.msra.mxu0 %v2275
        %2285 = vmatmul.bf16.gmra.mxu0 %v2272
        %v2286 = vpop.f32.mrf.mxu0
        %v2287 = vadd.f32 0.0, %v2286
        %v2288 = vpop.f32.mrf.mxu0
        %2289 = vdwg.mxu0
        %v2291 = vsel %vm905, %v2250, 0
        %v2294 = vsel %vm1009, %v2065, 0
        %2296 = vmatpush.bf16.msra.mxu0 0
        %2297 = vmatpush.bf16.msra.mxu0 0
        %2298 = vmatpush.bf16.msra.mxu0 0
        %2299 = vmatpush.bf16.msra.mxu0 0
        %2300 = vmatpush.bf16.msra.mxu0 0
        %2301 = vmatpush.bf16.msra.mxu0 0
        %2302 = vmatpush.bf16.msra.mxu0 0
        %2303 = vmatpush.bf16.msra.mxu0 %v2294
        %2304 = vmatmul.bf16.gmra.mxu0 %v2291
        %v2305 = vpop.f32.mrf.mxu0
        %v2306 = vadd.f32 0.0, %v2305
        %v2307 = vpop.f32.mrf.mxu0
        %2308 = vdwg.mxu0
        %v2310 = vsel %vm905, %v2251, 0
        %v2313 = vsel %vm1009, %v2067, 0
        %2315 = vmatpush.bf16.msra.mxu0 0
        %2316 = vmatpush.bf16.msra.mxu0 0
        %2317 = vmatpush.bf16.msra.mxu0 0
        %2318 = vmatpush.bf16.msra.mxu0 0
        %2319 = vmatpush.bf16.msra.mxu0 0
        %2320 = vmatpush.bf16.msra.mxu0 0
        %2321 = vmatpush.bf16.msra.mxu0 0
        %2322 = vmatpush.bf16.msra.mxu0 %v2313
        %2323 = vmatmul.bf16.gmra.mxu0 %v2310
        %v2324 = vpop.f32.mrf.mxu0
        %v2325 = vadd.f32 0.0, %v2324
        %v2326 = vpop.f32.mrf.mxu0
        %2327 = vdwg.mxu0
        %2329 = vrot.lane.b32.xlu0 %v2287, 32
        %v2330 = vpop.permute.xlu0 %2329
        %2333 = vrot.lane.b32.xlu0 %v2306, 64
        %v2334 = vpop.permute.xlu0 %2333
        %2337 = vrot.lane.b32.xlu0 %v2325, 96
        %v2338 = vpop.permute.xlu0 %2337
        %v2340 = vsel %vm817, %v2268, %v2330
        %v2341 = vsel %vm529, %v2340, %v2334
        %v2342 = vsel %vm1097, %v2341, %v2338
        %s2343 = scalar_lea.vmem [#allocation7], 64
        %v2344 = vld [vmem:[%s2343] sm:$0xf]
        %v2345 = vld [vmem:[%s2343 + $0x4] sm:$0xf]
        %v2346 = vld [vmem:[%s2343 + $0x8] sm:$0xf]
        %v2347 = vld [vmem:[%s2343 + $0xc] sm:$0xf]
        %v2348 = vld [vmem:[%s2343 + $0x10] sm:$0xf]
        %v2349 = vld [vmem:[%s2343 + $0x14] sm:$0xf]
        %v2350 = vld [vmem:[%s2343 + $0x18] sm:$0xf]
        %v2351 = vld [vmem:[%s2343 + $0x1c] sm:$0xf]
        %v2352 = vld [vmem:[%s2343 + $0x20] sm:$0xf]
        %v2353 = vld [vmem:[%s2343 + $0x24] sm:$0xf]
        %v2354 = vld [vmem:[%s2343 + $0x28] sm:$0xf]
        %v2355 = vld [vmem:[%s2343 + $0x2c] sm:$0xf]
        %v2356 = vld [vmem:[%s2343 + $0x30] sm:$0xf]
        %v2357 = vld [vmem:[%s2343 + $0x34] sm:$0xf]
        %v2358 = vld [vmem:[%s2343 + $0x38] sm:$0xf]
        %v2359 = vld [vmem:[%s2343 + $0x3c] sm:$0xf]
        %v2360 = vpack.c.bf16 %v2342, %v2342
        %v2361 = vld [vmem:[#allocation4 + $0x18] sm:$0x1]
        %v2362 = vperm.slane %v2361, 0
        %v2379 = vunpack.c.l.b16 %v2344
        %v2380 = vunpack.c.l.b16 %v2345
        %v2381 = vunpack.c.l.b16 %v2346
        %v2382 = vunpack.c.l.b16 %v2347
        %v2383 = vunpack.c.l.b16 %v2348
        %v2384 = vunpack.c.l.b16 %v2349
        %v2385 = vunpack.c.l.b16 %v2350
        %v2386 = vunpack.c.l.b16 %v2351
        %v2387 = vunpack.c.l.b16 %v2352
        %v2388 = vunpack.c.l.b16 %v2353
        %v2389 = vunpack.c.l.b16 %v2354
        %v2390 = vunpack.c.l.b16 %v2355
        %v2391 = vunpack.c.l.b16 %v2356
        %v2392 = vunpack.c.l.b16 %v2357
        %v2393 = vunpack.c.l.b16 %v2358
        %v2394 = vunpack.c.l.b16 %v2359
        %v2395 = vpack.c.b16 %v2380, %v2379
        %v2396 = vpack.c.b16 %v2382, %v2381
        %v2397 = vpack.c.b16 %v2384, %v2383
        %v2398 = vpack.c.b16 %v2386, %v2385
        %v2399 = vpack.c.b16 %v2388, %v2387
        %v2400 = vpack.c.b16 %v2390, %v2389
        %v2401 = vpack.c.b16 %v2392, %v2391
        %v2402 = vpack.c.b16 %v2394, %v2393
        %2411 = vmatpush.bf16.msra.mxu0 %v2402
        %2412 = vmatpush.bf16.msra.mxu0 %v2401
        %2413 = vmatpush.bf16.msra.mxu0 %v2400
        %2414 = vmatpush.bf16.msra.mxu0 %v2399
        %2415 = vmatpush.bf16.msra.mxu0 %v2398
        %2416 = vmatpush.bf16.msra.mxu0 %v2397
        %2417 = vmatpush.bf16.msra.mxu0 %v2396
        %2418 = vmatpush.bf16.msra.mxu0 %v2395
        %2419 = vmatmul.bf16.gmra.mxu0 %v2360
        %v2420 = vpop.f32.mrf.mxu0
        %v2421 = vadd.f32 %v2362, %v2420
        %v2422 = vpop.f32.mrf.mxu0
        %2423 = vdwg.mxu0
        %v2424 = vadd.f32 %v2421, %v1837
        %v2425 = vld [vmem:[#allocation4 + $0x19] sm:$0x1]
        %v2426 = vld [vmem:[#allocation4 + $0x1a] sm:$0x1]
        %2427 = vadd.xlane.f32.xlu0 %v2424
        %v2428 = vpop.xlane.xlu0 %2427
        %v2429 = vmul.f32 %v2428, %v563
        %v2430 = vsub.f32 %v2424, %v2429
        %v2431 = vmul.f32 %v2430, %v2430
        %2432 = vadd.xlane.f32.xlu0 %v2431
        %v2433 = vpop.xlane.xlu0 %2432
        %v2434 = vmul.f32 %v2433, %v563
        %v2435 = vadd.f32 %v2434, 1e-12
        %v2436 = vrsqrt.pop %v2435
        %v2437 = vmul.f32 %v2436, %v2435
        %v2438 = vmul.f32 %v2437, %v2436
        %v2439 = vmul.f32 0.5, %v2438
        %v2440 = vsub.f32 1.5, %v2439
        %v2441 = vmul.f32 %v2436, %v2440
        %vm2442 = vweird.f32 %v2435
        %vm2443 = vweird.f32 %v2436
        %vm2444 = vmor %vm2442, %vm2443
        %v2445 = vsel %vm2444, %v2436, %v2441
        %v2446 = vmul.f32 %v2430, %v2445
        %v2447 = vperm.slane %v2425, 0
        %v2448 = vmul.f32 %v2446, %v2447
        %v2449 = vperm.slane %v2426, 0
        %v2450 = vadd.f32 %v2448, %v2449
        %s2451 = scalar_lea.vmem [#allocation9], 256
        %v2452 = vld [vmem:[%s2451] sm:$0xff]
        %v2453 = vld [vmem:[%s2451 + $0x8] sm:$0xff]
        %v2454 = vld [vmem:[%s2451 + $0x10] sm:$0xff]
        %v2455 = vld [vmem:[%s2451 + $0x18] sm:$0xff]
        %v2456 = vld [vmem:[%s2451 + $0x20] sm:$0xff]
        %v2457 = vld [vmem:[%s2451 + $0x28] sm:$0xff]
        %v2458 = vld [vmem:[%s2451 + $0x30] sm:$0xff]
        %v2459 = vld [vmem:[%s2451 + $0x38] sm:$0xff]
        %v2460 = vld [vmem:[%s2451 + $0x40] sm:$0xff]
        %v2461 = vld [vmem:[%s2451 + $0x48] sm:$0xff]
        %v2462 = vld [vmem:[%s2451 + $0x50] sm:$0xff]
        %v2463 = vld [vmem:[%s2451 + $0x58] sm:$0xff]
        %v2464 = vld [vmem:[%s2451 + $0x60] sm:$0xff]
        %v2465 = vld [vmem:[%s2451 + $0x68] sm:$0xff]
        %v2466 = vld [vmem:[%s2451 + $0x70] sm:$0xff]
        %v2467 = vld [vmem:[%s2451 + $0x78] sm:$0xff]
        %v2468 = vld [vmem:[%s2451 + $0x80] sm:$0xff]
        %v2469 = vld [vmem:[%s2451 + $0x88] sm:$0xff]
        %v2470 = vld [vmem:[%s2451 + $0x90] sm:$0xff]
        %v2471 = vld [vmem:[%s2451 + $0x98] sm:$0xff]
        %v2472 = vld [vmem:[%s2451 + $0xa0] sm:$0xff]
        %v2473 = vld [vmem:[%s2451 + $0xa8] sm:$0xff]
        %v2474 = vld [vmem:[%s2451 + $0xb0] sm:$0xff]
        %v2475 = vld [vmem:[%s2451 + $0xb8] sm:$0xff]
        %v2476 = vld [vmem:[%s2451 + $0xc0] sm:$0xff]
        %v2477 = vld [vmem:[%s2451 + $0xc8] sm:$0xff]
        %v2478 = vld [vmem:[%s2451 + $0xd0] sm:$0xff]
        %v2479 = vld [vmem:[%s2451 + $0xd8] sm:$0xff]
        %v2480 = vld [vmem:[%s2451 + $0xe0] sm:$0xff]
        %v2481 = vld [vmem:[%s2451 + $0xe8] sm:$0xff]
        %v2482 = vld [vmem:[%s2451 + $0xf0] sm:$0xff]
        %v2483 = vld [vmem:[%s2451 + $0xf8] sm:$0xff]
        %v2484 = vpack.c.bf16 %v2450, %v2450
        %s2485 = scalar_lea.vmem %s8, 4
        %v2486 = vld [vmem:[%s2485] sm:$0xf]
        %v2488 = vperm.slane %v2486, 0
        %v2489 = vperm.slane %v2486, 1
        %v2490 = vperm.slane %v2486, 2
        %v2491 = vperm.slane %v2486, 3
        %v2528 = vunpack.c.l.b16 %v2452
        %v2529 = vunpack.c.h.b16 %v2452
        %v2530 = vunpack.c.l.b16 %v2453
        %v2531 = vunpack.c.h.b16 %v2453
        %v2532 = vunpack.c.l.b16 %v2454
        %v2533 = vunpack.c.h.b16 %v2454
        %v2534 = vunpack.c.l.b16 %v2455
        %v2535 = vunpack.c.h.b16 %v2455
        %v2536 = vunpack.c.l.b16 %v2456
        %v2537 = vunpack.c.h.b16 %v2456
        %v2538 = vunpack.c.l.b16 %v2457
        %v2539 = vunpack.c.h.b16 %v2457
        %v2540 = vunpack.c.l.b16 %v2458
        %v2541 = vunpack.c.h.b16 %v2458
        %v2542 = vunpack.c.l.b16 %v2459
        %v2543 = vunpack.c.h.b16 %v2459
        %v2544 = vunpack.c.l.b16 %v2460
        %v2545 = vunpack.c.h.b16 %v2460
        %v2546 = vunpack.c.l.b16 %v2461
        %v2547 = vunpack.c.h.b16 %v2461
        %v2548 = vunpack.c.l.b16 %v2462
        %v2549 = vunpack.c.h.b16 %v2462
        %v2550 = vunpack.c.l.b16 %v2463
        %v2551 = vunpack.c.h.b16 %v2463
        %v2552 = vunpack.c.l.b16 %v2464
        %v2553 = vunpack.c.h.b16 %v2464
        %v2554 = vunpack.c.l.b16 %v2465
        %v2555 = vunpack.c.h.b16 %v2465
        %v2556 = vunpack.c.l.b16 %v2466
        %v2557 = vunpack.c.h.b16 %v2466
        %v2558 = vunpack.c.l.b16 %v2467
        %v2559 = vunpack.c.h.b16 %v2467
        %v2560 = vunpack.c.l.b16 %v2468
        %v2561 = vunpack.c.h.b16 %v2468
        %v2562 = vunpack.c.l.b16 %v2469
        %v2563 = vunpack.c.h.b16 %v2469
        %v2564 = vunpack.c.l.b16 %v2470
        %v2565 = vunpack.c.h.b16 %v2470
        %v2566 = vunpack.c.l.b16 %v2471
        %v2567 = vunpack.c.h.b16 %v2471
        %v2568 = vunpack.c.l.b16 %v2472
        %v2569 = vunpack.c.h.b16 %v2472
        %v2570 = vunpack.c.l.b16 %v2473
        %v2571 = vunpack.c.h.b16 %v2473
        %v2572 = vunpack.c.l.b16 %v2474
        %v2573 = vunpack.c.h.b16 %v2474
        %v2574 = vunpack.c.l.b16 %v2475
        %v2575 = vunpack.c.h.b16 %v2475
        %v2576 = vunpack.c.l.b16 %v2476
        %v2577 = vunpack.c.h.b16 %v2476
        %v2578 = vunpack.c.l.b16 %v2477
        %v2579 = vunpack.c.h.b16 %v2477
        %v2580 = vunpack.c.l.b16 %v2478
        %v2581 = vunpack.c.h.b16 %v2478
        %v2582 = vunpack.c.l.b16 %v2479
        %v2583 = vunpack.c.h.b16 %v2479
        %v2584 = vunpack.c.l.b16 %v2480
        %v2585 = vunpack.c.h.b16 %v2480
        %v2586 = vunpack.c.l.b16 %v2481
        %v2587 = vunpack.c.h.b16 %v2481
        %v2588 = vunpack.c.l.b16 %v2482
        %v2589 = vunpack.c.h.b16 %v2482
        %v2590 = vunpack.c.l.b16 %v2483
        %v2591 = vunpack.c.h.b16 %v2483
        %v2592 = vpack.c.b16 %v2532, %v2528
        %v2593 = vpack.c.b16 %v2533, %v2529
        %v2594 = vpack.c.b16 %v2534, %v2530
        %v2595 = vpack.c.b16 %v2535, %v2531
        %v2596 = vpack.c.b16 %v2540, %v2536
        %v2597 = vpack.c.b16 %v2541, %v2537
        %v2598 = vpack.c.b16 %v2542, %v2538
        %v2599 = vpack.c.b16 %v2543, %v2539
        %v2600 = vpack.c.b16 %v2548, %v2544
        %v2601 = vpack.c.b16 %v2549, %v2545
        %v2602 = vpack.c.b16 %v2550, %v2546
        %v2603 = vpack.c.b16 %v2551, %v2547
        %v2604 = vpack.c.b16 %v2556, %v2552
        %v2605 = vpack.c.b16 %v2557, %v2553
        %v2606 = vpack.c.b16 %v2558, %v2554
        %v2607 = vpack.c.b16 %v2559, %v2555
        %v2608 = vpack.c.b16 %v2564, %v2560
        %v2609 = vpack.c.b16 %v2565, %v2561
        %v2610 = vpack.c.b16 %v2566, %v2562
        %v2611 = vpack.c.b16 %v2567, %v2563
        %v2612 = vpack.c.b16 %v2572, %v2568
        %v2613 = vpack.c.b16 %v2573, %v2569
        %v2614 = vpack.c.b16 %v2574, %v2570
        %v2615 = vpack.c.b16 %v2575, %v2571
        %v2616 = vpack.c.b16 %v2580, %v2576
        %v2617 = vpack.c.b16 %v2581, %v2577
        %v2618 = vpack.c.b16 %v2582, %v2578
        %v2619 = vpack.c.b16 %v2583, %v2579
        %v2620 = vpack.c.b16 %v2588, %v2584
        %v2621 = vpack.c.b16 %v2589, %v2585
        %v2622 = vpack.c.b16 %v2590, %v2586
        %v2623 = vpack.c.b16 %v2591, %v2587
        %2656 = vmatpush.bf16.msra.mxu0 %v2620
        %2657 = vmatpush.bf16.msra.mxu0 %v2616
        %2658 = vmatpush.bf16.msra.mxu0 %v2612
        %2659 = vmatpush.bf16.msra.mxu0 %v2608
        %2660 = vmatpush.bf16.msra.mxu0 %v2604
        %2661 = vmatpush.bf16.msra.mxu0 %v2600
        %2662 = vmatpush.bf16.msra.mxu0 %v2596
        %2663 = vmatpush.bf16.msra.mxu0 %v2592
        %2664 = vmatmul.bf16.gmra.mxu0 %v2484
        %v2665 = vpop.f32.mrf.mxu0
        %v2666 = vadd.f32 %v2488, %v2665
        %v2667 = vpop.f32.mrf.mxu0
        %2668 = vdwg.mxu0
        %2669 = vmatpush.bf16.msra.mxu0 %v2621
        %2670 = vmatpush.bf16.msra.mxu0 %v2617
        %2671 = vmatpush.bf16.msra.mxu0 %v2613
        %2672 = vmatpush.bf16.msra.mxu0 %v2609
        %2673 = vmatpush.bf16.msra.mxu0 %v2605
        %2674 = vmatpush.bf16.msra.mxu0 %v2601
        %2675 = vmatpush.bf16.msra.mxu0 %v2597
        %2676 = vmatpush.bf16.msra.mxu0 %v2593
        %2677 = vmatmul.bf16.gmra.mxu0 %v2484
        %v2678 = vpop.f32.mrf.mxu0
        %v2679 = vadd.f32 %v2489, %v2678
        %v2680 = vpop.f32.mrf.mxu0
        %2681 = vdwg.mxu0
        %2682 = vmatpush.bf16.msra.mxu0 %v2622
        %2683 = vmatpush.bf16.msra.mxu0 %v2618
        %2684 = vmatpush.bf16.msra.mxu0 %v2614
        %2685 = vmatpush.bf16.msra.mxu0 %v2610
        %2686 = vmatpush.bf16.msra.mxu0 %v2606
        %2687 = vmatpush.bf16.msra.mxu0 %v2602
        %2688 = vmatpush.bf16.msra.mxu0 %v2598
        %2689 = vmatpush.bf16.msra.mxu0 %v2594
        %2690 = vmatmul.bf16.gmra.mxu0 %v2484
        %v2691 = vpop.f32.mrf.mxu0
        %v2692 = vadd.f32 %v2490, %v2691
        %v2693 = vpop.f32.mrf.mxu0
        %2694 = vdwg.mxu0
        %2695 = vmatpush.bf16.msra.mxu0 %v2623
        %2696 = vmatpush.bf16.msra.mxu0 %v2619
        %2697 = vmatpush.bf16.msra.mxu0 %v2615
        %2698 = vmatpush.bf16.msra.mxu0 %v2611
        %2699 = vmatpush.bf16.msra.mxu0 %v2607
        %2700 = vmatpush.bf16.msra.mxu0 %v2603
        %2701 = vmatpush.bf16.msra.mxu0 %v2599
        %2702 = vmatpush.bf16.msra.mxu0 %v2595
        %2703 = vmatmul.bf16.gmra.mxu0 %v2484
        %v2704 = vpop.f32.mrf.mxu0
        %v2705 = vadd.f32 %v2491, %v2704
        %v2706 = vpop.f32.mrf.mxu0
        %2707 = vdwg.mxu0
        %v2708 = vmul.f32 %v2666, 0.5
        %v2709 = vmul.f32 %v2679, 0.5
        %v2710 = vmul.f32 %v2692, 0.5
        %v2711 = vmul.f32 %v2705, 0.5
        %v2712 = vmul.f32 %v2666, 0.044715
        %v2713 = vmul.f32 %v2679, 0.044715
        %v2714 = vmul.f32 %v2692, 0.044715
        %v2715 = vmul.f32 %v2705, 0.044715
        %v2716 = vmul.f32 %v2712, %v2666
        %v2717 = vmul.f32 %v2713, %v2679
        %v2718 = vmul.f32 %v2714, %v2692
        %v2719 = vmul.f32 %v2715, %v2705
        %v2720 = vmul.f32 %v2716, %v2666
        %v2721 = vmul.f32 %v2717, %v2679
        %v2722 = vmul.f32 %v2718, %v2692
        %v2723 = vmul.f32 %v2719, %v2705
        %v2724 = vadd.f32 %v2666, %v2720
        %v2725 = vadd.f32 %v2679, %v2721
        %v2726 = vadd.f32 %v2692, %v2722
        %v2727 = vadd.f32 %v2705, %v2723
        %v2728 = vmul.f32 %v2724, 0.7978846
        %v2729 = vmul.f32 %v2725, 0.7978846
        %v2730 = vmul.f32 %v2726, 0.7978846
        %v2731 = vmul.f32 %v2727, 0.7978846
        %v2732 = vtanh.pop %v2728
        %v2733 = vtanh.pop %v2729
        %v2734 = vtanh.pop %v2730
        %v2735 = vtanh.pop %v2731
        %v2736 = vadd.f32 %v2732, 1.0
        %v2737 = vadd.f32 %v2733, 1.0
        %v2738 = vadd.f32 %v2734, 1.0
        %v2739 = vadd.f32 %v2735, 1.0
        %v2740 = vmul.f32 %v2708, %v2736
        %v2741 = vmul.f32 %v2709, %v2737
        %v2742 = vmul.f32 %v2710, %v2738
        %v2743 = vmul.f32 %v2711, %v2739
        %s2744 = scalar_lea.vmem [#allocation10], 256
        %v2745 = vld [vmem:[%s2744] sm:$0xf]
        %v2746 = vld [vmem:[%s2744 + $0x4] sm:$0xf]
        %v2747 = vld [vmem:[%s2744 + $0x8] sm:$0xf]
        %v2748 = vld [vmem:[%s2744 + $0xc] sm:$0xf]
        %v2749 = vld [vmem:[%s2744 + $0x10] sm:$0xf]
        %v2750 = vld [vmem:[%s2744 + $0x14] sm:$0xf]
        %v2751 = vld [vmem:[%s2744 + $0x18] sm:$0xf]
        %v2752 = vld [vmem:[%s2744 + $0x1c] sm:$0xf]
        %v2753 = vld [vmem:[%s2744 + $0x20] sm:$0xf]
        %v2754 = vld [vmem:[%s2744 + $0x24] sm:$0xf]
        %v2755 = vld [vmem:[%s2744 + $0x28] sm:$0xf]
        %v2756 = vld [vmem:[%s2744 + $0x2c] sm:$0xf]
        %v2757 = vld [vmem:[%s2744 + $0x30] sm:$0xf]
        %v2758 = vld [vmem:[%s2744 + $0x34] sm:$0xf]
        %v2759 = vld [vmem:[%s2744 + $0x38] sm:$0xf]
        %v2760 = vld [vmem:[%s2744 + $0x3c] sm:$0xf]
        %v2761 = vld [vmem:[%s2744 + $0x40] sm:$0xf]
        %v2762 = vld [vmem:[%s2744 + $0x44] sm:$0xf]
        %v2763 = vld [vmem:[%s2744 + $0x48] sm:$0xf]
        %v2764 = vld [vmem:[%s2744 + $0x4c] sm:$0xf]
        %v2765 = vld [vmem:[%s2744 + $0x50] sm:$0xf]
        %v2766 = vld [vmem:[%s2744 + $0x54] sm:$0xf]
        %v2767 = vld [vmem:[%s2744 + $0x58] sm:$0xf]
        %v2768 = vld [vmem:[%s2744 + $0x5c] sm:$0xf]
        %v2769 = vld [vmem:[%s2744 + $0x60] sm:$0xf]
        %v2770 = vld [vmem:[%s2744 + $0x64] sm:$0xf]
        %v2771 = vld [vmem:[%s2744 + $0x68] sm:$0xf]
        %v2772 = vld [vmem:[%s2744 + $0x6c] sm:$0xf]
        %v2773 = vld [vmem:[%s2744 + $0x70] sm:$0xf]
        %v2774 = vld [vmem:[%s2744 + $0x74] sm:$0xf]
        %v2775 = vld [vmem:[%s2744 + $0x78] sm:$0xf]
        %v2776 = vld [vmem:[%s2744 + $0x7c] sm:$0xf]
        %v2777 = vld [vmem:[%s2744 + $0x80] sm:$0xf]
        %v2778 = vld [vmem:[%s2744 + $0x84] sm:$0xf]
        %v2779 = vld [vmem:[%s2744 + $0x88] sm:$0xf]
        %v2780 = vld [vmem:[%s2744 + $0x8c] sm:$0xf]
        %v2781 = vld [vmem:[%s2744 + $0x90] sm:$0xf]
        %v2782 = vld [vmem:[%s2744 + $0x94] sm:$0xf]
        %v2783 = vld [vmem:[%s2744 + $0x98] sm:$0xf]
        %v2784 = vld [vmem:[%s2744 + $0x9c] sm:$0xf]
        %v2785 = vld [vmem:[%s2744 + $0xa0] sm:$0xf]
        %v2786 = vld [vmem:[%s2744 + $0xa4] sm:$0xf]
        %v2787 = vld [vmem:[%s2744 + $0xa8] sm:$0xf]
        %v2788 = vld [vmem:[%s2744 + $0xac] sm:$0xf]
        %v2789 = vld [vmem:[%s2744 + $0xb0] sm:$0xf]
        %v2790 = vld [vmem:[%s2744 + $0xb4] sm:$0xf]
        %v2791 = vld [vmem:[%s2744 + $0xb8] sm:$0xf]
        %v2792 = vld [vmem:[%s2744 + $0xbc] sm:$0xf]
        %v2793 = vld [vmem:[%s2744 + $0xc0] sm:$0xf]
        %v2794 = vld [vmem:[%s2744 + $0xc4] sm:$0xf]
        %v2795 = vld [vmem:[%s2744 + $0xc8] sm:$0xf]
        %v2796 = vld [vmem:[%s2744 + $0xcc] sm:$0xf]
        %v2797 = vld [vmem:[%s2744 + $0xd0] sm:$0xf]
        %v2798 = vld [vmem:[%s2744 + $0xd4] sm:$0xf]
        %v2799 = vld [vmem:[%s2744 + $0xd8] sm:$0xf]
        %v2800 = vld [vmem:[%s2744 + $0xdc] sm:$0xf]
        %v2801 = vld [vmem:[%s2744 + $0xe0] sm:$0xf]
        %v2802 = vld [vmem:[%s2744 + $0xe4] sm:$0xf]
        %v2803 = vld [vmem:[%s2744 + $0xe8] sm:$0xf]
        %v2804 = vld [vmem:[%s2744 + $0xec] sm:$0xf]
        %v2805 = vld [vmem:[%s2744 + $0xf0] sm:$0xf]
        %v2806 = vld [vmem:[%s2744 + $0xf4] sm:$0xf]
        %v2807 = vld [vmem:[%s2744 + $0xf8] sm:$0xf]
        %v2808 = vld [vmem:[%s2744 + $0xfc] sm:$0xf]
        %v2809 = vpack.c.bf16 %v2740, %v2740
        %v2810 = vpack.c.bf16 %v2741, %v2741
        %v2811 = vpack.c.bf16 %v2742, %v2742
        %v2812 = vpack.c.bf16 %v2743, %v2743
        %v2813 = vld [vmem:[#allocation4 + $0x1b] sm:$0x1]
        %v2814 = vperm.slane %v2813, 0
        %v2879 = vunpack.c.l.b16 %v2745
        %v2880 = vunpack.c.l.b16 %v2746
        %v2881 = vunpack.c.l.b16 %v2747
        %v2882 = vunpack.c.l.b16 %v2748
        %v2883 = vunpack.c.l.b16 %v2749
        %v2884 = vunpack.c.l.b16 %v2750
        %v2885 = vunpack.c.l.b16 %v2751
        %v2886 = vunpack.c.l.b16 %v2752
        %v2887 = vunpack.c.l.b16 %v2753
        %v2888 = vunpack.c.l.b16 %v2754
        %v2889 = vunpack.c.l.b16 %v2755
        %v2890 = vunpack.c.l.b16 %v2756
        %v2891 = vunpack.c.l.b16 %v2757
        %v2892 = vunpack.c.l.b16 %v2758
        %v2893 = vunpack.c.l.b16 %v2759
        %v2894 = vunpack.c.l.b16 %v2760
        %v2895 = vunpack.c.l.b16 %v2761
        %v2896 = vunpack.c.l.b16 %v2762
        %v2897 = vunpack.c.l.b16 %v2763
        %v2898 = vunpack.c.l.b16 %v2764
        %v2899 = vunpack.c.l.b16 %v2765
        %v2900 = vunpack.c.l.b16 %v2766
        %v2901 = vunpack.c.l.b16 %v2767
        %v2902 = vunpack.c.l.b16 %v2768
        %v2903 = vunpack.c.l.b16 %v2769
        %v2904 = vunpack.c.l.b16 %v2770
        %v2905 = vunpack.c.l.b16 %v2771
        %v2906 = vunpack.c.l.b16 %v2772
        %v2907 = vunpack.c.l.b16 %v2773
        %v2908 = vunpack.c.l.b16 %v2774
        %v2909 = vunpack.c.l.b16 %v2775
        %v2910 = vunpack.c.l.b16 %v2776
        %v2911 = vunpack.c.l.b16 %v2777
        %v2912 = vunpack.c.l.b16 %v2778
        %v2913 = vunpack.c.l.b16 %v2779
        %v2914 = vunpack.c.l.b16 %v2780
        %v2915 = vunpack.c.l.b16 %v2781
        %v2916 = vunpack.c.l.b16 %v2782
        %v2917 = vunpack.c.l.b16 %v2783
        %v2918 = vunpack.c.l.b16 %v2784
        %v2919 = vunpack.c.l.b16 %v2785
        %v2920 = vunpack.c.l.b16 %v2786
        %v2921 = vunpack.c.l.b16 %v2787
        %v2922 = vunpack.c.l.b16 %v2788
        %v2923 = vunpack.c.l.b16 %v2789
        %v2924 = vunpack.c.l.b16 %v2790
        %v2925 = vunpack.c.l.b16 %v2791
        %v2926 = vunpack.c.l.b16 %v2792
        %v2927 = vunpack.c.l.b16 %v2793
        %v2928 = vunpack.c.l.b16 %v2794
        %v2929 = vunpack.c.l.b16 %v2795
        %v2930 = vunpack.c.l.b16 %v2796
        %v2931 = vunpack.c.l.b16 %v2797
        %v2932 = vunpack.c.l.b16 %v2798
        %v2933 = vunpack.c.l.b16 %v2799
        %v2934 = vunpack.c.l.b16 %v2800
        %v2935 = vunpack.c.l.b16 %v2801
        %v2936 = vunpack.c.l.b16 %v2802
        %v2937 = vunpack.c.l.b16 %v2803
        %v2938 = vunpack.c.l.b16 %v2804
        %v2939 = vunpack.c.l.b16 %v2805
        %v2940 = vunpack.c.l.b16 %v2806
        %v2941 = vunpack.c.l.b16 %v2807
        %v2942 = vunpack.c.l.b16 %v2808
        %v2943 = vpack.c.b16 %v2880, %v2879
        %v2944 = vpack.c.b16 %v2882, %v2881
        %v2945 = vpack.c.b16 %v2884, %v2883
        %v2946 = vpack.c.b16 %v2886, %v2885
        %v2947 = vpack.c.b16 %v2888, %v2887
        %v2948 = vpack.c.b16 %v2890, %v2889
        %v2949 = vpack.c.b16 %v2892, %v2891
        %v2950 = vpack.c.b16 %v2894, %v2893
        %v2951 = vpack.c.b16 %v2896, %v2895
        %v2952 = vpack.c.b16 %v2898, %v2897
        %v2953 = vpack.c.b16 %v2900, %v2899
        %v2954 = vpack.c.b16 %v2902, %v2901
        %v2955 = vpack.c.b16 %v2904, %v2903
        %v2956 = vpack.c.b16 %v2906, %v2905
        %v2957 = vpack.c.b16 %v2908, %v2907
        %v2958 = vpack.c.b16 %v2910, %v2909
        %v2959 = vpack.c.b16 %v2912, %v2911
        %v2960 = vpack.c.b16 %v2914, %v2913
        %v2961 = vpack.c.b16 %v2916, %v2915
        %v2962 = vpack.c.b16 %v2918, %v2917
        %v2963 = vpack.c.b16 %v2920, %v2919
        %v2964 = vpack.c.b16 %v2922, %v2921
        %v2965 = vpack.c.b16 %v2924, %v2923
        %v2966 = vpack.c.b16 %v2926, %v2925
        %v2967 = vpack.c.b16 %v2928, %v2927
        %v2968 = vpack.c.b16 %v2930, %v2929
        %v2969 = vpack.c.b16 %v2932, %v2931
        %v2970 = vpack.c.b16 %v2934, %v2933
        %v2971 = vpack.c.b16 %v2936, %v2935
        %v2972 = vpack.c.b16 %v2938, %v2937
        %v2973 = vpack.c.b16 %v2940, %v2939
        %v2974 = vpack.c.b16 %v2942, %v2941
        %3007 = vmatpush.bf16.msra.mxu0 %v2950
        %3008 = vmatpush.bf16.msra.mxu0 %v2949
        %3009 = vmatpush.bf16.msra.mxu0 %v2948
        %3010 = vmatpush.bf16.msra.mxu0 %v2947
        %3011 = vmatpush.bf16.msra.mxu0 %v2946
        %3012 = vmatpush.bf16.msra.mxu0 %v2945
        %3013 = vmatpush.bf16.msra.mxu0 %v2944
        %3014 = vmatpush.bf16.msra.mxu0 %v2943
        %3015 = vmatmul.bf16.gmra.mxu0 %v2809
        %v3016 = vpop.f32.mrf.mxu0
        %v3017 = vadd.f32 %v2814, %v3016
        %v3018 = vpop.f32.mrf.mxu0
        %3019 = vdwg.mxu0
        %3020 = vmatpush.bf16.msra.mxu0 %v2958
        %3021 = vmatpush.bf16.msra.mxu0 %v2957
        %3022 = vmatpush.bf16.msra.mxu0 %v2956
        %3023 = vmatpush.bf16.msra.mxu0 %v2955
        %3024 = vmatpush.bf16.msra.mxu0 %v2954
        %3025 = vmatpush.bf16.msra.mxu0 %v2953
        %3026 = vmatpush.bf16.msra.mxu0 %v2952
        %3027 = vmatpush.bf16.msra.mxu0 %v2951
        %3028 = vmatmul.bf16.gmra.mxu0 %v2810
        %v3029 = vpop.f32.mrf.mxu0
        %v3030 = vadd.f32 %v3017, %v3029
        %v3031 = vpop.f32.mrf.mxu0
        %3032 = vdwg.mxu0
        %3033 = vmatpush.bf16.msra.mxu0 %v2966
        %3034 = vmatpush.bf16.msra.mxu0 %v2965
        %3035 = vmatpush.bf16.msra.mxu0 %v2964
        %3036 = vmatpush.bf16.msra.mxu0 %v2963
        %3037 = vmatpush.bf16.msra.mxu0 %v2962
        %3038 = vmatpush.bf16.msra.mxu0 %v2961
        %3039 = vmatpush.bf16.msra.mxu0 %v2960
        %3040 = vmatpush.bf16.msra.mxu0 %v2959
        %3041 = vmatmul.bf16.gmra.mxu0 %v2811
        %v3042 = vpop.f32.mrf.mxu0
        %v3043 = vadd.f32 %v3030, %v3042
        %v3044 = vpop.f32.mrf.mxu0
        %3045 = vdwg.mxu0
        %3046 = vmatpush.bf16.msra.mxu0 %v2974
        %3047 = vmatpush.bf16.msra.mxu0 %v2973
        %3048 = vmatpush.bf16.msra.mxu0 %v2972
        %3049 = vmatpush.bf16.msra.mxu0 %v2971
        %3050 = vmatpush.bf16.msra.mxu0 %v2970
        %3051 = vmatpush.bf16.msra.mxu0 %v2969
        %3052 = vmatpush.bf16.msra.mxu0 %v2968
        %3053 = vmatpush.bf16.msra.mxu0 %v2967
        %3054 = vmatmul.bf16.gmra.mxu0 %v2812
        %v3055 = vpop.f32.mrf.mxu0
        %v3056 = vadd.f32 %v3043, %v3055
        %v3057 = vpop.f32.mrf.mxu0
        %3058 = vdwg.mxu0
        %v3059 = vadd.f32 %v3056, %v2450
        %v3060 = vld [vmem:[#allocation4 + $0x1c] sm:$0x1]
        %v3061 = vld [vmem:[#allocation4 + $0x1d] sm:$0x1]
        %3062 = vadd.xlane.f32.xlu0 %v3059
        %v3063 = vpop.xlane.xlu0 %3062
        %v3064 = vmul.f32 %v3063, %v563
        %v3065 = vsub.f32 %v3059, %v3064
        %v3066 = vmul.f32 %v3065, %v3065
        %3067 = vadd.xlane.f32.xlu0 %v3066
        %v3068 = vpop.xlane.xlu0 %3067
        %v3069 = vmul.f32 %v3068, %v563
        %v3070 = vadd.f32 %v3069, 1e-12
        %v3071 = vrsqrt.pop %v3070
        %v3072 = vmul.f32 %v3071, %v3070
        %v3073 = vmul.f32 %v3072, %v3071
        %v3074 = vmul.f32 0.5, %v3073
        %v3075 = vsub.f32 1.5, %v3074
        %v3076 = vmul.f32 %v3071, %v3075
        %vm3077 = vweird.f32 %v3070
        %vm3078 = vweird.f32 %v3071
        %vm3079 = vmor %vm3077, %vm3078
        %v3080 = vsel %vm3079, %v3071, %v3076
        %v3081 = vmul.f32 %v3065, %v3080
        %v3082 = vperm.slane %v3060, 0
        %v3083 = vmul.f32 %v3081, %v3082
        %v3084 = vperm.slane %v3061, 0
        %v3085 = vadd.f32 %v3083, %v3084
        %v3086 = vld [vmem:[#allocation12] sm:$0xf]
        %v3087 = vld [vmem:[#allocation12 + $0x4] sm:$0xf]
        %v3088 = vld [vmem:[#allocation12 + $0x8] sm:$0xf]
        %v3089 = vld [vmem:[#allocation12 + $0xc] sm:$0xf]
        %v3090 = vld [vmem:[#allocation12 + $0x10] sm:$0xf]
        %v3091 = vld [vmem:[#allocation12 + $0x14] sm:$0xf]
        %v3092 = vld [vmem:[#allocation12 + $0x18] sm:$0xf]
        %v3093 = vld [vmem:[#allocation12 + $0x1c] sm:$0xf]
        %v3094 = vld [vmem:[#allocation12 + $0x20] sm:$0xf]
        %v3095 = vld [vmem:[#allocation12 + $0x24] sm:$0xf]
        %v3096 = vld [vmem:[#allocation12 + $0x28] sm:$0xf]
        %v3097 = vld [vmem:[#allocation12 + $0x2c] sm:$0xf]
        %v3098 = vld [vmem:[#allocation12 + $0x30] sm:$0xf]
        %v3099 = vld [vmem:[#allocation12 + $0x34] sm:$0xf]
        %v3100 = vld [vmem:[#allocation12 + $0x38] sm:$0xf]
        %v3101 = vld [vmem:[#allocation12 + $0x3c] sm:$0xf]
        %v3102 = vpack.c.bf16 %v3085, %v3085
        %v3103 = vld [vmem:[#allocation4 + $0x1e] sm:$0x1]
        %v3120 = vunpack.c.l.b16 %v3086
        %v3121 = vunpack.c.l.b16 %v3087
        %v3122 = vunpack.c.l.b16 %v3088
        %v3123 = vunpack.c.l.b16 %v3089
        %v3124 = vunpack.c.l.b16 %v3090
        %v3125 = vunpack.c.l.b16 %v3091
        %v3126 = vunpack.c.l.b16 %v3092
        %v3127 = vunpack.c.l.b16 %v3093
        %v3128 = vunpack.c.l.b16 %v3094
        %v3129 = vunpack.c.l.b16 %v3095
        %v3130 = vunpack.c.l.b16 %v3096
        %v3131 = vunpack.c.l.b16 %v3097
        %v3132 = vunpack.c.l.b16 %v3098
        %v3133 = vunpack.c.l.b16 %v3099
        %v3134 = vunpack.c.l.b16 %v3100
        %v3135 = vunpack.c.l.b16 %v3101
        %v3136 = vpack.c.b16 %v3121, %v3120
        %v3137 = vpack.c.b16 %v3123, %v3122
        %v3138 = vpack.c.b16 %v3125, %v3124
        %v3139 = vpack.c.b16 %v3127, %v3126
        %v3140 = vpack.c.b16 %v3129, %v3128
        %v3141 = vpack.c.b16 %v3131, %v3130
        %v3142 = vpack.c.b16 %v3133, %v3132
        %v3143 = vpack.c.b16 %v3135, %v3134
        %3152 = vmatpush.bf16.msra.mxu0 %v3143
        %3153 = vmatpush.bf16.msra.mxu0 %v3142
        %3154 = vmatpush.bf16.msra.mxu0 %v3141
        %3155 = vmatpush.bf16.msra.mxu0 %v3140
        %3156 = vmatpush.bf16.msra.mxu0 %v3139
        %3157 = vmatpush.bf16.msra.mxu0 %v3138
        %3158 = vmatpush.bf16.msra.mxu0 %v3137
        %3159 = vmatpush.bf16.msra.mxu0 %v3136
        %3160 = vmatmul.bf16.gmra.mxu0 %v3102
        %v3161 = vpop.f32.mrf.mxu0
        %v3162 = vadd.f32 %v3103, %v3161
        %v3163 = vpop.f32.mrf.mxu0
        %3164 = vdwg.mxu0
        %v3165 = vtanh.pop %v3162
        %v3166 = vld [vmem:[#allocation4 + $0x1f] sm:$0x1]
        %v3167 = vmul.f32 %v3165, %v3166
        %vm3168 = vcmask 1040384
        %v3169 = vsel %vm3168, %v3167, 0.0
        %3170 = vadd.xlane.f32.xlu0 %v3169
        %v3171 = vpop.xlane.xlu0 %3170
        %v3172 = vld [vmem:[#allocation4 + $0x20] sm:$0x1]
        %v3173 = vadd.f32 %v3171, %v3172
        %v3174 = vsub.f32 0.0, %v3173
        %v3175 = vmul.f32 %v3174, 1.442695
        %v3176 = vpow.pop %v3175
        %v3177 = vadd.f32 %v3176, 1.0
        %v3178 = vrcp.pop %v3177
        %v3179 = vmul.f32 %v3177, %v3178
        %v3180 = vsub.f32 1.0, %v3179
        %v3181 = vmul.f32 %v3178, %v3180
        %v3182 = vadd.f32 %v3178, %v3181
        %vm3183 = vweird.f32 %v3177
        %vm3184 = vweird.f32 %v3178
        %vm3185 = vmor %vm3183, %vm3184
        %v3186 = vsel %vm3185, %v3178, %v3182
        %v3187 = vand.u32 2147483647, %v3177
        %vm3188 = vcmp.eq.f32.partialorder %v3187, 8.507059e+37
        %v3189 = vand.u32 %v3177, 2147483648
        %v3190 = vor.u32 1.1754944e-38, %v3189
        %v3191 = vsel %vm3188, %v3190, %v3186
        %v3192 = vmul.f32 1.0, %v3191
        %3194 = vset.pattern.permute.xlu0 0
        %3195 = vperm.xlu0 %3194, %v3192
        %v3196 = vpop.permute.xlu0 %3195
        %3198 = vst [vmem:[%s509] sm:$0x1] %v3196
        %p3199 = scmp.lt.s32.totalorder %s26, 1
        %s3200 = scalar_select %p3199, %s26, 1
        %s3201 = scalar_lea.vmem %s11, %s3200
        // Predicated region
        $region93: #{bert_binary_classifier.1} parent=63 // pred_check
          %p3202 = pneg %p285
        $region94: #{bert_binary_classifier.1} parent=63 // pred_check_branch
          %3204 = sbr.rel (%p3202) target = $region96
        $region95: #{bert_binary_classifier.1} parent=63 // pred_region
          _
        $region96: #{bert_binary_classifier.1} parent=63 // pred_fallthru
          _
      $region64: #{bert_binary_classifier.1} parent=5 // pred_fallthru
        _
      %p3205 = scmp.le.s32.totalorder 2, %s21
      // Predicated region
      $region97: #{bert_binary_classifier.1} parent=5 // pred_check
        %p3206 = pneg %p3205
      $region98: #{bert_binary_classifier.1} parent=5 // pred_check_branch
        %3208 = sbr.rel (%p3206) target = $region100
      $region99: #{bert_binary_classifier.1} parent=5 // pred_region
        %s3209 = ssub.s32 %s21, 2
        // Predicated region
        $region101: #{bert_binary_classifier.1} parent=99 // pred_check
          %p3210 = pneg %p291
        $region102: #{bert_binary_classifier.1} parent=99 // pred_check_branch
          %3212 = sbr.rel (%p3210) target = $region104
        $region103: #{bert_binary_classifier.1} parent=99 // pred_region
          %p3213 = scmp.lt.s32.totalorder %s27, 1
          %s3214 = scalar_select %p3213, %s27, 1
          %s3215 = scalar_lea.vmem %s11, %s3214
        $region104: #{bert_binary_classifier.1} parent=99 // pred_fallthru
          _
      $region100: #{bert_binary_classifier.1} parent=5 // pred_fallthru
        _
    $region6: #{bert_binary_classifier.1} parent=1 // loop_footer
      %s25 = sadd.s32 1, %s21
    $region7: #{bert_binary_classifier.1} parent=1 // loop_footer_branch
      %20 = sbr.rel target = $region3
    $region8: #{bert_binary_classifier.1} parent=1 // loop_exit
      _
    %3216 = vsyncpa [#allocation3], 1
    %s3217 = scalar_lea.sflag [#allocation3], 1
    %3218 = vsyncpa %s3217, 1
    %3219 = vsyncpa [#allocation5], 1
    %3220 = vsyncpa [#allocation8], 1
    %3221 = vsyncpa [#allocation11], 1

</llo_original>
